<compile_context>
chip_gen: v7x
topology: tpu7x:2x2x1
jax: 0.10.0
libtpu: 0.0.40
codegen_flags: <defaults>
</compile_context>

<pallas_src>
import functools

import jax
import jax.numpy as jnp
from jax.experimental import pallas as pl
from jax.experimental.pallas import tpu as pltpu

EPS = 1e-5
LANE = 128
VMEM_LIMIT_BYTES = 32 * 1024 * 1024


def _round_up(x, m):
    return ((x + m - 1) // m) * m


# ----------------------------- Pallas kernels ------------------------------

def _conv_tap_kernel(x_ref, w_ref, mask_ref, y_ref, stats_ref, acc_ref, *,
                     k, offsets, q_rows):
    """One (batch, out-depth) tile of a k^3 conv, accumulated over the kd grid axis.

    x_ref:     (L, Cin_p)        bf16 flattened padded plane(s) for this depth tap
    w_ref:     (k^3, Cin_p, Cout_p) bf16 weights (constant block index -> resident)
    mask_ref:  (q_rows, 1)       f32 validity mask for over-computed rows
    y_ref:     (q_rows, Cout_p)  f32 conv output tile ("wide": padded-W / stride parity rows incl.)
    stats_ref: (2, Cout_p)       f32 per-tile [sum, sum-of-squares] of valid rows (BN pass 1)
    acc_ref:   (q_rows, Cout_p)  f32 accumulator scratch
    """
    kd = pl.program_id(2)
    cout = w_ref.shape[-1]

    @pl.when(kd == 0)
    def _():
        acc_ref[...] = jnp.zeros_like(acc_ref)

    partial = jnp.zeros((q_rows, cout), jnp.float32)
    for kh in range(k):
        for kw in range(k):
            off = offsets[kh * k + kw]
            win = x_ref[off:off + q_rows, :]                      # contiguous static slice
            w_tap = w_ref[kd * (k * k) + kh * k + kw]             # (Cin_p, Cout_p)
            partial = partial + jnp.dot(win, w_tap,
                                        preferred_element_type=jnp.float32)
    acc_ref[...] += partial

    @pl.when(kd == k - 1)
    def _():
        acc = acc_ref[...]
        y_ref[...] = acc
        m = mask_ref[...]                                         # (q_rows, 1)
        col_sum = jnp.sum(acc * m, axis=0, keepdims=True)
        col_sq = jnp.sum(acc * acc * m, axis=0, keepdims=True)
        stats_ref[...] = jnp.concatenate([col_sum, col_sq], axis=0)


def _affine_relu_kernel(y_ref, a_ref, b_ref, o_ref):
    # relu(BN(y)) with precomputed per-channel scale/shift
    o_ref[...] = jnp.maximum(y_ref[...] * a_ref[...] + b_ref[...], 0.0)


def _affine_relu_add_relu_kernel(y_ref, a1_ref, b1_ref, sc_ref, a2_ref, b2_ref, o_ref):
    # relu( relu(BN(y)) + BN_or_identity(shortcut) )
    h = jnp.maximum(y_ref[...] * a1_ref[...] + b1_ref[...], 0.0)
    sc = sc_ref[...] * a2_ref[...] + b2_ref[...]
    o_ref[...] = jnp.maximum(h + sc, 0.0)


# ------------------------------ conv wrapper --------------------------------

def conv3d_bn_stats(x_f32, w_taps, *, k, s, pad, cout_p):
    """Tap-accumulation Conv3d on channels-last, lane-padded input + BN partial stats."""
    N, D, H, W, cin_p = x_f32.shape
    Do = (D + 2 * pad - k) // s + 1
    Ho = (H + 2 * pad - k) // s + 1
    Wo = (W + 2 * pad - k) // s + 1
    Dp = max(D + 2 * pad, (k - 1) + s * Do)
    Hp = max(H + 2 * pad, (k - 1) + s * Ho)
    Wp = max(W + 2 * pad, (k - 1) + s * Wo)
    xp = jnp.pad(
        x_f32,
        ((0, 0), (pad, Dp - D - pad), (pad, Hp - H - pad), (pad, Wp - W - pad), (0, 0)),
    ).astype(jnp.bfloat16)                                        # bf16 MXU operands

    if s == 1:
        flat = xp.reshape(N, Dp, Hp * Wp, cin_p)
        period = Wp
        offsets = tuple(kh * Wp + kw for kh in range(k) for kw in range(k))
    else:
        # Pre-gather the strided W taps in XLA (~1.5x one-time copy, not a 27x im2col),
        # fold them along H, flatten; D stride via index_map, H stride via static offsets.
        slabs = [xp[:, :, :, kw:kw + s * (Wo - 1) + 1:s, :] for kw in range(k)]
        folded = jnp.concatenate(slabs, axis=2)                   # (N, Dp, k*Hp, Wo, Cin_p)
        flat = folded.reshape(N, Dp, k * Hp * Wo, cin_p)
        period = s * Wo
        offsets = tuple((kw * Hp + kh) * Wo for kh in range(k) for kw in range(k))

    q_rows = Ho * period
    l_need = max(offsets) + q_rows
    if l_need > flat.shape[2]:
        flat = jnp.pad(flat, ((0, 0), (0, 0), (0, l_need - flat.shape[2]), (0, 0)))
    L = flat.shape[2]

    # validity mask for the over-computed rows (padded-W columns / odd stride parity)
    mask = ((jnp.arange(q_rows) % period) < Wo).astype(jnp.float32).reshape(q_rows, 1)

    kernel = functools.partial(_conv_tap_kernel, k=k, offsets=offsets, q_rows=q_rows)
    y_wide, stats = pl.pallas_call(
        kernel,
        grid=(N, Do, k),
        in_specs=[
            pl.BlockSpec((None, None, L, cin_p), lambda n, do, kd: (n, do * s + kd, 0, 0)),
            pl.BlockSpec((k * k * k, cin_p, cout_p), lambda n, do, kd: (0, 0, 0)),
            pl.BlockSpec((q_rows, 1), lambda n, do, kd: (0, 0)),
        ],
        out_specs=[
            pl.BlockSpec((None, None, q_rows, cout_p), lambda n, do, kd: (n, do, 0, 0)),
            pl.BlockSpec((None, None, 2, cout_p), lambda n, do, kd: (n, do, 0, 0)),
        ],
        out_shape=[
            jax.ShapeDtypeStruct((N, Do, q_rows, cout_p), jnp.float32),
            jax.ShapeDtypeStruct((N, Do, 2, cout_p), jnp.float32),
        ],
        scratch_shapes=[pltpu.VMEM((q_rows, cout_p), jnp.float32)],
        compiler_params=pltpu.CompilerParams(
            dimension_semantics=("parallel", "parallel", "arbitrary"),
            vmem_limit_bytes=VMEM_LIMIT_BYTES,
        ),
    )(flat, w_taps, mask)

    # strip the over-computed columns
    y = y_wide.reshape(N, Do, Ho, period, cout_p)[:, :, :, :Wo, :]
    return y, stats, (N, Do, Ho, Wo)


# ------------------------- BN-apply (tiled elementwise) ----------------------

def _pick_rows(m, cap=512):
    t = min(cap, _round_up(m, 8))
    while t > 8 and (m % t != 0 or m // t < 2):
        t //= 2
    if m % t == 0:
        return t, m
    return 8, _round_up(m, 8)


def _ew_call(kernel, args, m, c):
    tm, mp = _pick_rows(m)
    specs, padded = [], []
    for a in args:
        if a.shape[0] == 1:
            specs.append(pl.BlockSpec((1, c), lambda i: (0, 0)))
            padded.append(a)
        else:
            specs.append(pl.BlockSpec((tm, c), lambda i: (i, 0)))
            padded.append(a if a.shape[0] == mp else jnp.pad(a, ((0, mp - a.shape[0]), (0, 0))))
    out = pl.pallas_call(
        kernel,
        grid=(mp // tm,),
        in_specs=specs,
        out_specs=pl.BlockSpec((tm, c), lambda i: (i, 0)),
        out_shape=jax.ShapeDtypeStruct((mp, c), jnp.float32),
        compiler_params=pltpu.CompilerParams(
            dimension_semantics=("parallel",), vmem_limit_bytes=VMEM_LIMIT_BYTES),
    )(*padded)
    return out[:m] if mp != m else out


def bn_relu(y, scale, shift):
    m, c = y.shape
    return _ew_call(_affine_relu_kernel, (y, scale, shift), m, c)


def bn_relu_residual(y, scale, shift, sc, sc_scale, sc_shift):
    m, c = y.shape
    return _ew_call(_affine_relu_add_relu_kernel,
                    (y, scale, shift, sc, sc_scale, sc_shift), m, c)


# ------------------------------ JAX glue ------------------------------------

def _bn_scale_shift(stats, gamma_p, beta_p, count):
    # reduce per-tile partial stats (O(tiles * C) work) -> per-channel affine
    ssum = jnp.sum(stats[:, :, 0, :], axis=(0, 1))
    ssq = jnp.sum(stats[:, :, 1, :], axis=(0, 1))
    mean = ssum / count
    var = jnp.maximum(ssq / count - mean * mean, 0.0)             # biased var (PyTorch train)
    scale = gamma_p * jax.lax.rsqrt(var + EPS)
    shift = beta_p - mean * scale
    return scale[None, :], shift[None, :]


def _pack_conv_weight(w, cin_p, cout_p):
    # PyTorch layout (Cout, Cin, kd, kh, kw) -> (k^3, Cin_p, Cout_p) bf16, tap-major (kd,kh,kw)
    co, ci, k = w.shape[0], w.shape[1], w.shape[2]
    wt = jnp.transpose(w, (2, 3, 4, 1, 0)).reshape(k * k * k, ci, co)
    wt = jnp.pad(wt, ((0, 0), (0, cin_p - ci), (0, cout_p - co)))
    return wt.astype(jnp.bfloat16)


def _pad_channels(v, cp):
    v = v.reshape(-1)
    return jnp.pad(v, (0, cp - v.shape[0])).astype(jnp.float32)


def resblock3d_forward(x_ncdhw, params, downsample):
    x = jnp.transpose(x_ncdhw, (0, 2, 3, 4, 1)).astype(jnp.float32)   # NCDHW -> NDHWC
    n, d, h, w, cin = x.shape
    cout = params["w1"].shape[0]
    cin_p = _round_up(cin, LANE)
    cout_p = _round_up(cout, LANE)

    # lane-dense channel padding (stripped at the end)
    xc = jnp.pad(x, ((0, 0), (0, 0), (0, 0), (0, 0), (0, cin_p - cin)))

    w1 = _pack_conv_weight(params["w1"], cin_p, cout_p)
    w2 = _pack_conv_weight(params["w2"], cout_p, cout_p)
    g1 = _pad_channels(params["g1"], cout_p)
    bt1 = _pad_channels(params["bt1"], cout_p)
    g2 = _pad_channels(params["g2"], cout_p)
    bt2 = _pad_channels(params["bt2"], cout_p)
    # NOTE: conv biases (params["b1"/"b2"/"b_sc"]) are intentionally unused: each conv feeds a
    # train-mode BatchNorm, which subtracts the per-channel mean, so the bias cancels exactly.

    s1 = 2 if downsample else 1
    y1, st1, (n_, do, ho, wo) = conv3d_bn_stats(xc, w1, k=3, s=s1, pad=1, cout_p=cout_p)
    m = n_ * do * ho * wo
    scale1, shift1 = _bn_scale_shift(st1, g1, bt1, m)
    h1 = bn_relu(y1.reshape(m, cout_p), scale1, shift1)               # relu(bn1(conv1(x)))

    y2, st2, _ = conv3d_bn_stats(h1.reshape(n_, do, ho, wo, cout_p), w2,
                                 k=3, s=1, pad=1, cout_p=cout_p)
    scale2, shift2 = _bn_scale_shift(st2, g2, bt2, m)

    if downsample:
        wsc = _pack_conv_weight(params["w_sc"], cin_p, cout_p)
        gsc = _pad_channels(params["g_sc"], cout_p)
        btsc = _pad_channels(params["bt_sc"], cout_p)
        x_sub = xc[:, ::2, ::2, ::2, :]                               # 1x1 stride-2 gather
        ysc, stsc, _ = conv3d_bn_stats(x_sub, wsc, k=1, s=1, pad=0, cout_p=cout_p)
        scale_sc, shift_sc = _bn_scale_shift(stsc, gsc, btsc, m)
        sc = ysc.reshape(m, cout_p)
    else:
        sc = xc.reshape(m, cin_p)                                     # identity shortcut
        scale_sc = jnp.ones((1, cout_p), jnp.float32)
        shift_sc = jnp.zeros((1, cout_p), jnp.float32)

    out = bn_relu_residual(y2.reshape(m, cout_p), scale2, shift2, sc, scale_sc, shift_sc)
    out = out.reshape(n_, do, ho, wo, cout_p)[..., :cout]
    return jnp.transpose(out, (0, 4, 1, 2, 3))                        # -> NCDHW


# -------------------------- parameter construction --------------------------

def make_params(key, cin, cout, downsample):
    keys = jax.random.split(key, 6)

    def conv_init(kw, kb, co, ci, k):
        fan_in = ci * k ** 3
        bound = 1.0 / (fan_in ** 0.5)
        w = jax.random.uniform(kw, (co, ci, k, k, k), jnp.float32, -bound, bound)
        b = jax.random.uniform(kb, (co,), jnp.float32, -bound, bound)
        return w, b

    p = {}
    p["w1"], p["b1"] = conv_init(keys[0], keys[1], cout, cin, 3)
    p["w2"], p["b2"] = conv_init(keys[2], keys[3], cout, cout, 3)
    p["g1"] = jnp.ones((cout,), jnp.float32)
    p["bt1"] = jnp.zeros((cout,), jnp.float32)
    p["g2"] = jnp.ones((cout,), jnp.float32)
    p["bt2"] = jnp.zeros((cout,), jnp.float32)
    if downsample:
        p["w_sc"], p["b_sc"] = conv_init(keys[4], keys[5], cout, cin, 1)
        p["g_sc"] = jnp.ones((cout,), jnp.float32)
        p["bt_sc"] = jnp.zeros((cout,), jnp.float32)
    return p


# ----------------------------- pure-JAX reference ---------------------------

def ref_forward(x_ncdhw, params, downsample):
    x = jnp.transpose(x_ncdhw, (0, 2, 3, 4, 1)).astype(jnp.float32)

    def conv(x, w, b, stride, pad):
        w_dhwio = jnp.transpose(w, (2, 3, 4, 1, 0))
        y = jax.lax.conv_general_dilated(
            x, w_dhwio, (stride,) * 3, [(pad, pad)] * 3,
            dimension_numbers=("NDHWC", "DHWIO", "NDHWC"),
            precision=jax.lax.Precision.HIGHEST)
        return y + b

    def bn(y, g, bt):
        mean = jnp.mean(y, axis=(0, 1, 2, 3), keepdims=True)
        var = jnp.mean((y - mean) ** 2, axis=(0, 1, 2, 3), keepdims=True)
        return (y - mean) * jax.lax.rsqrt(var + EPS) * g + bt

    if downsample:
        sc = bn(conv(x, params["w_sc"], params["b_sc"], 2, 0),
                params["g_sc"], params["bt_sc"])
        s1 = 2
    else:
        sc = x
        s1 = 1
    h = jnp.maximum(bn(conv(x, params["w1"], params["b1"], s1, 1),
                       params["g1"], params["bt1"]), 0.0)
    h = jnp.maximum(bn(conv(h, params["w2"], params["b2"], 1, 1),
                       params["g2"], params["bt2"]), 0.0)
    out = jnp.maximum(h + sc, 0.0)
    return jnp.transpose(out, (0, 4, 1, 2, 3))


# ---------------------------------- main -------------------------------------

if __name__ == "__main__":
    key = jax.random.PRNGKey(0)
    k_x1, k_x2, k_p1, k_p2 = jax.random.split(key, 4)

    fwd = jax.jit(resblock3d_forward, static_argnames=("downsample",))

    # Tolerance reflects bf16 MXU operands (f32 accumulation) vs. the f32 reference.
    ATOL = RTOL = 5e-2

    # Case 1: downsample=True (3x3 stride-2 conv1; 1x1 stride-2 conv + BN shortcut)
    N, CIN, COUT, S = 2, 4, 8, 8
    x1 = jax.random.normal(k_x1, (N, CIN, S, S, S), jnp.float32)   # NCDHW like PyTorch
    p1 = make_params(k_p1, CIN, COUT, downsample=True)
    out1 = jax.block_until_ready(fwd(x1, p1, downsample=True))
    ref1 = ref_forward(x1, p1, downsample=True)
    assert out1.shape == (N, COUT, S // 2, S // 2, S // 2), out1.shape
    assert jnp.allclose(out1, ref1, atol=ATOL, rtol=RTOL), float(jnp.max(jnp.abs(out1 - ref1)))

    # Case 2: downsample=False (identity shortcut; in_channels == out_channels)
    x2 = jax.random.normal(k_x2, (N, CIN, S, S, S), jnp.float32)
    p2 = make_params(k_p2, CIN, CIN, downsample=False)
    out2 = jax.block_until_ready(fwd(x2, p2, downsample=False))
    ref2 = ref_forward(x2, p2, downsample=False)
    assert out2.shape == (N, CIN, S, S, S), out2.shape
    assert jnp.allclose(out2, ref2, atol=ATOL, rtol=RTOL), float(jnp.max(jnp.abs(out2 - ref2)))

    print("KERNEL_OK")
</pallas_src>

<mosaic_0001>
module attributes {stable_mosaic.version = 11 : i64} {
  func.func @_conv_tap_kernel(%arg0: i32, %arg1: i32, %arg2: i32, %arg3: memref<1x1x120x128xbf16, #tpu.memory_space<vmem>>, %arg4: memref<27x128x128xbf16, #tpu.memory_space<vmem>>, %arg5: memref<32x1xf32, #tpu.memory_space<vmem>>, %arg6: memref<1x1x32x128xf32, #tpu.memory_space<vmem>>, %arg7: memref<1x1x2x128xf32, #tpu.memory_space<vmem>>, %arg8: memref<32x128xf32, #tpu.memory_space<vmem>>) attributes {dimension_semantics = [#tpu.dimension_semantics<parallel>, #tpu.dimension_semantics<parallel>, #tpu.dimension_semantics<arbitrary>], iteration_bounds = array<i64: 2, 4, 3>, scalar_prefetch = 0 : i64, scratch_operands = 1 : i64, tpu.core_type = #tpu.core_type<tc>, window_params = [{transform_indices = @transform_0, window_bounds = array<i64: 1, 1, 120, 128>}, {pipeline_mode = #tpu.pipeline_mode<synchronous>, transform_indices = @transform_1, window_bounds = array<i64: 27, 128, 128>}, {pipeline_mode = #tpu.pipeline_mode<synchronous>, transform_indices = @transform_2, window_bounds = array<i64: 32, 1>}, {transform_indices = @transform_3, window_bounds = array<i64: 1, 1, 32, 128>}, {transform_indices = @transform_4, window_bounds = array<i64: 1, 1, 2, 128>}]} {
    %c0_i32 = arith.constant 0 : i32
    %0 = arith.cmpi eq, %arg2, %c0_i32 : i32
    %1 = arith.extui %0 : i1 to i32
    %c0_i32_0 = arith.constant 0 : i32
    %2 = arith.cmpi ne, %1, %c0_i32_0 : i32
    scf.if %2 {
      %cst_83 = arith.constant 0.000000e+00 : f32
      %100 = vector.broadcast %cst_83 : f32 to vector<32x128xf32>
      %c0_84 = arith.constant 0 : index
      %c0_85 = arith.constant 0 : index
      %101 = vector.load %arg8[%c0_84, %c0_85] : memref<32x128xf32, #tpu.memory_space<vmem>>, vector<32x128xf32>
      tpu.vector_store %arg8[%c0_84, %c0_85], %100 {strides = array<i32>} : memref<32x128xf32, #tpu.memory_space<vmem>>, vector<32x128xf32>,
    } else {
    }
    %cst = arith.constant 0.000000e+00 : f32
    %3 = vector.broadcast %cst : f32 to vector<32x128xf32>
    %c0 = arith.constant 0 : index
    %c0_1 = arith.constant 0 : index
    %c0_2 = arith.constant 0 : index
    %c0_3 = arith.constant 0 : index
    %4 = vector.load %arg3[%c0, %c0_1, %c0_2, %c0_3] : memref<1x1x120x128xbf16, #tpu.memory_space<vmem>>, vector<1x1x32x128xbf16>
    %5 = vector.shape_cast %4 : vector<1x1x32x128xbf16> to vector<32x128xbf16>
    %c9_i32 = arith.constant 9 : i32
    %6 = arith.muli %arg2, %c9_i32 : i32
    %c0_i32_4 = arith.constant 0 : i32
    %7 = arith.addi %6, %c0_i32_4 : i32
    %c0_i32_5 = arith.constant 0 : i32
    %8 = arith.addi %7, %c0_i32_5 : i32
    %9 = arith.index_cast %8 : i32 to index
    %c0_6 = arith.constant 0 : index
    %c0_7 = arith.constant 0 : index
    %10 = vector.load %arg4[%9, %c0_6, %c0_7] : memref<27x128x128xbf16, #tpu.memory_space<vmem>>, vector<1x128x128xbf16>
    %11 = vector.shape_cast %10 : vector<1x128x128xbf16> to vector<128x128xbf16>
    %cst_8 = arith.constant dense<0.000000e+00> : vector<32x128xf32>
    %12 = tpu.matmul %5, %11, %cst_8 {dimension_numbers = #tpu.dot_dimension_numbers<[1], [0], [0], [1], [0, 0, 1, 1], [], []>} : vector<32x128xbf16>, vector<128x128xbf16>, vector<32x128xf32> -> vector<32x128xf32>
    %13 = arith.addf %3, %12 : vector<32x128xf32>
    %c0_9 = arith.constant 0 : index
    %c0_10 = arith.constant 0 : index
    %c40 = arith.constant 40 : index
    %c0_11 = arith.constant 0 : index
    %14 = vector.load %arg3[%c0_9, %c0_10, %c40, %c0_11] : memref<1x1x120x128xbf16, #tpu.memory_space<vmem>>, vector<1x1x32x128xbf16>
    %15 = vector.shape_cast %14 : vector<1x1x32x128xbf16> to vector<32x128xbf16>
    %c9_i32_12 = arith.constant 9 : i32
    %16 = arith.muli %arg2, %c9_i32_12 : i32
    %c0_i32_13 = arith.constant 0 : i32
    %17 = arith.addi %16, %c0_i32_13 : i32
    %c1_i32 = arith.constant 1 : i32
    %18 = arith.addi %17, %c1_i32 : i32
    %19 = arith.index_cast %18 : i32 to index
    %c0_14 = arith.constant 0 : index
    %c0_15 = arith.constant 0 : index
    %20 = vector.load %arg4[%19, %c0_14, %c0_15] : memref<27x128x128xbf16, #tpu.memory_space<vmem>>, vector<1x128x128xbf16>
    %21 = vector.shape_cast %20 : vector<1x128x128xbf16> to vector<128x128xbf16>
    %cst_16 = arith.constant dense<0.000000e+00> : vector<32x128xf32>
    %22 = tpu.matmul %15, %21, %cst_16 {dimension_numbers = #tpu.dot_dimension_numbers<[1], [0], [0], [1], [0, 0, 1, 1], [], []>} : vector<32x128xbf16>, vector<128x128xbf16>, vector<32x128xf32> -> vector<32x128xf32>
    %23 = arith.addf %13, %22 : vector<32x128xf32>
    %c0_17 = arith.constant 0 : index
    %c0_18 = arith.constant 0 : index
    %c80 = arith.constant 80 : index
    %c0_19 = arith.constant 0 : index
    %24 = vector.load %arg3[%c0_17, %c0_18, %c80, %c0_19] : memref<1x1x120x128xbf16, #tpu.memory_space<vmem>>, vector<1x1x32x128xbf16>
    %25 = vector.shape_cast %24 : vector<1x1x32x128xbf16> to vector<32x128xbf16>
    %c9_i32_20 = arith.constant 9 : i32
    %26 = arith.muli %arg2, %c9_i32_20 : i32
    %c0_i32_21 = arith.constant 0 : i32
    %27 = arith.addi %26, %c0_i32_21 : i32
    %c2_i32 = arith.constant 2 : i32
    %28 = arith.addi %27, %c2_i32 : i32
    %29 = arith.index_cast %28 : i32 to index
    %c0_22 = arith.constant 0 : index
    %c0_23 = arith.constant 0 : index
    %30 = vector.load %arg4[%29, %c0_22, %c0_23] : memref<27x128x128xbf16, #tpu.memory_space<vmem>>, vector<1x128x128xbf16>
    %31 = vector.shape_cast %30 : vector<1x128x128xbf16> to vector<128x128xbf16>
    %cst_24 = arith.constant dense<0.000000e+00> : vector<32x128xf32>
    %32 = tpu.matmul %25, %31, %cst_24 {dimension_numbers = #tpu.dot_dimension_numbers<[1], [0], [0], [1], [0, 0, 1, 1], [], []>} : vector<32x128xbf16>, vector<128x128xbf16>, vector<32x128xf32> -> vector<32x128xf32>
    %33 = arith.addf %23, %32 : vector<32x128xf32>
    %c0_25 = arith.constant 0 : index
    %c0_26 = arith.constant 0 : index
    %c4 = arith.constant 4 : index
    %c0_27 = arith.constant 0 : index
    %34 = vector.load %arg3[%c0_25, %c0_26, %c4, %c0_27] : memref<1x1x120x128xbf16, #tpu.memory_space<vmem>>, vector<1x1x32x128xbf16>
    %35 = vector.shape_cast %34 : vector<1x1x32x128xbf16> to vector<32x128xbf16>
    %c9_i32_28 = arith.constant 9 : i32
    %36 = arith.muli %arg2, %c9_i32_28 : i32
    %c3_i32 = arith.constant 3 : i32
    %37 = arith.addi %36, %c3_i32 : i32
    %c0_i32_29 = arith.constant 0 : i32
    %38 = arith.addi %37, %c0_i32_29 : i32
    %39 = arith.index_cast %38 : i32 to index
    %c0_30 = arith.constant 0 : index
    %c0_31 = arith.constant 0 : index
    %40 = vector.load %arg4[%39, %c0_30, %c0_31] : memref<27x128x128xbf16, #tpu.memory_space<vmem>>, vector<1x128x128xbf16>
    %41 = vector.shape_cast %40 : vector<1x128x128xbf16> to vector<128x128xbf16>
    %cst_32 = arith.constant dense<0.000000e+00> : vector<32x128xf32>
    %42 = tpu.matmul %35, %41, %cst_32 {dimension_numbers = #tpu.dot_dimension_numbers<[1], [0], [0], [1], [0, 0, 1, 1], [], []>} : vector<32x128xbf16>, vector<128x128xbf16>, vector<32x128xf32> -> vector<32x128xf32>
    %43 = arith.addf %33, %42 : vector<32x128xf32>
    %c0_33 = arith.constant 0 : index
    %c0_34 = arith.constant 0 : index
    %c44 = arith.constant 44 : index
    %c0_35 = arith.constant 0 : index
    %44 = vector.load %arg3[%c0_33, %c0_34, %c44, %c0_35] : memref<1x1x120x128xbf16, #tpu.memory_space<vmem>>, vector<1x1x32x128xbf16>
    %45 = vector.shape_cast %44 : vector<1x1x32x128xbf16> to vector<32x128xbf16>
    %c9_i32_36 = arith.constant 9 : i32
    %46 = arith.muli %arg2, %c9_i32_36 : i32
    %c3_i32_37 = arith.constant 3 : i32
    %47 = arith.addi %46, %c3_i32_37 : i32
    %c1_i32_38 = arith.constant 1 : i32
    %48 = arith.addi %47, %c1_i32_38 : i32
    %49 = arith.index_cast %48 : i32 to index
    %c0_39 = arith.constant 0 : index
    %c0_40 = arith.constant 0 : index
    %50 = vector.load %arg4[%49, %c0_39, %c0_40] : memref<27x128x128xbf16, #tpu.memory_space<vmem>>, vector<1x128x128xbf16>
    %51 = vector.shape_cast %50 : vector<1x128x128xbf16> to vector<128x128xbf16>
    %cst_41 = arith.constant dense<0.000000e+00> : vector<32x128xf32>
    %52 = tpu.matmul %45, %51, %cst_41 {dimension_numbers = #tpu.dot_dimension_numbers<[1], [0], [0], [1], [0, 0, 1, 1], [], []>} : vector<32x128xbf16>, vector<128x128xbf16>, vector<32x128xf32> -> vector<32x128xf32>
    %53 = arith.addf %43, %52 : vector<32x128xf32>
    %c0_42 = arith.constant 0 : index
    %c0_43 = arith.constant 0 : index
    %c84 = arith.constant 84 : index
    %c0_44 = arith.constant 0 : index
    %54 = vector.load %arg3[%c0_42, %c0_43, %c84, %c0_44] : memref<1x1x120x128xbf16, #tpu.memory_space<vmem>>, vector<1x1x32x128xbf16>
    %55 = vector.shape_cast %54 : vector<1x1x32x128xbf16> to vector<32x128xbf16>
    %c9_i32_45 = arith.constant 9 : i32
    %56 = arith.muli %arg2, %c9_i32_45 : i32
    %c3_i32_46 = arith.constant 3 : i32
    %57 = arith.addi %56, %c3_i32_46 : i32
    %c2_i32_47 = arith.constant 2 : i32
    %58 = arith.addi %57, %c2_i32_47 : i32
    %59 = arith.index_cast %58 : i32 to index
    %c0_48 = arith.constant 0 : index
    %c0_49 = arith.constant 0 : index
    %60 = vector.load %arg4[%59, %c0_48, %c0_49] : memref<27x128x128xbf16, #tpu.memory_space<vmem>>, vector<1x128x128xbf16>
    %61 = vector.shape_cast %60 : vector<1x128x128xbf16> to vector<128x128xbf16>
    %cst_50 = arith.constant dense<0.000000e+00> : vector<32x128xf32>
    %62 = tpu.matmul %55, %61, %cst_50 {dimension_numbers = #tpu.dot_dimension_numbers<[1], [0], [0], [1], [0, 0, 1, 1], [], []>} : vector<32x128xbf16>, vector<128x128xbf16>, vector<32x128xf32> -> vector<32x128xf32>
    %63 = arith.addf %53, %62 : vector<32x128xf32>
    %c0_51 = arith.constant 0 : index
    %c0_52 = arith.constant 0 : index
    %c8 = arith.constant 8 : index
    %c0_53 = arith.constant 0 : index
    %64 = vector.load %arg3[%c0_51, %c0_52, %c8, %c0_53] : memref<1x1x120x128xbf16, #tpu.memory_space<vmem>>, vector<1x1x32x128xbf16>
    %65 = vector.shape_cast %64 : vector<1x1x32x128xbf16> to vector<32x128xbf16>
    %c9_i32_54 = arith.constant 9 : i32
    %66 = arith.muli %arg2, %c9_i32_54 : i32
    %c6_i32 = arith.constant 6 : i32
    %67 = arith.addi %66, %c6_i32 : i32
    %c0_i32_55 = arith.constant 0 : i32
    %68 = arith.addi %67, %c0_i32_55 : i32
    %69 = arith.index_cast %68 : i32 to index
    %c0_56 = arith.constant 0 : index
    %c0_57 = arith.constant 0 : index
    %70 = vector.load %arg4[%69, %c0_56, %c0_57] : memref<27x128x128xbf16, #tpu.memory_space<vmem>>, vector<1x128x128xbf16>
    %71 = vector.shape_cast %70 : vector<1x128x128xbf16> to vector<128x128xbf16>
    %cst_58 = arith.constant dense<0.000000e+00> : vector<32x128xf32>
    %72 = tpu.matmul %65, %71, %cst_58 {dimension_numbers = #tpu.dot_dimension_numbers<[1], [0], [0], [1], [0, 0, 1, 1], [], []>} : vector<32x128xbf16>, vector<128x128xbf16>, vector<32x128xf32> -> vector<32x128xf32>
    %73 = arith.addf %63, %72 : vector<32x128xf32>
    %c0_59 = arith.constant 0 : index
    %c0_60 = arith.constant 0 : index
    %c48 = arith.constant 48 : index
    %c0_61 = arith.constant 0 : index
    %74 = vector.load %arg3[%c0_59, %c0_60, %c48, %c0_61] : memref<1x1x120x128xbf16, #tpu.memory_space<vmem>>, vector<1x1x32x128xbf16>
    %75 = vector.shape_cast %74 : vector<1x1x32x128xbf16> to vector<32x128xbf16>
    %c9_i32_62 = arith.constant 9 : i32
    %76 = arith.muli %arg2, %c9_i32_62 : i32
    %c6_i32_63 = arith.constant 6 : i32
    %77 = arith.addi %76, %c6_i32_63 : i32
    %c1_i32_64 = arith.constant 1 : i32
    %78 = arith.addi %77, %c1_i32_64 : i32
    %79 = arith.index_cast %78 : i32 to index
    %c0_65 = arith.constant 0 : index
    %c0_66 = arith.constant 0 : index
    %80 = vector.load %arg4[%79, %c0_65, %c0_66] : memref<27x128x128xbf16, #tpu.memory_space<vmem>>, vector<1x128x128xbf16>
    %81 = vector.shape_cast %80 : vector<1x128x128xbf16> to vector<128x128xbf16>
    %cst_67 = arith.constant dense<0.000000e+00> : vector<32x128xf32>
    %82 = tpu.matmul %75, %81, %cst_67 {dimension_numbers = #tpu.dot_dimension_numbers<[1], [0], [0], [1], [0, 0, 1, 1], [], []>} : vector<32x128xbf16>, vector<128x128xbf16>, vector<32x128xf32> -> vector<32x128xf32>
    %83 = arith.addf %73, %82 : vector<32x128xf32>
    %c0_68 = arith.constant 0 : index
    %c0_69 = arith.constant 0 : index
    %c88 = arith.constant 88 : index
    %c0_70 = arith.constant 0 : index
    %84 = vector.load %arg3[%c0_68, %c0_69, %c88, %c0_70] : memref<1x1x120x128xbf16, #tpu.memory_space<vmem>>, vector<1x1x32x128xbf16>
    %85 = vector.shape_cast %84 : vector<1x1x32x128xbf16> to vector<32x128xbf16>
    %c9_i32_71 = arith.constant 9 : i32
    %86 = arith.muli %arg2, %c9_i32_71 : i32
    %c6_i32_72 = arith.constant 6 : i32
    %87 = arith.addi %86, %c6_i32_72 : i32
    %c2_i32_73 = arith.constant 2 : i32
    %88 = arith.addi %87, %c2_i32_73 : i32
    %89 = arith.index_cast %88 : i32 to index
    %c0_74 = arith.constant 0 : index
    %c0_75 = arith.constant 0 : index
    %90 = vector.load %arg4[%89, %c0_74, %c0_75] : memref<27x128x128xbf16, #tpu.memory_space<vmem>>, vector<1x128x128xbf16>
    %91 = vector.shape_cast %90 : vector<1x128x128xbf16> to vector<128x128xbf16>
    %cst_76 = arith.constant dense<0.000000e+00> : vector<32x128xf32>
    %92 = tpu.matmul %85, %91, %cst_76 {dimension_numbers = #tpu.dot_dimension_numbers<[1], [0], [0], [1], [0, 0, 1, 1], [], []>} : vector<32x128xbf16>, vector<128x128xbf16>, vector<32x128xf32> -> vector<32x128xf32>
    %93 = arith.addf %83, %92 : vector<32x128xf32>
    %c0_77 = arith.constant 0 : index
    %c0_78 = arith.constant 0 : index
    %94 = vector.load %arg8[%c0_77, %c0_78] : memref<32x128xf32, #tpu.memory_space<vmem>>, vector<32x128xf32>
    %95 = arith.addf %94, %93 : vector<32x128xf32>
    %c0_79 = arith.constant 0 : index
    %c0_80 = arith.constant 0 : index
    %96 = vector.load %arg8[%c0_79, %c0_80] : memref<32x128xf32, #tpu.memory_space<vmem>>, vector<32x128xf32>
    tpu.vector_store %arg8[%c0_79, %c0_80], %95 {strides = array<i32>} : memref<32x128xf32, #tpu.memory_space<vmem>>, vector<32x128xf32>,
    %c2_i32_81 = arith.constant 2 : i32
    %97 = arith.cmpi eq, %arg2, %c2_i32_81 : i32
    %98 = arith.extui %97 : i1 to i32
    %c0_i32_82 = arith.constant 0 : i32
    %99 = arith.cmpi ne, %98, %c0_i32_82 : i32
    scf.if %99 {
      %c0_83 = arith.constant 0 : index
      %c0_84 = arith.constant 0 : index
      %100 = vector.load %arg8[%c0_83, %c0_84] : memref<32x128xf32, #tpu.memory_space<vmem>>, vector<32x128xf32>
      %c0_85 = arith.constant 0 : index
      %c0_86 = arith.constant 0 : index
      %c0_87 = arith.constant 0 : index
      %c0_88 = arith.constant 0 : index
      %101 = vector.load %arg6[%c0_85, %c0_86, %c0_87, %c0_88] : memref<1x1x32x128xf32, #tpu.memory_space<vmem>>, vector<1x1x32x128xf32>
      %102 = vector.shape_cast %101 : vector<1x1x32x128xf32> to vector<32x128xf32>
      %103 = vector.shape_cast %100 : vector<32x128xf32> to vector<1x1x32x128xf32>
      tpu.vector_store %arg6[%c0_85, %c0_86, %c0_87, %c0_88], %103 {strides = array<i32>} : memref<1x1x32x128xf32, #tpu.memory_space<vmem>>, vector<1x1x32x128xf32>,
      %c0_89 = arith.constant 0 : index
      %c0_90 = arith.constant 0 : index
      %104 = vector.load %arg5[%c0_89, %c0_90] : memref<32x1xf32, #tpu.memory_space<vmem>>, vector<32x1xf32>
      %105 = vector.broadcast %104 : vector<32x1xf32> to vector<32x128xf32>
      %106 = arith.mulf %100, %105 : vector<32x128xf32>
      %cst_91 = arith.constant dense<0.000000e+00> : vector<128xf32>
      %107 = vector.multi_reduction <add>, %106, %cst_91 [0] : vector<32x128xf32> to vector<128xf32>
      %108 = vector.shape_cast %107 : vector<128xf32> to vector<1x128xf32>
      %109 = arith.mulf %100, %100 : vector<32x128xf32>
      %110 = vector.broadcast %104 : vector<32x1xf32> to vector<32x128xf32>
      %111 = arith.mulf %109, %110 : vector<32x128xf32>
      %cst_92 = arith.constant dense<0.000000e+00> : vector<128xf32>
      %112 = vector.multi_reduction <add>, %111, %cst_92 [0] : vector<32x128xf32> to vector<128xf32>
      %113 = vector.shape_cast %112 : vector<128xf32> to vector<1x128xf32>
      %114 = tpu.concatenate %108, %113 in 0 : vector<1x128xf32>, vector<1x128xf32> -> vector<2x128xf32>
      %c0_93 = arith.constant 0 : index
      %c0_94 = arith.constant 0 : index
      %c0_95 = arith.constant 0 : index
      %c0_96 = arith.constant 0 : index
      %115 = vector.load %arg7[%c0_93, %c0_94, %c0_95, %c0_96] : memref<1x1x2x128xf32, #tpu.memory_space<vmem>>, vector<1x1x2x128xf32>
      %116 = vector.shape_cast %115 : vector<1x1x2x128xf32> to vector<2x128xf32>
      %117 = vector.shape_cast %114 : vector<2x128xf32> to vector<1x1x2x128xf32>
      tpu.vector_store %arg7[%c0_93, %c0_94, %c0_95, %c0_96], %117 {strides = array<i32>} : memref<1x1x2x128xf32, #tpu.memory_space<vmem>>, vector<1x1x2x128xf32>,
    } else {
    }
    return
  }
  func.func @transform_0(%arg0: i32, %arg1: i32, %arg2: i32) -> (i32, i32, i32, i32) {
    %c2_i32 = arith.constant 2 : i32
    %0 = arith.muli %arg1, %c2_i32 : i32
    %1 = arith.addi %0, %arg2 : i32
    %c0_i32 = arith.constant 0 : i32
    %c0_i32_0 = arith.constant 0 : i32
    %c0_i32_1 = arith.constant 0 : i32
    return %arg0, %1, %c0_i32, %c0_i32_0 : i32, i32, i32, i32
  }
  func.func @transform_1(%arg0: i32, %arg1: i32, %arg2: i32) -> (i32, i32, i32) {
    %c0_i32 = arith.constant 0 : i32
    %c0_i32_0 = arith.constant 0 : i32
    %c0_i32_1 = arith.constant 0 : i32
    %c0_i32_2 = arith.constant 0 : i32
    return %c0_i32, %c0_i32_0, %c0_i32_1 : i32, i32, i32
  }
  func.func @transform_2(%arg0: i32, %arg1: i32, %arg2: i32) -> (i32, i32) {
    %c0_i32 = arith.constant 0 : i32
    %c0_i32_0 = arith.constant 0 : i32
    %c0_i32_1 = arith.constant 0 : i32
    return %c0_i32, %c0_i32_0 : i32, i32
  }
  func.func @transform_3(%arg0: i32, %arg1: i32, %arg2: i32) -> (i32, i32, i32, i32) {
    %c0_i32 = arith.constant 0 : i32
    %c0_i32_0 = arith.constant 0 : i32
    %c0_i32_1 = arith.constant 0 : i32
    return %arg0, %arg1, %c0_i32, %c0_i32_0 : i32, i32, i32, i32
  }
  func.func @transform_4(%arg0: i32, %arg1: i32, %arg2: i32) -> (i32, i32, i32, i32) {
    %c0_i32 = arith.constant 0 : i32
    %c0_i32_0 = arith.constant 0 : i32
    %c0_i32_1 = arith.constant 0 : i32
    return %arg0, %arg1, %c0_i32, %c0_i32_0 : i32, i32, i32, i32
  }
}

module attributes {stable_mosaic.version = 11 : i64} {
  func.func @_affine_relu_kernel(%arg0: i32, %arg1: memref<64x128xf32, #tpu.memory_space<vmem>>, %arg2: memref<1x128xf32, #tpu.memory_space<vmem>>, %arg3: memref<1x128xf32, #tpu.memory_space<vmem>>, %arg4: memref<64x128xf32, #tpu.memory_space<vmem>>) attributes {dimension_semantics = [#tpu.dimension_semantics<parallel>], iteration_bounds = array<i64: 2>, scalar_prefetch = 0 : i64, scratch_operands = 0 : i64, tpu.core_type = #tpu.core_type<tc>, window_params = [{transform_indices = @transform_0, window_bounds = array<i64: 64, 128>}, {pipeline_mode = #tpu.pipeline_mode<synchronous>, transform_indices = @transform_1, window_bounds = array<i64: 1, 128>}, {pipeline_mode = #tpu.pipeline_mode<synchronous>, transform_indices = @transform_2, window_bounds = array<i64: 1, 128>}, {transform_indices = @transform_3, window_bounds = array<i64: 64, 128>}]} {
    %c0 = arith.constant 0 : index
    %c0_0 = arith.constant 0 : index
    %0 = vector.load %arg1[%c0, %c0_0] : memref<64x128xf32, #tpu.memory_space<vmem>>, vector<64x128xf32>
    %c0_1 = arith.constant 0 : index
    %c0_2 = arith.constant 0 : index
    %1 = vector.load %arg2[%c0_1, %c0_2] : memref<1x128xf32, #tpu.memory_space<vmem>>, vector<1x128xf32>
    %2 = vector.broadcast %1 : vector<1x128xf32> to vector<64x128xf32>
    %3 = arith.mulf %0, %2 : vector<64x128xf32>
    %c0_3 = arith.constant 0 : index
    %c0_4 = arith.constant 0 : index
    %4 = vector.load %arg3[%c0_3, %c0_4] : memref<1x128xf32, #tpu.memory_space<vmem>>, vector<1x128xf32>
    %5 = vector.broadcast %4 : vector<1x128xf32> to vector<64x128xf32>
    %6 = arith.addf %3, %5 : vector<64x128xf32>
    %cst = arith.constant 0.000000e+00 : f32
    %7 = vector.broadcast %cst : f32 to vector<64x128xf32>
    %8 = arith.maximumf %6, %7 : vector<64x128xf32>
    %c0_5 = arith.constant 0 : index
    %c0_6 = arith.constant 0 : index
    %9 = vector.load %arg4[%c0_5, %c0_6] : memref<64x128xf32, #tpu.memory_space<vmem>>, vector<64x128xf32>
    tpu.vector_store %arg4[%c0_5, %c0_6], %8 {strides = array<i32>} : memref<64x128xf32, #tpu.memory_space<vmem>>, vector<64x128xf32>,
    return
  }
  func.func @transform_0(%arg0: i32) -> (i32, i32) {
    %c0_i32 = arith.constant 0 : i32
    %c0_i32_0 = arith.constant 0 : i32
    return %arg0, %c0_i32 : i32, i32
  }
  func.func @transform_1(%arg0: i32) -> (i32, i32) {
    %c0_i32 = arith.constant 0 : i32
    %c0_i32_0 = arith.constant 0 : i32
    %c0_i32_1 = arith.constant 0 : i32
    return %c0_i32, %c0_i32_0 : i32, i32
  }
  func.func @transform_2(%arg0: i32) -> (i32, i32) {
    %c0_i32 = arith.constant 0 : i32
    %c0_i32_0 = arith.constant 0 : i32
    %c0_i32_1 = arith.constant 0 : i32
    return %c0_i32, %c0_i32_0 : i32, i32
  }
  func.func @transform_3(%arg0: i32) -> (i32, i32) {
    %c0_i32 = arith.constant 0 : i32
    %c0_i32_0 = arith.constant 0 : i32
    return %arg0, %c0_i32 : i32, i32
  }
}

module attributes {stable_mosaic.version = 11 : i64} {
  func.func @_conv_tap_kernel(%arg0: i32, %arg1: i32, %arg2: i32, %arg3: memref<1x1x38x128xbf16, #tpu.memory_space<vmem>>, %arg4: memref<27x128x128xbf16, #tpu.memory_space<vmem>>, %arg5: memref<24x1xf32, #tpu.memory_space<vmem>>, %arg6: memref<1x1x24x128xf32, #tpu.memory_space<vmem>>, %arg7: memref<1x1x2x128xf32, #tpu.memory_space<vmem>>, %arg8: memref<24x128xf32, #tpu.memory_space<vmem>>) attributes {dimension_semantics = [#tpu.dimension_semantics<parallel>, #tpu.dimension_semantics<parallel>, #tpu.dimension_semantics<arbitrary>], iteration_bounds = array<i64: 2, 4, 3>, scalar_prefetch = 0 : i64, scratch_operands = 1 : i64, tpu.core_type = #tpu.core_type<tc>, window_params = [{transform_indices = @transform_0, window_bounds = array<i64: 1, 1, 38, 128>}, {pipeline_mode = #tpu.pipeline_mode<synchronous>, transform_indices = @transform_1, window_bounds = array<i64: 27, 128, 128>}, {pipeline_mode = #tpu.pipeline_mode<synchronous>, transform_indices = @transform_2, window_bounds = array<i64: 24, 1>}, {transform_indices = @transform_3, window_bounds = array<i64: 1, 1, 24, 128>}, {transform_indices = @transform_4, window_bounds = array<i64: 1, 1, 2, 128>}]} {
    %c0_i32 = arith.constant 0 : i32
    %0 = arith.cmpi eq, %arg2, %c0_i32 : i32
    %1 = arith.extui %0 : i1 to i32
    %c0_i32_0 = arith.constant 0 : i32
    %2 = arith.cmpi ne, %1, %c0_i32_0 : i32
    scf.if %2 {
      %cst_83 = arith.constant 0.000000e+00 : f32
      %100 = vector.broadcast %cst_83 : f32 to vector<24x128xf32>
      %c0_84 = arith.constant 0 : index
      %c0_85 = arith.constant 0 : index
      %101 = vector.load %arg8[%c0_84, %c0_85] : memref<24x128xf32, #tpu.memory_space<vmem>>, vector<24x128xf32>
      tpu.vector_store %arg8[%c0_84, %c0_85], %100 {strides = array<i32>} : memref<24x128xf32, #tpu.memory_space<vmem>>, vector<24x128xf32>,
    } else {
    }
    %cst = arith.constant 0.000000e+00 : f32
    %3 = vector.broadcast %cst : f32 to vector<24x128xf32>
    %c0 = arith.constant 0 : index
    %c0_1 = arith.constant 0 : index
    %c0_2 = arith.constant 0 : index
    %c0_3 = arith.constant 0 : index
    %4 = vector.load %arg3[%c0, %c0_1, %c0_2, %c0_3] : memref<1x1x38x128xbf16, #tpu.memory_space<vmem>>, vector<1x1x24x128xbf16>
    %5 = vector.shape_cast %4 : vector<1x1x24x128xbf16> to vector<24x128xbf16>
    %c9_i32 = arith.constant 9 : i32
    %6 = arith.muli %arg2, %c9_i32 : i32
    %c0_i32_4 = arith.constant 0 : i32
    %7 = arith.addi %6, %c0_i32_4 : i32
    %c0_i32_5 = arith.constant 0 : i32
    %8 = arith.addi %7, %c0_i32_5 : i32
    %9 = arith.index_cast %8 : i32 to index
    %c0_6 = arith.constant 0 : index
    %c0_7 = arith.constant 0 : index
    %10 = vector.load %arg4[%9, %c0_6, %c0_7] : memref<27x128x128xbf16, #tpu.memory_space<vmem>>, vector<1x128x128xbf16>
    %11 = vector.shape_cast %10 : vector<1x128x128xbf16> to vector<128x128xbf16>
    %cst_8 = arith.constant dense<0.000000e+00> : vector<24x128xf32>
    %12 = tpu.matmul %5, %11, %cst_8 {dimension_numbers = #tpu.dot_dimension_numbers<[1], [0], [0], [1], [0, 0, 1, 1], [], []>} : vector<24x128xbf16>, vector<128x128xbf16>, vector<24x128xf32> -> vector<24x128xf32>
    %13 = arith.addf %3, %12 : vector<24x128xf32>
    %c0_9 = arith.constant 0 : index
    %c0_10 = arith.constant 0 : index
    %c1 = arith.constant 1 : index
    %c0_11 = arith.constant 0 : index
    %14 = vector.load %arg3[%c0_9, %c0_10, %c1, %c0_11] : memref<1x1x38x128xbf16, #tpu.memory_space<vmem>>, vector<1x1x24x128xbf16>
    %15 = vector.shape_cast %14 : vector<1x1x24x128xbf16> to vector<24x128xbf16>
    %c9_i32_12 = arith.constant 9 : i32
    %16 = arith.muli %arg2, %c9_i32_12 : i32
    %c0_i32_13 = arith.constant 0 : i32
    %17 = arith.addi %16, %c0_i32_13 : i32
    %c1_i32 = arith.constant 1 : i32
    %18 = arith.addi %17, %c1_i32 : i32
    %19 = arith.index_cast %18 : i32 to index
    %c0_14 = arith.constant 0 : index
    %c0_15 = arith.constant 0 : index
    %20 = vector.load %arg4[%19, %c0_14, %c0_15] : memref<27x128x128xbf16, #tpu.memory_space<vmem>>, vector<1x128x128xbf16>
    %21 = vector.shape_cast %20 : vector<1x128x128xbf16> to vector<128x128xbf16>
    %cst_16 = arith.constant dense<0.000000e+00> : vector<24x128xf32>
    %22 = tpu.matmul %15, %21, %cst_16 {dimension_numbers = #tpu.dot_dimension_numbers<[1], [0], [0], [1], [0, 0, 1, 1], [], []>} : vector<24x128xbf16>, vector<128x128xbf16>, vector<24x128xf32> -> vector<24x128xf32>
    %23 = arith.addf %13, %22 : vector<24x128xf32>
    %c0_17 = arith.constant 0 : index
    %c0_18 = arith.constant 0 : index
    %c2 = arith.constant 2 : index
    %c0_19 = arith.constant 0 : index
    %24 = vector.load %arg3[%c0_17, %c0_18, %c2, %c0_19] : memref<1x1x38x128xbf16, #tpu.memory_space<vmem>>, vector<1x1x24x128xbf16>
    %25 = vector.shape_cast %24 : vector<1x1x24x128xbf16> to vector<24x128xbf16>
    %c9_i32_20 = arith.constant 9 : i32
    %26 = arith.muli %arg2, %c9_i32_20 : i32
    %c0_i32_21 = arith.constant 0 : i32
    %27 = arith.addi %26, %c0_i32_21 : i32
    %c2_i32 = arith.constant 2 : i32
    %28 = arith.addi %27, %c2_i32 : i32
    %29 = arith.index_cast %28 : i32 to index
    %c0_22 = arith.constant 0 : index
    %c0_23 = arith.constant 0 : index
    %30 = vector.load %arg4[%29, %c0_22, %c0_23] : memref<27x128x128xbf16, #tpu.memory_space<vmem>>, vector<1x128x128xbf16>
    %31 = vector.shape_cast %30 : vector<1x128x128xbf16> to vector<128x128xbf16>
    %cst_24 = arith.constant dense<0.000000e+00> : vector<24x128xf32>
    %32 = tpu.matmul %25, %31, %cst_24 {dimension_numbers = #tpu.dot_dimension_numbers<[1], [0], [0], [1], [0, 0, 1, 1], [], []>} : vector<24x128xbf16>, vector<128x128xbf16>, vector<24x128xf32> -> vector<24x128xf32>
    %33 = arith.addf %23, %32 : vector<24x128xf32>
    %c0_25 = arith.constant 0 : index
    %c0_26 = arith.constant 0 : index
    %c6 = arith.constant 6 : index
    %c0_27 = arith.constant 0 : index
    %34 = vector.load %arg3[%c0_25, %c0_26, %c6, %c0_27] : memref<1x1x38x128xbf16, #tpu.memory_space<vmem>>, vector<1x1x24x128xbf16>
    %35 = vector.shape_cast %34 : vector<1x1x24x128xbf16> to vector<24x128xbf16>
    %c9_i32_28 = arith.constant 9 : i32
    %36 = arith.muli %arg2, %c9_i32_28 : i32
    %c3_i32 = arith.constant 3 : i32
    %37 = arith.addi %36, %c3_i32 : i32
    %c0_i32_29 = arith.constant 0 : i32
    %38 = arith.addi %37, %c0_i32_29 : i32
    %39 = arith.index_cast %38 : i32 to index
    %c0_30 = arith.constant 0 : index
    %c0_31 = arith.constant 0 : index
    %40 = vector.load %arg4[%39, %c0_30, %c0_31] : memref<27x128x128xbf16, #tpu.memory_space<vmem>>, vector<1x128x128xbf16>
    %41 = vector.shape_cast %40 : vector<1x128x128xbf16> to vector<128x128xbf16>
    %cst_32 = arith.constant dense<0.000000e+00> : vector<24x128xf32>
    %42 = tpu.matmul %35, %41, %cst_32 {dimension_numbers = #tpu.dot_dimension_numbers<[1], [0], [0], [1], [0, 0, 1, 1], [], []>} : vector<24x128xbf16>, vector<128x128xbf16>, vector<24x128xf32> -> vector<24x128xf32>
    %43 = arith.addf %33, %42 : vector<24x128xf32>
    %c0_33 = arith.constant 0 : index
    %c0_34 = arith.constant 0 : index
    %c7 = arith.constant 7 : index
    %c0_35 = arith.constant 0 : index
    %44 = vector.load %arg3[%c0_33, %c0_34, %c7, %c0_35] : memref<1x1x38x128xbf16, #tpu.memory_space<vmem>>, vector<1x1x24x128xbf16>
    %45 = vector.shape_cast %44 : vector<1x1x24x128xbf16> to vector<24x128xbf16>
    %c9_i32_36 = arith.constant 9 : i32
    %46 = arith.muli %arg2, %c9_i32_36 : i32
    %c3_i32_37 = arith.constant 3 : i32
    %47 = arith.addi %46, %c3_i32_37 : i32
    %c1_i32_38 = arith.constant 1 : i32
    %48 = arith.addi %47, %c1_i32_38 : i32
    %49 = arith.index_cast %48 : i32 to index
    %c0_39 = arith.constant 0 : index
    %c0_40 = arith.constant 0 : index
    %50 = vector.load %arg4[%49, %c0_39, %c0_40] : memref<27x128x128xbf16, #tpu.memory_space<vmem>>, vector<1x128x128xbf16>
    %51 = vector.shape_cast %50 : vector<1x128x128xbf16> to vector<128x128xbf16>
    %cst_41 = arith.constant dense<0.000000e+00> : vector<24x128xf32>
    %52 = tpu.matmul %45, %51, %cst_41 {dimension_numbers = #tpu.dot_dimension_numbers<[1], [0], [0], [1], [0, 0, 1, 1], [], []>} : vector<24x128xbf16>, vector<128x128xbf16>, vector<24x128xf32> -> vector<24x128xf32>
    %53 = arith.addf %43, %52 : vector<24x128xf32>
    %c0_42 = arith.constant 0 : index
    %c0_43 = arith.constant 0 : index
    %c8 = arith.constant 8 : index
    %c0_44 = arith.constant 0 : index
    %54 = vector.load %arg3[%c0_42, %c0_43, %c8, %c0_44] : memref<1x1x38x128xbf16, #tpu.memory_space<vmem>>, vector<1x1x24x128xbf16>
    %55 = vector.shape_cast %54 : vector<1x1x24x128xbf16> to vector<24x128xbf16>
    %c9_i32_45 = arith.constant 9 : i32
    %56 = arith.muli %arg2, %c9_i32_45 : i32
    %c3_i32_46 = arith.constant 3 : i32
    %57 = arith.addi %56, %c3_i32_46 : i32
    %c2_i32_47 = arith.constant 2 : i32
    %58 = arith.addi %57, %c2_i32_47 : i32
    %59 = arith.index_cast %58 : i32 to index
    %c0_48 = arith.constant 0 : index
    %c0_49 = arith.constant 0 : index
    %60 = vector.load %arg4[%59, %c0_48, %c0_49] : memref<27x128x128xbf16, #tpu.memory_space<vmem>>, vector<1x128x128xbf16>
    %61 = vector.shape_cast %60 : vector<1x128x128xbf16> to vector<128x128xbf16>
    %cst_50 = arith.constant dense<0.000000e+00> : vector<24x128xf32>
    %62 = tpu.matmul %55, %61, %cst_50 {dimension_numbers = #tpu.dot_dimension_numbers<[1], [0], [0], [1], [0, 0, 1, 1], [], []>} : vector<24x128xbf16>, vector<128x128xbf16>, vector<24x128xf32> -> vector<24x128xf32>
    %63 = arith.addf %53, %62 : vector<24x128xf32>
    %c0_51 = arith.constant 0 : index
    %c0_52 = arith.constant 0 : index
    %c12 = arith.constant 12 : index
    %c0_53 = arith.constant 0 : index
    %64 = vector.load %arg3[%c0_51, %c0_52, %c12, %c0_53] : memref<1x1x38x128xbf16, #tpu.memory_space<vmem>>, vector<1x1x24x128xbf16>
    %65 = vector.shape_cast %64 : vector<1x1x24x128xbf16> to vector<24x128xbf16>
    %c9_i32_54 = arith.constant 9 : i32
    %66 = arith.muli %arg2, %c9_i32_54 : i32
    %c6_i32 = arith.constant 6 : i32
    %67 = arith.addi %66, %c6_i32 : i32
    %c0_i32_55 = arith.constant 0 : i32
    %68 = arith.addi %67, %c0_i32_55 : i32
    %69 = arith.index_cast %68 : i32 to index
    %c0_56 = arith.constant 0 : index
    %c0_57 = arith.constant 0 : index
    %70 = vector.load %arg4[%69, %c0_56, %c0_57] : memref<27x128x128xbf16, #tpu.memory_space<vmem>>, vector<1x128x128xbf16>
    %71 = vector.shape_cast %70 : vector<1x128x128xbf16> to vector<128x128xbf16>
    %cst_58 = arith.constant dense<0.000000e+00> : vector<24x128xf32>
    %72 = tpu.matmul %65, %71, %cst_58 {dimension_numbers = #tpu.dot_dimension_numbers<[1], [0], [0], [1], [0, 0, 1, 1], [], []>} : vector<24x128xbf16>, vector<128x128xbf16>, vector<24x128xf32> -> vector<24x128xf32>
    %73 = arith.addf %63, %72 : vector<24x128xf32>
    %c0_59 = arith.constant 0 : index
    %c0_60 = arith.constant 0 : index
    %c13 = arith.constant 13 : index
    %c0_61 = arith.constant 0 : index
    %74 = vector.load %arg3[%c0_59, %c0_60, %c13, %c0_61] : memref<1x1x38x128xbf16, #tpu.memory_space<vmem>>, vector<1x1x24x128xbf16>
    %75 = vector.shape_cast %74 : vector<1x1x24x128xbf16> to vector<24x128xbf16>
    %c9_i32_62 = arith.constant 9 : i32
    %76 = arith.muli %arg2, %c9_i32_62 : i32
    %c6_i32_63 = arith.constant 6 : i32
    %77 = arith.addi %76, %c6_i32_63 : i32
    %c1_i32_64 = arith.constant 1 : i32
    %78 = arith.addi %77, %c1_i32_64 : i32
    %79 = arith.index_cast %78 : i32 to index
    %c0_65 = arith.constant 0 : index
    %c0_66 = arith.constant 0 : index
    %80 = vector.load %arg4[%79, %c0_65, %c0_66] : memref<27x128x128xbf16, #tpu.memory_space<vmem>>, vector<1x128x128xbf16>
    %81 = vector.shape_cast %80 : vector<1x128x128xbf16> to vector<128x128xbf16>
    %cst_67 = arith.constant dense<0.000000e+00> : vector<24x128xf32>
    %82 = tpu.matmul %75, %81, %cst_67 {dimension_numbers = #tpu.dot_dimension_numbers<[1], [0], [0], [1], [0, 0, 1, 1], [], []>} : vector<24x128xbf16>, vector<128x128xbf16>, vector<24x128xf32> -> vector<24x128xf32>
    %83 = arith.addf %73, %82 : vector<24x128xf32>
    %c0_68 = arith.constant 0 : index
    %c0_69 = arith.constant 0 : index
    %c14 = arith.constant 14 : index
    %c0_70 = arith.constant 0 : index
    %84 = vector.load %arg3[%c0_68, %c0_69, %c14, %c0_70] : memref<1x1x38x128xbf16, #tpu.memory_space<vmem>>, vector<1x1x24x128xbf16>
    %85 = vector.shape_cast %84 : vector<1x1x24x128xbf16> to vector<24x128xbf16>
    %c9_i32_71 = arith.constant 9 : i32
    %86 = arith.muli %arg2, %c9_i32_71 : i32
    %c6_i32_72 = arith.constant 6 : i32
    %87 = arith.addi %86, %c6_i32_72 : i32
    %c2_i32_73 = arith.constant 2 : i32
    %88 = arith.addi %87, %c2_i32_73 : i32
    %89 = arith.index_cast %88 : i32 to index
    %c0_74 = arith.constant 0 : index
    %c0_75 = arith.constant 0 : index
    %90 = vector.load %arg4[%89, %c0_74, %c0_75] : memref<27x128x128xbf16, #tpu.memory_space<vmem>>, vector<1x128x128xbf16>
    %91 = vector.shape_cast %90 : vector<1x128x128xbf16> to vector<128x128xbf16>
    %cst_76 = arith.constant dense<0.000000e+00> : vector<24x128xf32>
    %92 = tpu.matmul %85, %91, %cst_76 {dimension_numbers = #tpu.dot_dimension_numbers<[1], [0], [0], [1], [0, 0, 1, 1], [], []>} : vector<24x128xbf16>, vector<128x128xbf16>, vector<24x128xf32> -> vector<24x128xf32>
    %93 = arith.addf %83, %92 : vector<24x128xf32>
    %c0_77 = arith.constant 0 : index
    %c0_78 = arith.constant 0 : index
    %94 = vector.load %arg8[%c0_77, %c0_78] : memref<24x128xf32, #tpu.memory_space<vmem>>, vector<24x128xf32>
    %95 = arith.addf %94, %93 : vector<24x128xf32>
    %c0_79 = arith.constant 0 : index
    %c0_80 = arith.constant 0 : index
    %96 = vector.load %arg8[%c0_79, %c0_80] : memref<24x128xf32, #tpu.memory_space<vmem>>, vector<24x128xf32>
    tpu.vector_store %arg8[%c0_79, %c0_80], %95 {strides = array<i32>} : memref<24x128xf32, #tpu.memory_space<vmem>>, vector<24x128xf32>,
    %c2_i32_81 = arith.constant 2 : i32
    %97 = arith.cmpi eq, %arg2, %c2_i32_81 : i32
    %98 = arith.extui %97 : i1 to i32
    %c0_i32_82 = arith.constant 0 : i32
    %99 = arith.cmpi ne, %98, %c0_i32_82 : i32
    scf.if %99 {
      %c0_83 = arith.constant 0 : index
      %c0_84 = arith.constant 0 : index
      %100 = vector.load %arg8[%c0_83, %c0_84] : memref<24x128xf32, #tpu.memory_space<vmem>>, vector<24x128xf32>
      %c0_85 = arith.constant 0 : index
      %c0_86 = arith.constant 0 : index
      %c0_87 = arith.constant 0 : index
      %c0_88 = arith.constant 0 : index
      %101 = vector.load %arg6[%c0_85, %c0_86, %c0_87, %c0_88] : memref<1x1x24x128xf32, #tpu.memory_space<vmem>>, vector<1x1x24x128xf32>
      %102 = vector.shape_cast %101 : vector<1x1x24x128xf32> to vector<24x128xf32>
      %103 = vector.shape_cast %100 : vector<24x128xf32> to vector<1x1x24x128xf32>
      tpu.vector_store %arg6[%c0_85, %c0_86, %c0_87, %c0_88], %103 {strides = array<i32>} : memref<1x1x24x128xf32, #tpu.memory_space<vmem>>, vector<1x1x24x128xf32>,
      %c0_89 = arith.constant 0 : index
      %c0_90 = arith.constant 0 : index
      %104 = vector.load %arg5[%c0_89, %c0_90] : memref<24x1xf32, #tpu.memory_space<vmem>>, vector<24x1xf32>
      %105 = vector.broadcast %104 : vector<24x1xf32> to vector<24x128xf32>
      %106 = arith.mulf %100, %105 : vector<24x128xf32>
      %cst_91 = arith.constant dense<0.000000e+00> : vector<128xf32>
      %107 = vector.multi_reduction <add>, %106, %cst_91 [0] : vector<24x128xf32> to vector<128xf32>
      %108 = vector.shape_cast %107 : vector<128xf32> to vector<1x128xf32>
      %109 = arith.mulf %100, %100 : vector<24x128xf32>
      %110 = vector.broadcast %104 : vector<24x1xf32> to vector<24x128xf32>
      %111 = arith.mulf %109, %110 : vector<24x128xf32>
      %cst_92 = arith.constant dense<0.000000e+00> : vector<128xf32>
      %112 = vector.multi_reduction <add>, %111, %cst_92 [0] : vector<24x128xf32> to vector<128xf32>
      %113 = vector.shape_cast %112 : vector<128xf32> to vector<1x128xf32>
      %114 = tpu.concatenate %108, %113 in 0 : vector<1x128xf32>, vector<1x128xf32> -> vector<2x128xf32>
      %c0_93 = arith.constant 0 : index
      %c0_94 = arith.constant 0 : index
      %c0_95 = arith.constant 0 : index
      %c0_96 = arith.constant 0 : index
      %115 = vector.load %arg7[%c0_93, %c0_94, %c0_95, %c0_96] : memref<1x1x2x128xf32, #tpu.memory_space<vmem>>, vector<1x1x2x128xf32>
      %116 = vector.shape_cast %115 : vector<1x1x2x128xf32> to vector<2x128xf32>
      %117 = vector.shape_cast %114 : vector<2x128xf32> to vector<1x1x2x128xf32>
      tpu.vector_store %arg7[%c0_93, %c0_94, %c0_95, %c0_96], %117 {strides = array<i32>} : memref<1x1x2x128xf32, #tpu.memory_space<vmem>>, vector<1x1x2x128xf32>,
    } else {
    }
    return
  }
  func.func @transform_0(%arg0: i32, %arg1: i32, %arg2: i32) -> (i32, i32, i32, i32) {
    %c1_i32 = arith.constant 1 : i32
    %0 = arith.muli %arg1, %c1_i32 : i32
    %1 = arith.addi %0, %arg2 : i32
    %c0_i32 = arith.constant 0 : i32
    %c0_i32_0 = arith.constant 0 : i32
    %c0_i32_1 = arith.constant 0 : i32
    return %arg0, %1, %c0_i32, %c0_i32_0 : i32, i32, i32, i32
  }
  func.func @transform_1(%arg0: i32, %arg1: i32, %arg2: i32) -> (i32, i32, i32) {
    %c0_i32 = arith.constant 0 : i32
    %c0_i32_0 = arith.constant 0 : i32
    %c0_i32_1 = arith.constant 0 : i32
    %c0_i32_2 = arith.constant 0 : i32
    return %c0_i32, %c0_i32_0, %c0_i32_1 : i32, i32, i32
  }
  func.func @transform_2(%arg0: i32, %arg1: i32, %arg2: i32) -> (i32, i32) {
    %c0_i32 = arith.constant 0 : i32
    %c0_i32_0 = arith.constant 0 : i32
    %c0_i32_1 = arith.constant 0 : i32
    return %c0_i32, %c0_i32_0 : i32, i32
  }
  func.func @transform_3(%arg0: i32, %arg1: i32, %arg2: i32) -> (i32, i32, i32, i32) {
    %c0_i32 = arith.constant 0 : i32
    %c0_i32_0 = arith.constant 0 : i32
    %c0_i32_1 = arith.constant 0 : i32
    return %arg0, %arg1, %c0_i32, %c0_i32_0 : i32, i32, i32, i32
  }
  func.func @transform_4(%arg0: i32, %arg1: i32, %arg2: i32) -> (i32, i32, i32, i32) {
    %c0_i32 = arith.constant 0 : i32
    %c0_i32_0 = arith.constant 0 : i32
    %c0_i32_1 = arith.constant 0 : i32
    return %arg0, %arg1, %c0_i32, %c0_i32_0 : i32, i32, i32, i32
  }
}

module attributes {stable_mosaic.version = 11 : i64} {
  func.func @_conv_tap_kernel(%arg0: i32, %arg1: i32, %arg2: i32, %arg3: memref<1x1x16x128xbf16, #tpu.memory_space<vmem>>, %arg4: memref<1x128x128xbf16, #tpu.memory_space<vmem>>, %arg5: memref<16x1xf32, #tpu.memory_space<vmem>>, %arg6: memref<1x1x16x128xf32, #tpu.memory_space<vmem>>, %arg7: memref<1x1x2x128xf32, #tpu.memory_space<vmem>>, %arg8: memref<16x128xf32, #tpu.memory_space<vmem>>) attributes {dimension_semantics = [#tpu.dimension_semantics<parallel>, #tpu.dimension_semantics<parallel>, #tpu.dimension_semantics<arbitrary>], iteration_bounds = array<i64: 2, 4, 1>, scalar_prefetch = 0 : i64, scratch_operands = 1 : i64, tpu.core_type = #tpu.core_type<tc>, window_params = [{transform_indices = @transform_0, window_bounds = array<i64: 1, 1, 16, 128>}, {pipeline_mode = #tpu.pipeline_mode<synchronous>, transform_indices = @transform_1, window_bounds = array<i64: 1, 128, 128>}, {pipeline_mode = #tpu.pipeline_mode<synchronous>, transform_indices = @transform_2, window_bounds = array<i64: 16, 1>}, {transform_indices = @transform_3, window_bounds = array<i64: 1, 1, 16, 128>}, {transform_indices = @transform_4, window_bounds = array<i64: 1, 1, 2, 128>}]} {
    %c0_i32 = arith.constant 0 : i32
    %0 = arith.cmpi eq, %arg2, %c0_i32 : i32
    %1 = arith.extui %0 : i1 to i32
    %c0_i32_0 = arith.constant 0 : i32
    %2 = arith.cmpi ne, %1, %c0_i32_0 : i32
    scf.if %2 {
      %cst_15 = arith.constant 0.000000e+00 : f32
      %20 = vector.broadcast %cst_15 : f32 to vector<16x128xf32>
      %c0_16 = arith.constant 0 : index
      %c0_17 = arith.constant 0 : index
      %21 = vector.load %arg8[%c0_16, %c0_17] : memref<16x128xf32, #tpu.memory_space<vmem>>, vector<16x128xf32>
      tpu.vector_store %arg8[%c0_16, %c0_17], %20 {strides = array<i32>} : memref<16x128xf32, #tpu.memory_space<vmem>>, vector<16x128xf32>,
    } else {
    }
    %cst = arith.constant 0.000000e+00 : f32
    %3 = vector.broadcast %cst : f32 to vector<16x128xf32>
    %c0 = arith.constant 0 : index
    %c0_1 = arith.constant 0 : index
    %c0_2 = arith.constant 0 : index
    %c0_3 = arith.constant 0 : index
    %4 = vector.load %arg3[%c0, %c0_1, %c0_2, %c0_3] : memref<1x1x16x128xbf16, #tpu.memory_space<vmem>>, vector<1x1x16x128xbf16>
    %5 = vector.shape_cast %4 : vector<1x1x16x128xbf16> to vector<16x128xbf16>
    %c1_i32 = arith.constant 1 : i32
    %6 = arith.muli %arg2, %c1_i32 : i32
    %c0_i32_4 = arith.constant 0 : i32
    %7 = arith.addi %6, %c0_i32_4 : i32
    %c0_i32_5 = arith.constant 0 : i32
    %8 = arith.addi %7, %c0_i32_5 : i32
    %9 = arith.index_cast %8 : i32 to index
    %c0_6 = arith.constant 0 : index
    %c0_7 = arith.constant 0 : index
    %10 = vector.load %arg4[%9, %c0_6, %c0_7] : memref<1x128x128xbf16, #tpu.memory_space<vmem>>, vector<1x128x128xbf16>
    %11 = vector.shape_cast %10 : vector<1x128x128xbf16> to vector<128x128xbf16>
    %cst_8 = arith.constant dense<0.000000e+00> : vector<16x128xf32>
    %12 = tpu.matmul %5, %11, %cst_8 {dimension_numbers = #tpu.dot_dimension_numbers<[1], [0], [0], [1], [0, 0, 1, 1], [], []>} : vector<16x128xbf16>, vector<128x128xbf16>, vector<16x128xf32> -> vector<16x128xf32>
    %13 = arith.addf %3, %12 : vector<16x128xf32>
    %c0_9 = arith.constant 0 : index
    %c0_10 = arith.constant 0 : index
    %14 = vector.load %arg8[%c0_9, %c0_10] : memref<16x128xf32, #tpu.memory_space<vmem>>, vector<16x128xf32>
    %15 = arith.addf %14, %13 : vector<16x128xf32>
    %c0_11 = arith.constant 0 : index
    %c0_12 = arith.constant 0 : index
    %16 = vector.load %arg8[%c0_11, %c0_12] : memref<16x128xf32, #tpu.memory_space<vmem>>, vector<16x128xf32>
    tpu.vector_store %arg8[%c0_11, %c0_12], %15 {strides = array<i32>} : memref<16x128xf32, #tpu.memory_space<vmem>>, vector<16x128xf32>,
    %c0_i32_13 = arith.constant 0 : i32
    %17 = arith.cmpi eq, %arg2, %c0_i32_13 : i32
    %18 = arith.extui %17 : i1 to i32
    %c0_i32_14 = arith.constant 0 : i32
    %19 = arith.cmpi ne, %18, %c0_i32_14 : i32
    scf.if %19 {
      %c0_15 = arith.constant 0 : index
      %c0_16 = arith.constant 0 : index
      %20 = vector.load %arg8[%c0_15, %c0_16] : memref<16x128xf32, #tpu.memory_space<vmem>>, vector<16x128xf32>
      %c0_17 = arith.constant 0 : index
      %c0_18 = arith.constant 0 : index
      %c0_19 = arith.constant 0 : index
      %c0_20 = arith.constant 0 : index
      %21 = vector.load %arg6[%c0_17, %c0_18, %c0_19, %c0_20] : memref<1x1x16x128xf32, #tpu.memory_space<vmem>>, vector<1x1x16x128xf32>
      %22 = vector.shape_cast %21 : vector<1x1x16x128xf32> to vector<16x128xf32>
      %23 = vector.shape_cast %20 : vector<16x128xf32> to vector<1x1x16x128xf32>
      tpu.vector_store %arg6[%c0_17, %c0_18, %c0_19, %c0_20], %23 {strides = array<i32>} : memref<1x1x16x128xf32, #tpu.memory_space<vmem>>, vector<1x1x16x128xf32>,
      %c0_21 = arith.constant 0 : index
      %c0_22 = arith.constant 0 : index
      %24 = vector.load %arg5[%c0_21, %c0_22] : memref<16x1xf32, #tpu.memory_space<vmem>>, vector<16x1xf32>
      %25 = vector.broadcast %24 : vector<16x1xf32> to vector<16x128xf32>
      %26 = arith.mulf %20, %25 : vector<16x128xf32>
      %cst_23 = arith.constant dense<0.000000e+00> : vector<128xf32>
      %27 = vector.multi_reduction <add>, %26, %cst_23 [0] : vector<16x128xf32> to vector<128xf32>
      %28 = vector.shape_cast %27 : vector<128xf32> to vector<1x128xf32>
      %29 = arith.mulf %20, %20 : vector<16x128xf32>
      %30 = vector.broadcast %24 : vector<16x1xf32> to vector<16x128xf32>
      %31 = arith.mulf %29, %30 : vector<16x128xf32>
      %cst_24 = arith.constant dense<0.000000e+00> : vector<128xf32>
      %32 = vector.multi_reduction <add>, %31, %cst_24 [0] : vector<16x128xf32> to vector<128xf32>
      %33 = vector.shape_cast %32 : vector<128xf32> to vector<1x128xf32>
      %34 = tpu.concatenate %28, %33 in 0 : vector<1x128xf32>, vector<1x128xf32> -> vector<2x128xf32>
      %c0_25 = arith.constant 0 : index
      %c0_26 = arith.constant 0 : index
      %c0_27 = arith.constant 0 : index
      %c0_28 = arith.constant 0 : index
      %35 = vector.load %arg7[%c0_25, %c0_26, %c0_27, %c0_28] : memref<1x1x2x128xf32, #tpu.memory_space<vmem>>, vector<1x1x2x128xf32>
      %36 = vector.shape_cast %35 : vector<1x1x2x128xf32> to vector<2x128xf32>
      %37 = vector.shape_cast %34 : vector<2x128xf32> to vector<1x1x2x128xf32>
      tpu.vector_store %arg7[%c0_25, %c0_26, %c0_27, %c0_28], %37 {strides = array<i32>} : memref<1x1x2x128xf32, #tpu.memory_space<vmem>>, vector<1x1x2x128xf32>,
    } else {
    }
    return
  }
  func.func @transform_0(%arg0: i32, %arg1: i32, %arg2: i32) -> (i32, i32, i32, i32) {
    %c1_i32 = arith.constant 1 : i32
    %0 = arith.muli %arg1, %c1_i32 : i32
    %1 = arith.addi %0, %arg2 : i32
    %c0_i32 = arith.constant 0 : i32
    %c0_i32_0 = arith.constant 0 : i32
    %c0_i32_1 = arith.constant 0 : i32
    return %arg0, %1, %c0_i32, %c0_i32_0 : i32, i32, i32, i32
  }
  func.func @transform_1(%arg0: i32, %arg1: i32, %arg2: i32) -> (i32, i32, i32) {
    %c0_i32 = arith.constant 0 : i32
    %c0_i32_0 = arith.constant 0 : i32
    %c0_i32_1 = arith.constant 0 : i32
    %c0_i32_2 = arith.constant 0 : i32
    return %c0_i32, %c0_i32_0, %c0_i32_1 : i32, i32, i32
  }
  func.func @transform_2(%arg0: i32, %arg1: i32, %arg2: i32) -> (i32, i32) {
    %c0_i32 = arith.constant 0 : i32
    %c0_i32_0 = arith.constant 0 : i32
    %c0_i32_1 = arith.constant 0 : i32
    return %c0_i32, %c0_i32_0 : i32, i32
  }
  func.func @transform_3(%arg0: i32, %arg1: i32, %arg2: i32) -> (i32, i32, i32, i32) {
    %c0_i32 = arith.constant 0 : i32
    %c0_i32_0 = arith.constant 0 : i32
    %c0_i32_1 = arith.constant 0 : i32
    return %arg0, %arg1, %c0_i32, %c0_i32_0 : i32, i32, i32, i32
  }
  func.func @transform_4(%arg0: i32, %arg1: i32, %arg2: i32) -> (i32, i32, i32, i32) {
    %c0_i32 = arith.constant 0 : i32
    %c0_i32_0 = arith.constant 0 : i32
    %c0_i32_1 = arith.constant 0 : i32
    return %arg0, %arg1, %c0_i32, %c0_i32_0 : i32, i32, i32, i32
  }
}

module attributes {stable_mosaic.version = 11 : i64} {
  func.func @_affine_relu_add_relu_kernel(%arg0: i32, %arg1: memref<64x128xf32, #tpu.memory_space<vmem>>, %arg2: memref<1x128xf32, #tpu.memory_space<vmem>>, %arg3: memref<1x128xf32, #tpu.memory_space<vmem>>, %arg4: memref<64x128xf32, #tpu.memory_space<vmem>>, %arg5: memref<1x128xf32, #tpu.memory_space<vmem>>, %arg6: memref<1x128xf32, #tpu.memory_space<vmem>>, %arg7: memref<64x128xf32, #tpu.memory_space<vmem>>) attributes {dimension_semantics = [#tpu.dimension_semantics<parallel>], iteration_bounds = array<i64: 2>, scalar_prefetch = 0 : i64, scratch_operands = 0 : i64, tpu.core_type = #tpu.core_type<tc>, window_params = [{transform_indices = @transform_0, window_bounds = array<i64: 64, 128>}, {pipeline_mode = #tpu.pipeline_mode<synchronous>, transform_indices = @transform_1, window_bounds = array<i64: 1, 128>}, {pipeline_mode = #tpu.pipeline_mode<synchronous>, transform_indices = @transform_2, window_bounds = array<i64: 1, 128>}, {transform_indices = @transform_3, window_bounds = array<i64: 64, 128>}, {pipeline_mode = #tpu.pipeline_mode<synchronous>, transform_indices = @transform_4, window_bounds = array<i64: 1, 128>}, {pipeline_mode = #tpu.pipeline_mode<synchronous>, transform_indices = @transform_5, window_bounds = array<i64: 1, 128>}, {transform_indices = @transform_6, window_bounds = array<i64: 64, 128>}]} {
    %c0 = arith.constant 0 : index
    %c0_0 = arith.constant 0 : index
    %0 = vector.load %arg1[%c0, %c0_0] : memref<64x128xf32, #tpu.memory_space<vmem>>, vector<64x128xf32>
    %c0_1 = arith.constant 0 : index
    %c0_2 = arith.constant 0 : index
    %1 = vector.load %arg2[%c0_1, %c0_2] : memref<1x128xf32, #tpu.memory_space<vmem>>, vector<1x128xf32>
    %2 = vector.broadcast %1 : vector<1x128xf32> to vector<64x128xf32>
    %3 = arith.mulf %0, %2 : vector<64x128xf32>
    %c0_3 = arith.constant 0 : index
    %c0_4 = arith.constant 0 : index
    %4 = vector.load %arg3[%c0_3, %c0_4] : memref<1x128xf32, #tpu.memory_space<vmem>>, vector<1x128xf32>
    %5 = vector.broadcast %4 : vector<1x128xf32> to vector<64x128xf32>
    %6 = arith.addf %3, %5 : vector<64x128xf32>
    %cst = arith.constant 0.000000e+00 : f32
    %7 = vector.broadcast %cst : f32 to vector<64x128xf32>
    %8 = arith.maximumf %6, %7 : vector<64x128xf32>
    %c0_5 = arith.constant 0 : index
    %c0_6 = arith.constant 0 : index
    %9 = vector.load %arg4[%c0_5, %c0_6] : memref<64x128xf32, #tpu.memory_space<vmem>>, vector<64x128xf32>
    %c0_7 = arith.constant 0 : index
    %c0_8 = arith.constant 0 : index
    %10 = vector.load %arg5[%c0_7, %c0_8] : memref<1x128xf32, #tpu.memory_space<vmem>>, vector<1x128xf32>
    %11 = vector.broadcast %10 : vector<1x128xf32> to vector<64x128xf32>
    %12 = arith.mulf %9, %11 : vector<64x128xf32>
    %c0_9 = arith.constant 0 : index
    %c0_10 = arith.constant 0 : index
    %13 = vector.load %arg6[%c0_9, %c0_10] : memref<1x128xf32, #tpu.memory_space<vmem>>, vector<1x128xf32>
    %14 = vector.broadcast %13 : vector<1x128xf32> to vector<64x128xf32>
    %15 = arith.addf %12, %14 : vector<64x128xf32>
    %16 = arith.addf %8, %15 : vector<64x128xf32>
    %cst_11 = arith.constant 0.000000e+00 : f32
    %17 = vector.broadcast %cst_11 : f32 to vector<64x128xf32>
    %18 = arith.maximumf %16, %17 : vector<64x128xf32>
    %c0_12 = arith.constant 0 : index
    %c0_13 = arith.constant 0 : index
    %19 = vector.load %arg7[%c0_12, %c0_13] : memref<64x128xf32, #tpu.memory_space<vmem>>, vector<64x128xf32>
    tpu.vector_store %arg7[%c0_12, %c0_13], %18 {strides = array<i32>} : memref<64x128xf32, #tpu.memory_space<vmem>>, vector<64x128xf32>,
    return
  }
  func.func @transform_0(%arg0: i32) -> (i32, i32) {
    %c0_i32 = arith.constant 0 : i32
    %c0_i32_0 = arith.constant 0 : i32
    return %arg0, %c0_i32 : i32, i32
  }
  func.func @transform_1(%arg0: i32) -> (i32, i32) {
    %c0_i32 = arith.constant 0 : i32
    %c0_i32_0 = arith.constant 0 : i32
    %c0_i32_1 = arith.constant 0 : i32
    return %c0_i32, %c0_i32_0 : i32, i32
  }
  func.func @transform_2(%arg0: i32) -> (i32, i32) {
    %c0_i32 = arith.constant 0 : i32
    %c0_i32_0 = arith.constant 0 : i32
    %c0_i32_1 = arith.constant 0 : i32
    return %c0_i32, %c0_i32_0 : i32, i32
  }
  func.func @transform_3(%arg0: i32) -> (i32, i32) {
    %c0_i32 = arith.constant 0 : i32
    %c0_i32_0 = arith.constant 0 : i32
    return %arg0, %c0_i32 : i32, i32
  }
  func.func @transform_4(%arg0: i32) -> (i32, i32) {
    %c0_i32 = arith.constant 0 : i32
    %c0_i32_0 = arith.constant 0 : i32
    %c0_i32_1 = arith.constant 0 : i32
    return %c0_i32, %c0_i32_0 : i32, i32
  }
  func.func @transform_5(%arg0: i32) -> (i32, i32) {
    %c0_i32 = arith.constant 0 : i32
    %c0_i32_0 = arith.constant 0 : i32
    %c0_i32_1 = arith.constant 0 : i32
    return %c0_i32, %c0_i32_0 : i32, i32
  }
  func.func @transform_6(%arg0: i32) -> (i32, i32) {
    %c0_i32 = arith.constant 0 : i32
    %c0_i32_0 = arith.constant 0 : i32
    return %arg0, %c0_i32 : i32, i32
  }
}

</mosaic_0001>

<llo_original>
// kernel: resblock3d_forward.6
$region0: #{resblock3d_forward.6}
  #allocation0 [shape = 'u32[]', space=smem, size = 0x4, offset = 0x4, fixed_abs, tag = 'smem constant byte address 0x4 - core index']
  #allocation1 [shape = 'u32[144,128]{1,0:T(1,128)}', space=vmem, size = 0x12000, scoped, tag = 'internal scratch']
  %s0 = inlined_call_operand.vmem [shape: f32[128,128], index: 0, kind: input, shape index: {}]
  %s1 = inlined_call_operand.vmem [shape: f32[1,128], index: 1, kind: input, shape index: {}]
  %s2 = inlined_call_operand.vmem [shape: f32[1,128], index: 2, kind: input, shape index: {}]
  %s3 = inlined_call_operand.vmem [shape: f32[128,128], index: 3, kind: output, shape index: {}]
  %s4 = sld [smem:[#allocation0]]
  $region45: #{resblock3d_forward.6} parent=0
    _
  %s6 = ssub.s32 1, %s4
  %s7 = scalar_select 0, %s6, %s4
  loop: start=0, step=1, limit=4
  $region2: #{resblock3d_forward.6} parent=0 // loop_pre_header
    _
  $region3: #{resblock3d_forward.6} parent=0 // loop_header
    %s9 = sphi 0, %s13
    %p10 = scmp.ge.s32.totalorder %s9, 4
    %s19 = sphi 0, %s21
    %s22 = sphi 0, %s19
    %s23 = sphi 0, %s22
    %s39 = sphi 0, %s23
    %s43 = sphi 0, %s43
    %s45 = sphi 0, %s43
    %s46 = sphi 0, %s45
    %s60 = sphi 0, %s46
    %s64 = sphi 0, %s64
    %s66 = sphi 0, %s64
    %s67 = sphi 0, %s66
    %s81 = sphi 0, %s67
    %s87 = sphi 0, %s89
    %s90 = sphi 0, %s87
    %s91 = sphi 0, %s90
    %s107 = sphi 0, %s91
  $region4: #{resblock3d_forward.6} parent=0 // loop_header_branch
    %12 = sbr.rel (%p10) target = $region8
  $region5: #{resblock3d_forward.6} parent=0 // loop_body
    %s14 = ssub.s32 %s9, 1
    %s15 = ssub.s32 %s9, 2
    %s16 = sadd.s32 %s9, 1
    %s17 = ssub.s32 %s9, %s16
    %p18 = scmp.eq.s32.totalorder %s17, 0
    %s20 = sadd.s32 %s19, 1
    %s21 = scalar_select %p18, %s19, %s20
    %p24 = pneg %p18
    %p25 = scmp.eq.s32.totalorder %s9, 1
    %p26 = por %p24, %p25
    %p27 = scmp.ne.s32.totalorder %s19, %s22
    %p28 = scmp.eq.s32.totalorder %s9, 0
    %p29 = por %p27, %p28
    %p30 = scmp.ne.s32.totalorder %s19, %s22
    %p31 = scmp.eq.s32.totalorder %s14, 1
    %p32 = por %p30, %p31
    %p33 = scmp.ne.s32.totalorder %s22, %s23
    %p34 = scmp.eq.s32.totalorder %s14, 0
    %p35 = por %p33, %p34
    %p36 = scmp.ne.s32.totalorder %s22, %s23
    %p37 = scmp.eq.s32.totalorder %s15, 1
    %p38 = por %p36, %p37
    %p40 = scmp.ne.s32.totalorder %s23, %s39
    %p41 = scmp.eq.s32.totalorder %s15, 0
    %p42 = por %p40, %p41
    %s44 = sadd.s32 %s43, 1
    %p47 = scmp.eq.s32.totalorder %s9, 1
    %p48 = scmp.ne.s32.totalorder %s43, %s45
    %p49 = scmp.eq.s32.totalorder %s9, 0
    %p50 = por %p48, %p49
    %p51 = scmp.ne.s32.totalorder %s43, %s45
    %p52 = scmp.eq.s32.totalorder %s14, 1
    %p53 = por %p51, %p52
    %p54 = scmp.ne.s32.totalorder %s45, %s46
    %p55 = scmp.eq.s32.totalorder %s14, 0
    %p56 = por %p54, %p55
    %p57 = scmp.ne.s32.totalorder %s45, %s46
    %p58 = scmp.eq.s32.totalorder %s15, 1
    %p59 = por %p57, %p58
    %p61 = scmp.ne.s32.totalorder %s46, %s60
    %p62 = scmp.eq.s32.totalorder %s15, 0
    %p63 = por %p61, %p62
    %s65 = sadd.s32 %s64, 1
    %p68 = scmp.eq.s32.totalorder %s9, 1
    %p69 = scmp.ne.s32.totalorder %s64, %s66
    %p70 = scmp.eq.s32.totalorder %s9, 0
    %p71 = por %p69, %p70
    %p72 = scmp.ne.s32.totalorder %s64, %s66
    %p73 = scmp.eq.s32.totalorder %s14, 1
    %p74 = por %p72, %p73
    %p75 = scmp.ne.s32.totalorder %s66, %s67
    %p76 = scmp.eq.s32.totalorder %s14, 0
    %p77 = por %p75, %p76
    %p78 = scmp.ne.s32.totalorder %s66, %s67
    %p79 = scmp.eq.s32.totalorder %s15, 1
    %p80 = por %p78, %p79
    %p82 = scmp.ne.s32.totalorder %s67, %s81
    %p83 = scmp.eq.s32.totalorder %s15, 0
    %p84 = por %p82, %p83
    %s85 = ssub.s32 %s9, %s16
    %p86 = scmp.eq.s32.totalorder %s85, 0
    %s88 = sadd.s32 %s87, 1
    %s89 = scalar_select %p86, %s87, %s88
    %p92 = pneg %p86
    %p93 = scmp.eq.s32.totalorder %s9, 1
    %p94 = por %p92, %p93
    %p95 = scmp.ne.s32.totalorder %s87, %s90
    %p96 = scmp.eq.s32.totalorder %s9, 0
    %p97 = por %p95, %p96
    %p98 = scmp.ne.s32.totalorder %s87, %s90
    %p99 = scmp.eq.s32.totalorder %s14, 1
    %p100 = por %p98, %p99
    %p101 = scmp.ne.s32.totalorder %s90, %s91
    %p102 = scmp.eq.s32.totalorder %s14, 0
    %p103 = por %p101, %p102
    %p104 = scmp.ne.s32.totalorder %s90, %s91
    %p105 = scmp.eq.s32.totalorder %s15, 1
    %p106 = por %p104, %p105
    %p108 = scmp.ne.s32.totalorder %s91, %s107
    %p109 = scmp.eq.s32.totalorder %s15, 0
    %p110 = por %p108, %p109
    %p111 = scmp.le.s32.totalorder 1, %s9
    %p112 = scmp.lt.s32.totalorder %s9, 3
    %p113 = pnand %p111, %p112
    %p114 = pneg %p113
    // Predicated region
    $region9: #{resblock3d_forward.6} parent=5 // pred_check
      _
    $region10: #{resblock3d_forward.6} parent=5 // pred_check_branch
      %116 = sbr.rel (%p113) target = $region12
    $region11: #{resblock3d_forward.6} parent=5 // pred_region
      %s117 = ssub.s32 %s9, 1
      // Predicated region
      $region13: #{resblock3d_forward.6} parent=11 // pred_check
        %p118 = pneg %p56
      $region14: #{resblock3d_forward.6} parent=11 // pred_check_branch
        %120 = sbr.rel (%p118) target = $region16
      $region15: #{resblock3d_forward.6} parent=11 // pred_region
        _
      $region16: #{resblock3d_forward.6} parent=11 // pred_fallthru
        _
      // Predicated region
      $region17: #{resblock3d_forward.6} parent=11 // pred_check
        %p121 = pneg %p77
      $region18: #{resblock3d_forward.6} parent=11 // pred_check_branch
        %123 = sbr.rel (%p121) target = $region20
      $region19: #{resblock3d_forward.6} parent=11 // pred_region
        _
      $region20: #{resblock3d_forward.6} parent=11 // pred_fallthru
        _
    $region12: #{resblock3d_forward.6} parent=5 // pred_fallthru
      _
    %p124 = scmp.lt.s32.totalorder %s9, 2
    // Predicated region
    $region21: #{resblock3d_forward.6} parent=5 // pred_check
      %p125 = pneg %p124
    $region22: #{resblock3d_forward.6} parent=5 // pred_check_branch
      %127 = sbr.rel (%p125) target = $region24
    $region23: #{resblock3d_forward.6} parent=5 // pred_region
      // Predicated region
      $region25: #{resblock3d_forward.6} parent=23 // pred_check
        %p128 = pneg %p29
      $region26: #{resblock3d_forward.6} parent=23 // pred_check_branch
        %130 = sbr.rel (%p128) target = $region28
      $region27: #{resblock3d_forward.6} parent=23 // pred_region
        %s131 = smul.u32 8, %s9
        %p132 = scmp.lt.s32.totalorder %s131, 15
        %s133 = scalar_select %p132, %s131, 15
        %s134 = smul.addr %s133, 8
        %s135 = scalar_lea.vmem %s0, %s134
        %s136 = smul.u32 8, %s9
      $region28: #{resblock3d_forward.6} parent=23 // pred_fallthru
        _
    $region24: #{resblock3d_forward.6} parent=5 // pred_fallthru
      _
    %p137 = scmp.le.s32.totalorder 1, %s9
    %p138 = scmp.lt.s32.totalorder %s9, 3
    %p139 = pnand %p137, %p138
    %p140 = pneg %p139
    // Predicated region
    $region29: #{resblock3d_forward.6} parent=5 // pred_check
      _
    $region30: #{resblock3d_forward.6} parent=5 // pred_check_branch
      %142 = sbr.rel (%p139) target = $region32
    $region31: #{resblock3d_forward.6} parent=5 // pred_region
      %s143 = ssub.s32 %s9, 1
      %s144 = smul.u32 8, %s14
      %p145 = scmp.lt.s32.totalorder %s144, 15
      %s146 = scalar_select %p145, %s144, 15
      %s147 = smul.addr %s146, 8
      %s148 = scalar_lea.vmem %s0, %s147
      %p149 = pneg %p35
      %p150 = pneg %p32
      %p151 = pneg %p56
      %p152 = pneg %p53
      %p153 = pneg %p77
      %p154 = pneg %p74
      %p155 = pneg %p103
      %p156 = pneg %p100
      %s157 = smul.u32 8, %s14
      %p158 = scmp.lt.s32.totalorder %s157, 15
      %s159 = scalar_select %p158, %s157, 15
      %s160 = smul.addr %s159, 8
      %s161 = scalar_lea.vmem %s3, %s160
      %s162 = smul.u32 8, %s14
      %p163 = scmp.lt.s32.totalorder %s162, 15
      %s164 = scalar_select %p163, %s162, 15
      %s165 = smul.addr %s164, 8
      %s166 = scalar_lea.vmem %s0, %s165
      %s167 = smul.u32 8, %s14
      %s168 = smul.u32 8, %s14
      %p169 = scmp.lt.s32.totalorder %s168, 15
      %s170 = scalar_select %p169, %s168, 15
      %s171 = smul.addr %s170, 8
      %s172 = scalar_lea.vmem %s3, %s171
      %s173 = smul.u32 8, %s14
      %v174 = vld [vmem:[%s166] sm:$0xff]
      %v175 = vld [vmem:[%s166 + $0x8] sm:$0xff]
      %v176 = vld [vmem:[%s166 + $0x10] sm:$0xff]
      %v177 = vld [vmem:[%s166 + $0x18] sm:$0xff]
      %v178 = vld [vmem:[%s166 + $0x20] sm:$0xff]
      %v179 = vld [vmem:[%s166 + $0x28] sm:$0xff]
      %v180 = vld [vmem:[%s166 + $0x30] sm:$0xff]
      %v181 = vld [vmem:[%s166 + $0x38] sm:$0xff]
      %v182 = vld [vmem:[%s1] sm:$0x1]
      %v184 = vlaneseq
      %v185 = vshrl.u32 %v184, 7
      %v186 = vsub.s32 0, %v185
      %v187 = vrot.slane %v182, %v186
      %v189 = vmul.f32 %v174, %v187
      %v190 = vmul.f32 %v175, %v187
      %v191 = vmul.f32 %v176, %v187
      %v192 = vmul.f32 %v177, %v187
      %v193 = vmul.f32 %v178, %v187
      %v194 = vmul.f32 %v179, %v187
      %v195 = vmul.f32 %v180, %v187
      %v196 = vmul.f32 %v181, %v187
      %v197 = vld [vmem:[%s2] sm:$0x1]
      %v199 = vlaneseq
      %v200 = vshrl.u32 %v199, 7
      %v201 = vsub.s32 0, %v200
      %v202 = vrot.slane %v197, %v201
      %v204 = vadd.f32 %v189, %v202
      %v205 = vadd.f32 %v190, %v202
      %v206 = vadd.f32 %v191, %v202
      %v207 = vadd.f32 %v192, %v202
      %v208 = vadd.f32 %v193, %v202
      %v209 = vadd.f32 %v194, %v202
      %v210 = vadd.f32 %v195, %v202
      %v211 = vadd.f32 %v196, %v202
      %v212 = vmax.f32 %v204, 0.0
      %v213 = vmax.f32 %v205, 0.0
      %v214 = vmax.f32 %v206, 0.0
      %v215 = vmax.f32 %v207, 0.0
      %v216 = vmax.f32 %v208, 0.0
      %v217 = vmax.f32 %v209, 0.0
      %v218 = vmax.f32 %v210, 0.0
      %v219 = vmax.f32 %v211, 0.0
      %220 = vst [vmem:[%s172] sm:$0xff] %v212
      %221 = vst [vmem:[%s172 + $0x8] sm:$0xff] %v213
      %222 = vst [vmem:[%s172 + $0x10] sm:$0xff] %v214
      %223 = vst [vmem:[%s172 + $0x18] sm:$0xff] %v215
      %224 = vst [vmem:[%s172 + $0x20] sm:$0xff] %v216
      %225 = vst [vmem:[%s172 + $0x28] sm:$0xff] %v217
      %226 = vst [vmem:[%s172 + $0x30] sm:$0xff] %v218
      %227 = vst [vmem:[%s172 + $0x38] sm:$0xff] %v219
      %s228 = smul.u32 8, %s14
      %p229 = scmp.lt.s32.totalorder %s228, 15
      %s230 = scalar_select %p229, %s228, 15
      %s231 = smul.addr %s230, 8
      %s232 = scalar_lea.vmem %s3, %s231
      // Predicated region
      $region33: #{resblock3d_forward.6} parent=31 // pred_check
        %p233 = pneg %p100
      $region34: #{resblock3d_forward.6} parent=31 // pred_check_branch
        %235 = sbr.rel (%p233) target = $region36
      $region35: #{resblock3d_forward.6} parent=31 // pred_region
        %s236 = smul.u32 8, %s14
      $region36: #{resblock3d_forward.6} parent=31 // pred_fallthru
        _
    $region32: #{resblock3d_forward.6} parent=5 // pred_fallthru
      _
    %p237 = scmp.le.s32.totalorder 2, %s9
    // Predicated region
    $region37: #{resblock3d_forward.6} parent=5 // pred_check
      %p238 = pneg %p237
    $region38: #{resblock3d_forward.6} parent=5 // pred_check_branch
      %240 = sbr.rel (%p238) target = $region40
    $region39: #{resblock3d_forward.6} parent=5 // pred_region
      %s241 = ssub.s32 %s9, 2
      // Predicated region
      $region41: #{resblock3d_forward.6} parent=39 // pred_check
        %p242 = pneg %p106
      $region42: #{resblock3d_forward.6} parent=39 // pred_check_branch
        %244 = sbr.rel (%p242) target = $region44
      $region43: #{resblock3d_forward.6} parent=39 // pred_region
        %s245 = smul.u32 8, %s15
        %p246 = scmp.lt.s32.totalorder %s245, 15
        %s247 = scalar_select %p246, %s245, 15
        %s248 = smul.addr %s247, 8
        %s249 = scalar_lea.vmem %s3, %s248
      $region44: #{resblock3d_forward.6} parent=39 // pred_fallthru
        _
    $region40: #{resblock3d_forward.6} parent=5 // pred_fallthru
      _
  $region6: #{resblock3d_forward.6} parent=0 // loop_footer
    %s13 = sadd.s32 1, %s9
  $region7: #{resblock3d_forward.6} parent=0 // loop_footer_branch
    %8 = sbr.rel target = $region3
  $region8: #{resblock3d_forward.6} parent=0 // loop_exit
    _

// kernel: resblock3d_forward.5
$region0: #{resblock3d_forward.5}
  #allocation0 [shape = 'u32[]', space=smem, size = 0x4, offset = 0x4, fixed_abs, tag = 'smem constant byte address 0x4 - core index']
  #allocation1 [shape = 'u32[144,128]{1,0:T(1,128)}', space=vmem, size = 0x12000, scoped, tag = 'internal scratch']
  #allocation2 [shape = 'f32[32,128]{1,0:T(8,128)}', space=vmem, size = 0x4000, scoped, tag = 'scratch operand']
  %s0 = inlined_call_operand.vmem [shape: bf16[2,10,120,128], index: 0, kind: input, shape index: {}]
  %s1 = inlined_call_operand.vmem [shape: bf16[27,128,128], index: 1, kind: input, shape index: {}]
  %s2 = inlined_call_operand.vmem [shape: f32[32,1], index: 2, kind: input, shape index: {}]
  %s3 = inlined_call_operand.vmem [shape: f32[2,4,32,128], index: 3, kind: output, shape index: {0}]
  %s4 = inlined_call_operand.vmem [shape: f32[2,4,2,128], index: 4, kind: output, shape index: {1}]
  %5 = xla_tuple %s3, %s4
  %s6 = sld [smem:[#allocation0]]
  $region61: #{resblock3d_forward.5} parent=0
    _
  %s8 = ssub.s32 1, %s6
  %s9 = scalar_select 0, %s8, %s6
  loop: start=0, step=1, limit=26
  $region2: #{resblock3d_forward.5} parent=0 // loop_pre_header
    _
  $region3: #{resblock3d_forward.5} parent=0 // loop_header
    %s11 = sphi 0, %s15
    %p12 = scmp.ge.s32.totalorder %s11, 26
    %s18 = sphi 0, %s37
    %s19 = sphi 0, %s33
    %s20 = sphi 0, %s29
    %s21 = sphi 0, %s18
    %s22 = sphi 0, %s19
    %s23 = sphi 0, %s20
    %s24 = sphi 0, %s21
    %s25 = sphi 0, %s22
    %s26 = sphi 0, %s23
    %s46 = sphi 0, %s48
    %s49 = sphi 0, %s46
    %s50 = sphi 0, %s49
    %s66 = sphi 0, %s50
    %s70 = sphi 0, %s70
    %s72 = sphi 0, %s70
    %s73 = sphi 0, %s72
    %s87 = sphi 0, %s73
    %s91 = sphi 0, %s91
    %s93 = sphi 0, %s91
    %s94 = sphi 0, %s93
    %s108 = sphi 0, %s94
    %s116 = sphi 0, %s118
    %s119 = sphi 0, %s116
    %s120 = sphi 0, %s119
    %s136 = sphi 0, %s120
    %s144 = sphi 0, %s146
    %s147 = sphi 0, %s144
    %s148 = sphi 0, %s147
    %s164 = sphi 0, %s148
  $region4: #{resblock3d_forward.5} parent=0 // loop_header_branch
    %14 = sbr.rel (%p12) target = $region8
  $region5: #{resblock3d_forward.5} parent=0 // loop_body
    %s16 = ssub.s32 %s11, 1
    %s17 = ssub.s32 %s11, 2
    %s27 = sadd.s32 1, %s20
    %p28 = scmp.ge.s32.totalorder %s27, 3
    %s29 = scalar_select %p28, 0, %s27
    %s30 = sadd.s32 1, %s19
    %s31 = scalar_select %p28, %s30, %s19
    %p32 = scmp.ge.s32.totalorder %s31, 4
    %s33 = scalar_select %p32, 0, %s31
    %s34 = sadd.s32 1, %s18
    %s35 = scalar_select %p32, %s34, %s18
    %p36 = scmp.ge.s32.totalorder %s35, 2
    %s37 = scalar_select %p36, 0, %s35
    %s38 = smul.u32 %s19, 2
    %s39 = sadd.s32 %s38, %s20
    %s40 = smul.u32 %s33, 2
    %s41 = sadd.s32 %s40, %s29
    %s42 = ssub.s32 %s18, %s37
    %s43 = ssub.s32 %s39, %s41
    %s44 = sor.u32 %s42, %s43
    %p45 = scmp.eq.s32.totalorder %s44, 0
    %s47 = sadd.s32 %s46, 1
    %s48 = scalar_select %p45, %s46, %s47
    %p51 = pneg %p45
    %p52 = scmp.eq.s32.totalorder %s11, 23
    %p53 = por %p51, %p52
    %p54 = scmp.ne.s32.totalorder %s46, %s49
    %p55 = scmp.eq.s32.totalorder %s11, 0
    %p56 = por %p54, %p55
    %p57 = scmp.ne.s32.totalorder %s46, %s49
    %p58 = scmp.eq.s32.totalorder %s16, 23
    %p59 = por %p57, %p58
    %p60 = scmp.ne.s32.totalorder %s49, %s50
    %p61 = scmp.eq.s32.totalorder %s16, 0
    %p62 = por %p60, %p61
    %p63 = scmp.ne.s32.totalorder %s49, %s50
    %p64 = scmp.eq.s32.totalorder %s17, 23
    %p65 = por %p63, %p64
    %p67 = scmp.ne.s32.totalorder %s50, %s66
    %p68 = scmp.eq.s32.totalorder %s17, 0
    %p69 = por %p67, %p68
    %s71 = sadd.s32 %s70, 1
    %p74 = scmp.eq.s32.totalorder %s11, 23
    %p75 = scmp.ne.s32.totalorder %s70, %s72
    %p76 = scmp.eq.s32.totalorder %s11, 0
    %p77 = por %p75, %p76
    %p78 = scmp.ne.s32.totalorder %s70, %s72
    %p79 = scmp.eq.s32.totalorder %s16, 23
    %p80 = por %p78, %p79
    %p81 = scmp.ne.s32.totalorder %s72, %s73
    %p82 = scmp.eq.s32.totalorder %s16, 0
    %p83 = por %p81, %p82
    %p84 = scmp.ne.s32.totalorder %s72, %s73
    %p85 = scmp.eq.s32.totalorder %s17, 23
    %p86 = por %p84, %p85
    %p88 = scmp.ne.s32.totalorder %s73, %s87
    %p89 = scmp.eq.s32.totalorder %s17, 0
    %p90 = por %p88, %p89
    %s92 = sadd.s32 %s91, 1
    %p95 = scmp.eq.s32.totalorder %s11, 23
    %p96 = scmp.ne.s32.totalorder %s91, %s93
    %p97 = scmp.eq.s32.totalorder %s11, 0
    %p98 = por %p96, %p97
    %p99 = scmp.ne.s32.totalorder %s91, %s93
    %p100 = scmp.eq.s32.totalorder %s16, 23
    %p101 = por %p99, %p100
    %p102 = scmp.ne.s32.totalorder %s93, %s94
    %p103 = scmp.eq.s32.totalorder %s16, 0
    %p104 = por %p102, %p103
    %p105 = scmp.ne.s32.totalorder %s93, %s94
    %p106 = scmp.eq.s32.totalorder %s17, 23
    %p107 = por %p105, %p106
    %p109 = scmp.ne.s32.totalorder %s94, %s108
    %p110 = scmp.eq.s32.totalorder %s17, 0
    %p111 = por %p109, %p110
    %s112 = ssub.s32 %s18, %s37
    %s113 = ssub.s32 %s19, %s33
    %s114 = sor.u32 %s112, %s113
    %p115 = scmp.eq.s32.totalorder %s114, 0
    %s117 = sadd.s32 %s116, 1
    %s118 = scalar_select %p115, %s116, %s117
    %p121 = pneg %p115
    %p122 = scmp.eq.s32.totalorder %s11, 23
    %p123 = por %p121, %p122
    %p124 = scmp.ne.s32.totalorder %s116, %s119
    %p125 = scmp.eq.s32.totalorder %s11, 0
    %p126 = por %p124, %p125
    %p127 = scmp.ne.s32.totalorder %s116, %s119
    %p128 = scmp.eq.s32.totalorder %s16, 23
    %p129 = por %p127, %p128
    %p130 = scmp.ne.s32.totalorder %s119, %s120
    %p131 = scmp.eq.s32.totalorder %s16, 0
    %p132 = por %p130, %p131
    %p133 = scmp.ne.s32.totalorder %s119, %s120
    %p134 = scmp.eq.s32.totalorder %s17, 23
    %p135 = por %p133, %p134
    %p137 = scmp.ne.s32.totalorder %s120, %s136
    %p138 = scmp.eq.s32.totalorder %s17, 0
    %p139 = por %p137, %p138
    %s140 = ssub.s32 %s18, %s37
    %s141 = ssub.s32 %s19, %s33
    %s142 = sor.u32 %s140, %s141
    %p143 = scmp.eq.s32.totalorder %s142, 0
    %s145 = sadd.s32 %s144, 1
    %s146 = scalar_select %p143, %s144, %s145
    %p149 = pneg %p143
    %p150 = scmp.eq.s32.totalorder %s11, 23
    %p151 = por %p149, %p150
    %p152 = scmp.ne.s32.totalorder %s144, %s147
    %p153 = scmp.eq.s32.totalorder %s11, 0
    %p154 = por %p152, %p153
    %p155 = scmp.ne.s32.totalorder %s144, %s147
    %p156 = scmp.eq.s32.totalorder %s16, 23
    %p157 = por %p155, %p156
    %p158 = scmp.ne.s32.totalorder %s147, %s148
    %p159 = scmp.eq.s32.totalorder %s16, 0
    %p160 = por %p158, %p159
    %p161 = scmp.ne.s32.totalorder %s147, %s148
    %p162 = scmp.eq.s32.totalorder %s17, 23
    %p163 = por %p161, %p162
    %p165 = scmp.ne.s32.totalorder %s148, %s164
    %p166 = scmp.eq.s32.totalorder %s17, 0
    %p167 = por %p165, %p166
    %p168 = scmp.le.s32.totalorder 1, %s11
    %p169 = scmp.lt.s32.totalorder %s11, 25
    %p170 = pnand %p168, %p169
    %p171 = pneg %p170
    // Predicated region
    $region9: #{resblock3d_forward.5} parent=5 // pred_check
      _
    $region10: #{resblock3d_forward.5} parent=5 // pred_check_branch
      %173 = sbr.rel (%p170) target = $region12
    $region11: #{resblock3d_forward.5} parent=5 // pred_region
      %s174 = ssub.s32 %s11, 1
      // Predicated region
      $region13: #{resblock3d_forward.5} parent=11 // pred_check
        %p175 = pneg %p83
      $region14: #{resblock3d_forward.5} parent=11 // pred_check_branch
        %177 = sbr.rel (%p175) target = $region16
      $region15: #{resblock3d_forward.5} parent=11 // pred_region
        _
      $region16: #{resblock3d_forward.5} parent=11 // pred_fallthru
        _
      // Predicated region
      $region17: #{resblock3d_forward.5} parent=11 // pred_check
        %p178 = pneg %p104
      $region18: #{resblock3d_forward.5} parent=11 // pred_check_branch
        %180 = sbr.rel (%p178) target = $region20
      $region19: #{resblock3d_forward.5} parent=11 // pred_region
        _
      $region20: #{resblock3d_forward.5} parent=11 // pred_fallthru
        _
    $region12: #{resblock3d_forward.5} parent=5 // pred_fallthru
      _
    %p181 = scmp.lt.s32.totalorder %s11, 24
    // Predicated region
    $region21: #{resblock3d_forward.5} parent=5 // pred_check
      %p182 = pneg %p181
    $region22: #{resblock3d_forward.5} parent=5 // pred_check_branch
      %184 = sbr.rel (%p182) target = $region24
    $region23: #{resblock3d_forward.5} parent=5 // pred_region
      // Predicated region
      $region25: #{resblock3d_forward.5} parent=23 // pred_check
        %p185 = pneg %p56
      $region26: #{resblock3d_forward.5} parent=23 // pred_check_branch
        %187 = sbr.rel (%p185) target = $region28
      $region27: #{resblock3d_forward.5} parent=23 // pred_region
        %s188 = smul.u32 %s19, 2
        %s189 = sadd.s32 %s188, %s20
        %p190 = scmp.lt.s32.totalorder %s18, 1
        %s191 = scalar_select %p190, %s18, 1
        %p192 = scmp.lt.s32.totalorder %s189, 9
        %s193 = scalar_select %p192, %s189, 9
        %s194 = smul.addr %s193, 15
        %s195 = smul.addr %s191, 150
        %s196 = sadd.s32 %s194, %s195
        %s197 = smul.addr %s196, 4
        %s198 = scalar_lea.vmem %s0, %s197
        %s199 = smul.u32 %s19, 2
        %s200 = sadd.s32 %s199, %s20
      $region28: #{resblock3d_forward.5} parent=23 // pred_fallthru
        _
    $region24: #{resblock3d_forward.5} parent=5 // pred_fallthru
      _
    %p201 = scmp.le.s32.totalorder 1, %s11
    %p202 = scmp.lt.s32.totalorder %s11, 25
    %p203 = pnand %p201, %p202
    %p204 = pneg %p203
    // Predicated region
    $region29: #{resblock3d_forward.5} parent=5 // pred_check
      _
    $region30: #{resblock3d_forward.5} parent=5 // pred_check_branch
      %206 = sbr.rel (%p203) target = $region32
    $region31: #{resblock3d_forward.5} parent=5 // pred_region
      %s207 = ssub.s32 %s11, 1
      %s208 = smul.u32 %s22, 2
      %s209 = sadd.s32 %s208, %s23
      %p210 = scmp.lt.s32.totalorder %s21, 1
      %s211 = scalar_select %p210, %s21, 1
      %p212 = scmp.lt.s32.totalorder %s209, 9
      %s213 = scalar_select %p212, %s209, 9
      %s214 = smul.addr %s213, 15
      %s215 = smul.addr %s211, 150
      %s216 = sadd.s32 %s214, %s215
      %s217 = smul.addr %s216, 4
      %s218 = scalar_lea.vmem %s0, %s217
      %p219 = pneg %p62
      %p220 = pneg %p59
      %p221 = pneg %p83
      %p222 = pneg %p80
      %p223 = pneg %p104
      %p224 = pneg %p101
      %p225 = pneg %p132
      %p226 = pneg %p129
      %p227 = scmp.lt.s32.totalorder %s21, 1
      %s228 = scalar_select %p227, %s21, 1
      %p229 = scmp.lt.s32.totalorder %s22, 3
      %s230 = scalar_select %p229, %s22, 3
      %s231 = smul.addr %s230, 4
      %s232 = smul.addr %s228, 16
      %s233 = sadd.s32 %s231, %s232
      %s234 = smul.addr %s233, 8
      %s235 = scalar_lea.vmem %s3, %s234
      %p236 = pneg %p160
      %p237 = pneg %p157
      %p238 = scmp.lt.s32.totalorder %s21, 1
      %s239 = scalar_select %p238, %s21, 1
      %p240 = scmp.lt.s32.totalorder %s22, 3
      %s241 = scalar_select %p240, %s22, 3
      %s242 = smul.addr %s239, 4
      %s243 = sadd.s32 %s241, %s242
      %s244 = smul.addr %s243, 2
      %s245 = scalar_lea.vmem %s4, %s244
      %s246 = smul.u32 %s22, 2
      %s247 = sadd.s32 %s246, %s23
      %p248 = scmp.lt.s32.totalorder %s21, 1
      %s249 = scalar_select %p248, %s21, 1
      %p250 = scmp.lt.s32.totalorder %s247, 9
      %s251 = scalar_select %p250, %s247, 9
      %s252 = smul.addr %s251, 15
      %s253 = smul.addr %s249, 150
      %s254 = sadd.s32 %s252, %s253
      %s255 = smul.addr %s254, 4
      %s256 = scalar_lea.vmem %s0, %s255
      %s257 = smul.u32 %s22, 2
      %s258 = sadd.s32 %s257, %s23
      %p259 = scmp.lt.s32.totalorder %s21, 1
      %s260 = scalar_select %p259, %s21, 1
      %p261 = scmp.lt.s32.totalorder %s22, 3
      %s262 = scalar_select %p261, %s22, 3
      %s263 = smul.addr %s262, 4
      %s264 = smul.addr %s260, 16
      %s265 = sadd.s32 %s263, %s264
      %s266 = smul.addr %s265, 8
      %s267 = scalar_lea.vmem %s3, %s266
      %p268 = scmp.lt.s32.totalorder %s21, 1
      %s269 = scalar_select %p268, %s21, 1
      %p270 = scmp.lt.s32.totalorder %s22, 3
      %s271 = scalar_select %p270, %s22, 3
      %s272 = smul.addr %s269, 4
      %s273 = sadd.s32 %s271, %s272
      %s274 = smul.addr %s273, 2
      %s275 = scalar_lea.vmem %s4, %s274
      %p277 = scmp.eq.s32.totalorder %s23, 0
      // Predicated region
      $region33: #{resblock3d_forward.5} parent=31 // pred_check
        %p278 = pneg %p277
      $region34: #{resblock3d_forward.5} parent=31 // pred_check_branch
        %280 = sbr.rel (%p278) target = $region36
      $region35: #{resblock3d_forward.5} parent=31 // pred_region
        %281 = vst [vmem:[#allocation2] sm:$0xff] 0.0
        %282 = vst [vmem:[#allocation2 + $0x8] sm:$0xff] 0.0
        %283 = vst [vmem:[#allocation2 + $0x10] sm:$0xff] 0.0
        %284 = vst [vmem:[#allocation2 + $0x18] sm:$0xff] 0.0
      $region36: #{resblock3d_forward.5} parent=31 // pred_fallthru
        _
      %v285 = vld [vmem:[%s256] sm:$0xf]
      %v286 = vld [vmem:[%s256 + $0x4] sm:$0xf]
      %v287 = vld [vmem:[%s256 + $0x8] sm:$0xf]
      %v288 = vld [vmem:[%s256 + $0xc] sm:$0xf]
      %s289 = smul.u32 %s23, 9
      %s290 = smul.u32 %s289, 16
      %s291 = smul.addr %s290, 4
      %s292 = scalar_lea.vmem %s1, %s291
      %v293 = vld [vmem:[%s292] sm:$0xf]
      %v294 = vld [vmem:[%s292 + $0x4] sm:$0xf]
      %v295 = vld [vmem:[%s292 + $0x8] sm:$0xf]
      %v296 = vld [vmem:[%s292 + $0xc] sm:$0xf]
      %v297 = vld [vmem:[%s292 + $0x10] sm:$0xf]
      %v298 = vld [vmem:[%s292 + $0x14] sm:$0xf]
      %v299 = vld [vmem:[%s292 + $0x18] sm:$0xf]
      %v300 = vld [vmem:[%s292 + $0x1c] sm:$0xf]
      %v301 = vld [vmem:[%s292 + $0x20] sm:$0xf]
      %v302 = vld [vmem:[%s292 + $0x24] sm:$0xf]
      %v303 = vld [vmem:[%s292 + $0x28] sm:$0xf]
      %v304 = vld [vmem:[%s292 + $0x2c] sm:$0xf]
      %v305 = vld [vmem:[%s292 + $0x30] sm:$0xf]
      %v306 = vld [vmem:[%s292 + $0x34] sm:$0xf]
      %v307 = vld [vmem:[%s292 + $0x38] sm:$0xf]
      %v308 = vld [vmem:[%s292 + $0x3c] sm:$0xf]
      %v309 = vld [vmem:[%s256 + $0x14] sm:$0xf]
      %v310 = vld [vmem:[%s256 + $0x18] sm:$0xf]
      %v311 = vld [vmem:[%s256 + $0x1c] sm:$0xf]
      %v312 = vld [vmem:[%s256 + $0x20] sm:$0xf]
      %s313 = sadd.s32 %s289, 1
      %s314 = smul.u32 %s313, 16
      %s315 = smul.addr %s314, 4
      %s316 = scalar_lea.vmem %s1, %s315
      %v317 = vld [vmem:[%s316] sm:$0xf]
      %v318 = vld [vmem:[%s316 + $0x4] sm:$0xf]
      %v319 = vld [vmem:[%s316 + $0x8] sm:$0xf]
      %v320 = vld [vmem:[%s316 + $0xc] sm:$0xf]
      %v321 = vld [vmem:[%s316 + $0x10] sm:$0xf]
      %v322 = vld [vmem:[%s316 + $0x14] sm:$0xf]
      %v323 = vld [vmem:[%s316 + $0x18] sm:$0xf]
      %v324 = vld [vmem:[%s316 + $0x1c] sm:$0xf]
      %v325 = vld [vmem:[%s316 + $0x20] sm:$0xf]
      %v326 = vld [vmem:[%s316 + $0x24] sm:$0xf]
      %v327 = vld [vmem:[%s316 + $0x28] sm:$0xf]
      %v328 = vld [vmem:[%s316 + $0x2c] sm:$0xf]
      %v329 = vld [vmem:[%s316 + $0x30] sm:$0xf]
      %v330 = vld [vmem:[%s316 + $0x34] sm:$0xf]
      %v331 = vld [vmem:[%s316 + $0x38] sm:$0xf]
      %v332 = vld [vmem:[%s316 + $0x3c] sm:$0xf]
      %v337 = vunpack.c.l.b16 %v309
      %v338 = vunpack.c.l.b16 %v310
      %v339 = vunpack.c.l.b16 %v311
      %v340 = vunpack.c.l.b16 %v312
      %v341 = vpack.c.b16 %v338, %v337
      %v342 = vpack.c.b16 %v340, %v339
      %v361 = vunpack.c.l.b16 %v317
      %v362 = vunpack.c.l.b16 %v318
      %v363 = vunpack.c.l.b16 %v319
      %v364 = vunpack.c.l.b16 %v320
      %v365 = vunpack.c.l.b16 %v321
      %v366 = vunpack.c.l.b16 %v322
      %v367 = vunpack.c.l.b16 %v323
      %v368 = vunpack.c.l.b16 %v324
      %v369 = vunpack.c.l.b16 %v325
      %v370 = vunpack.c.l.b16 %v326
      %v371 = vunpack.c.l.b16 %v327
      %v372 = vunpack.c.l.b16 %v328
      %v373 = vunpack.c.l.b16 %v329
      %v374 = vunpack.c.l.b16 %v330
      %v375 = vunpack.c.l.b16 %v331
      %v376 = vunpack.c.l.b16 %v332
      %v377 = vpack.c.b16 %v362, %v361
      %v378 = vpack.c.b16 %v364, %v363
      %v379 = vpack.c.b16 %v366, %v365
      %v380 = vpack.c.b16 %v368, %v367
      %v381 = vpack.c.b16 %v370, %v369
      %v382 = vpack.c.b16 %v372, %v371
      %v383 = vpack.c.b16 %v374, %v373
      %v384 = vpack.c.b16 %v376, %v375
      %393 = vmatprep.subr.bf16.mxu0 0
      %394 = vmatpush1.bf16.msra.mxu0 %v377
      %395 = vmatprep.subr.bf16.mxu0 0
      %396 = vmatpush1.bf16.msra.mxu0 %v378
      %397 = vmatprep.subr.bf16.mxu0 0
      %398 = vmatpush1.bf16.msra.mxu0 %v379
      %399 = vmatprep.subr.bf16.mxu0 0
      %400 = vmatpush1.bf16.msra.mxu0 %v380
      %401 = vmatprep.subr.bf16.mxu0 0
      %402 = vmatpush1.bf16.msra.mxu0 %v381
      %403 = vmatprep.subr.bf16.mxu0 0
      %404 = vmatpush1.bf16.msra.mxu0 %v382
      %405 = vmatprep.subr.bf16.mxu0 0
      %406 = vmatpush1.bf16.msra.mxu0 %v383
      %407 = vmatprep.subr.bf16.mxu0 0
      %408 = vmatpush1.bf16.msra.mxu0 %v384
      %409 = vmatprep.subr.bf16.mxu0 0
      %410 = vmatpush1.bf16.msra.mxu0 0
      %411 = vmatprep.subr.bf16.mxu0 0
      %412 = vmatpush1.bf16.msra.mxu0 0
      %413 = vmatprep.subr.bf16.mxu0 0
      %414 = vmatpush1.bf16.msra.mxu0 0
      %415 = vmatprep.subr.bf16.mxu0 0
      %416 = vmatpush1.bf16.msra.mxu0 0
      %417 = vmatprep.subr.bf16.mxu0 0
      %418 = vmatpush1.bf16.msra.mxu0 0
      %419 = vmatprep.subr.bf16.mxu0 0
      %420 = vmatpush1.bf16.msra.mxu0 0
      %421 = vmatprep.subr.bf16.mxu0 0
      %422 = vmatpush1.bf16.msra.mxu0 0
      %423 = vmatprep.subr.bf16.mxu0 0
      %424 = vmatpush1.bf16.msra.mxu0 0
      %425 = vmatprep.mubr.bf16.mxu0 0
      %426 = vmatmul.mubr.bf16.gmra.mrb[0].mxu0 %v341
      %v427 = vpop.f32.mrb[0].mxu0
      %v428 = vadd.f32 0.0, %v427
      %v429 = vpop.f32.mrb[0].mxu0
      %v430 = vpop.f32.mrb[0].mxu0
      %v431 = vadd.f32 0.0, %v430
      %v432 = vpop.f32.mrb[0].mxu0
      %433 = vmatprep.mubr.bf16.mxu0 0
      %434 = vmatmul.mubr.bf16.gmra.mrb[0].mxu0 %v342
      %v435 = vpop.f32.mrb[0].mxu0
      %v436 = vadd.f32 0.0, %v435
      %v437 = vpop.f32.mrb[0].mxu0
      %v438 = vpop.f32.mrb[0].mxu0
      %v439 = vadd.f32 0.0, %v438
      %v440 = vpop.f32.mrb[0].mxu0
      %441 = vdwg.mxu0
      %v446 = vunpack.c.l.b16 %v285
      %v447 = vunpack.c.l.b16 %v286
      %v448 = vunpack.c.l.b16 %v287
      %v449 = vunpack.c.l.b16 %v288
      %v450 = vpack.c.b16 %v447, %v446
      %v451 = vpack.c.b16 %v449, %v448
      %v470 = vunpack.c.l.b16 %v293
      %v471 = vunpack.c.l.b16 %v294
      %v472 = vunpack.c.l.b16 %v295
      %v473 = vunpack.c.l.b16 %v296
      %v474 = vunpack.c.l.b16 %v297
      %v475 = vunpack.c.l.b16 %v298
      %v476 = vunpack.c.l.b16 %v299
      %v477 = vunpack.c.l.b16 %v300
      %v478 = vunpack.c.l.b16 %v301
      %v479 = vunpack.c.l.b16 %v302
      %v480 = vunpack.c.l.b16 %v303
      %v481 = vunpack.c.l.b16 %v304
      %v482 = vunpack.c.l.b16 %v305
      %v483 = vunpack.c.l.b16 %v306
      %v484 = vunpack.c.l.b16 %v307
      %v485 = vunpack.c.l.b16 %v308
      %v486 = vpack.c.b16 %v471, %v470
      %v487 = vpack.c.b16 %v473, %v472
      %v488 = vpack.c.b16 %v475, %v474
      %v489 = vpack.c.b16 %v477, %v476
      %v490 = vpack.c.b16 %v479, %v478
      %v491 = vpack.c.b16 %v481, %v480
      %v492 = vpack.c.b16 %v483, %v482
      %v493 = vpack.c.b16 %v485, %v484
      %502 = vmatprep.subr.bf16.mxu0 0
      %503 = vmatpush1.bf16.msra.mxu0 %v486
      %504 = vmatprep.subr.bf16.mxu0 0
      %505 = vmatpush1.bf16.msra.mxu0 %v487
      %506 = vmatprep.subr.bf16.mxu0 0
      %507 = vmatpush1.bf16.msra.mxu0 %v488
      %508 = vmatprep.subr.bf16.mxu0 0
      %509 = vmatpush1.bf16.msra.mxu0 %v489
      %510 = vmatprep.subr.bf16.mxu0 0
      %511 = vmatpush1.bf16.msra.mxu0 %v490
      %512 = vmatprep.subr.bf16.mxu0 0
      %513 = vmatpush1.bf16.msra.mxu0 %v491
      %514 = vmatprep.subr.bf16.mxu0 0
      %515 = vmatpush1.bf16.msra.mxu0 %v492
      %516 = vmatprep.subr.bf16.mxu0 0
      %517 = vmatpush1.bf16.msra.mxu0 %v493
      %518 = vmatprep.subr.bf16.mxu0 0
      %519 = vmatpush1.bf16.msra.mxu0 0
      %520 = vmatprep.subr.bf16.mxu0 0
      %521 = vmatpush1.bf16.msra.mxu0 0
      %522 = vmatprep.subr.bf16.mxu0 0
      %523 = vmatpush1.bf16.msra.mxu0 0
      %524 = vmatprep.subr.bf16.mxu0 0
      %525 = vmatpush1.bf16.msra.mxu0 0
      %526 = vmatprep.subr.bf16.mxu0 0
      %527 = vmatpush1.bf16.msra.mxu0 0
      %528 = vmatprep.subr.bf16.mxu0 0
      %529 = vmatpush1.bf16.msra.mxu0 0
      %530 = vmatprep.subr.bf16.mxu0 0
      %531 = vmatpush1.bf16.msra.mxu0 0
      %532 = vmatprep.subr.bf16.mxu0 0
      %533 = vmatpush1.bf16.msra.mxu0 0
      %534 = vmatprep.mubr.bf16.mxu0 0
      %535 = vmatmul.mubr.bf16.gmra.mrb[0].mxu0 %v450
      %v536 = vpop.f32.mrb[0].mxu0
      %v537 = vadd.f32 %v428, %v536
      %v538 = vpop.f32.mrb[0].mxu0
      %v539 = vpop.f32.mrb[0].mxu0
      %v540 = vadd.f32 %v431, %v539
      %v541 = vpop.f32.mrb[0].mxu0
      %542 = vmatprep.mubr.bf16.mxu0 0
      %543 = vmatmul.mubr.bf16.gmra.mrb[0].mxu0 %v451
      %v544 = vpop.f32.mrb[0].mxu0
      %v545 = vadd.f32 %v436, %v544
      %v546 = vpop.f32.mrb[0].mxu0
      %v547 = vpop.f32.mrb[0].mxu0
      %v548 = vadd.f32 %v439, %v547
      %v549 = vpop.f32.mrb[0].mxu0
      %550 = vdwg.mxu0
      %v551 = vld [vmem:[%s256 + $0x28] sm:$0xf]
      %v552 = vld [vmem:[%s256 + $0x2c] sm:$0xf]
      %v553 = vld [vmem:[%s256 + $0x30] sm:$0xf]
      %v554 = vld [vmem:[%s256 + $0x34] sm:$0xf]
      %s555 = sadd.s32 %s289, 2
      %s556 = smul.u32 %s555, 16
      %s557 = smul.addr %s556, 4
      %s558 = scalar_lea.vmem %s1, %s557
      %v559 = vld [vmem:[%s558] sm:$0xf]
      %v560 = vld [vmem:[%s558 + $0x4] sm:$0xf]
      %v561 = vld [vmem:[%s558 + $0x8] sm:$0xf]
      %v562 = vld [vmem:[%s558 + $0xc] sm:$0xf]
      %v563 = vld [vmem:[%s558 + $0x10] sm:$0xf]
      %v564 = vld [vmem:[%s558 + $0x14] sm:$0xf]
      %v565 = vld [vmem:[%s558 + $0x18] sm:$0xf]
      %v566 = vld [vmem:[%s558 + $0x1c] sm:$0xf]
      %v567 = vld [vmem:[%s558 + $0x20] sm:$0xf]
      %v568 = vld [vmem:[%s558 + $0x24] sm:$0xf]
      %v569 = vld [vmem:[%s558 + $0x28] sm:$0xf]
      %v570 = vld [vmem:[%s558 + $0x2c] sm:$0xf]
      %v571 = vld [vmem:[%s558 + $0x30] sm:$0xf]
      %v572 = vld [vmem:[%s558 + $0x34] sm:$0xf]
      %v573 = vld [vmem:[%s558 + $0x38] sm:$0xf]
      %v574 = vld [vmem:[%s558 + $0x3c] sm:$0xf]
      %v579 = vunpack.c.l.b16 %v551
      %v580 = vunpack.c.l.b16 %v552
      %v581 = vunpack.c.l.b16 %v553
      %v582 = vunpack.c.l.b16 %v554
      %v583 = vpack.c.b16 %v580, %v579
      %v584 = vpack.c.b16 %v582, %v581
      %v603 = vunpack.c.l.b16 %v559
      %v604 = vunpack.c.l.b16 %v560
      %v605 = vunpack.c.l.b16 %v561
      %v606 = vunpack.c.l.b16 %v562
      %v607 = vunpack.c.l.b16 %v563
      %v608 = vunpack.c.l.b16 %v564
      %v609 = vunpack.c.l.b16 %v565
      %v610 = vunpack.c.l.b16 %v566
      %v611 = vunpack.c.l.b16 %v567
      %v612 = vunpack.c.l.b16 %v568
      %v613 = vunpack.c.l.b16 %v569
      %v614 = vunpack.c.l.b16 %v570
      %v615 = vunpack.c.l.b16 %v571
      %v616 = vunpack.c.l.b16 %v572
      %v617 = vunpack.c.l.b16 %v573
      %v618 = vunpack.c.l.b16 %v574
      %v619 = vpack.c.b16 %v604, %v603
      %v620 = vpack.c.b16 %v606, %v605
      %v621 = vpack.c.b16 %v608, %v607
      %v622 = vpack.c.b16 %v610, %v609
      %v623 = vpack.c.b16 %v612, %v611
      %v624 = vpack.c.b16 %v614, %v613
      %v625 = vpack.c.b16 %v616, %v615
      %v626 = vpack.c.b16 %v618, %v617
      %635 = vmatprep.subr.bf16.mxu0 0
      %636 = vmatpush1.bf16.msra.mxu0 %v619
      %637 = vmatprep.subr.bf16.mxu0 0
      %638 = vmatpush1.bf16.msra.mxu0 %v620
      %639 = vmatprep.subr.bf16.mxu0 0
      %640 = vmatpush1.bf16.msra.mxu0 %v621
      %641 = vmatprep.subr.bf16.mxu0 0
      %642 = vmatpush1.bf16.msra.mxu0 %v622
      %643 = vmatprep.subr.bf16.mxu0 0
      %644 = vmatpush1.bf16.msra.mxu0 %v623
      %645 = vmatprep.subr.bf16.mxu0 0
      %646 = vmatpush1.bf16.msra.mxu0 %v624
      %647 = vmatprep.subr.bf16.mxu0 0
      %648 = vmatpush1.bf16.msra.mxu0 %v625
      %649 = vmatprep.subr.bf16.mxu0 0
      %650 = vmatpush1.bf16.msra.mxu0 %v626
      %651 = vmatprep.subr.bf16.mxu0 0
      %652 = vmatpush1.bf16.msra.mxu0 0
      %653 = vmatprep.subr.bf16.mxu0 0
      %654 = vmatpush1.bf16.msra.mxu0 0
      %655 = vmatprep.subr.bf16.mxu0 0
      %656 = vmatpush1.bf16.msra.mxu0 0
      %657 = vmatprep.subr.bf16.mxu0 0
      %658 = vmatpush1.bf16.msra.mxu0 0
      %659 = vmatprep.subr.bf16.mxu0 0
      %660 = vmatpush1.bf16.msra.mxu0 0
      %661 = vmatprep.subr.bf16.mxu0 0
      %662 = vmatpush1.bf16.msra.mxu0 0
      %663 = vmatprep.subr.bf16.mxu0 0
      %664 = vmatpush1.bf16.msra.mxu0 0
      %665 = vmatprep.subr.bf16.mxu0 0
      %666 = vmatpush1.bf16.msra.mxu0 0
      %667 = vmatprep.mubr.bf16.mxu0 0
      %668 = vmatmul.mubr.bf16.gmra.mrb[0].mxu0 %v583
      %v669 = vpop.f32.mrb[0].mxu0
      %v670 = vadd.f32 0.0, %v669
      %v671 = vpop.f32.mrb[0].mxu0
      %v672 = vpop.f32.mrb[0].mxu0
      %v673 = vadd.f32 0.0, %v672
      %v674 = vpop.f32.mrb[0].mxu0
      %675 = vmatprep.mubr.bf16.mxu0 0
      %676 = vmatmul.mubr.bf16.gmra.mrb[0].mxu0 %v584
      %v677 = vpop.f32.mrb[0].mxu0
      %v678 = vadd.f32 0.0, %v677
      %v679 = vpop.f32.mrb[0].mxu0
      %v680 = vpop.f32.mrb[0].mxu0
      %v681 = vadd.f32 0.0, %v680
      %v682 = vpop.f32.mrb[0].mxu0
      %683 = vdwg.mxu0
      %v684 = vadd.f32 %v537, %v670
      %v685 = vadd.f32 %v540, %v673
      %v686 = vadd.f32 %v545, %v678
      %v687 = vadd.f32 %v548, %v681
      %v688 = vld [vmem:[%s256] sm:$0xc]
      %v689 = vld [vmem:[%s256 + $0x4] sm:$0xf]
      %v690 = vld [vmem:[%s256 + $0x8] sm:$0xf]
      %v691 = vld [vmem:[%s256 + $0xc] sm:$0xf]
      %v692 = vld [vmem:[%s256 + $0x10] sm:$0x3]
      %s693 = sadd.s32 %s289, 3
      %s694 = smul.u32 %s693, 16
      %s695 = smul.addr %s694, 4
      %s696 = scalar_lea.vmem %s1, %s695
      %v697 = vld [vmem:[%s696] sm:$0xf]
      %v698 = vld [vmem:[%s696 + $0x4] sm:$0xf]
      %v699 = vld [vmem:[%s696 + $0x8] sm:$0xf]
      %v700 = vld [vmem:[%s696 + $0xc] sm:$0xf]
      %v701 = vld [vmem:[%s696 + $0x10] sm:$0xf]
      %v702 = vld [vmem:[%s696 + $0x14] sm:$0xf]
      %v703 = vld [vmem:[%s696 + $0x18] sm:$0xf]
      %v704 = vld [vmem:[%s696 + $0x1c] sm:$0xf]
      %v705 = vld [vmem:[%s696 + $0x20] sm:$0xf]
      %v706 = vld [vmem:[%s696 + $0x24] sm:$0xf]
      %v707 = vld [vmem:[%s696 + $0x28] sm:$0xf]
      %v708 = vld [vmem:[%s696 + $0x2c] sm:$0xf]
      %v709 = vld [vmem:[%s696 + $0x30] sm:$0xf]
      %v710 = vld [vmem:[%s696 + $0x34] sm:$0xf]
      %v711 = vld [vmem:[%s696 + $0x38] sm:$0xf]
      %v712 = vld [vmem:[%s696 + $0x3c] sm:$0xf]
      %v718 = vunpack.c.l.b16 %v688
      %v719 = vunpack.c.l.b16 %v689
      %v720 = vunpack.c.l.b16 %v690
      %v721 = vunpack.c.l.b16 %v691
      %v722 = vunpack.c.l.b16 %v692
      %v723 = vpack.c.b16 %v719, %v718
      %v724 = vpack.c.b16 %v721, %v720
      %v725 = vpack.c.b16 %v722, %v722
      %vm726 = vcmask 1045504
      %v727 = vrot.slane %v723, 2
      %v728 = vrot.slane %v724, 2
      %v729 = vsel %vm726, %v727, %v728
      %v730 = vrot.slane %v725, 2
      %v731 = vsel %vm726, %v728, %v730
      %v750 = vunpack.c.l.b16 %v697
      %v751 = vunpack.c.l.b16 %v698
      %v752 = vunpack.c.l.b16 %v699
      %v753 = vunpack.c.l.b16 %v700
      %v754 = vunpack.c.l.b16 %v701
      %v755 = vunpack.c.l.b16 %v702
      %v756 = vunpack.c.l.b16 %v703
      %v757 = vunpack.c.l.b16 %v704
      %v758 = vunpack.c.l.b16 %v705
      %v759 = vunpack.c.l.b16 %v706
      %v760 = vunpack.c.l.b16 %v707
      %v761 = vunpack.c.l.b16 %v708
      %v762 = vunpack.c.l.b16 %v709
      %v763 = vunpack.c.l.b16 %v710
      %v764 = vunpack.c.l.b16 %v711
      %v765 = vunpack.c.l.b16 %v712
      %v766 = vpack.c.b16 %v751, %v750
      %v767 = vpack.c.b16 %v753, %v752
      %v768 = vpack.c.b16 %v755, %v754
      %v769 = vpack.c.b16 %v757, %v756
      %v770 = vpack.c.b16 %v759, %v758
      %v771 = vpack.c.b16 %v761, %v760
      %v772 = vpack.c.b16 %v763, %v762
      %v773 = vpack.c.b16 %v765, %v764
      %782 = vmatprep.subr.bf16.mxu0 0
      %783 = vmatpush1.bf16.msra.mxu0 %v766
      %784 = vmatprep.subr.bf16.mxu0 0
      %785 = vmatpush1.bf16.msra.mxu0 %v767
      %786 = vmatprep.subr.bf16.mxu0 0
      %787 = vmatpush1.bf16.msra.mxu0 %v768
      %788 = vmatprep.subr.bf16.mxu0 0
      %789 = vmatpush1.bf16.msra.mxu0 %v769
      %790 = vmatprep.subr.bf16.mxu0 0
      %791 = vmatpush1.bf16.msra.mxu0 %v770
      %792 = vmatprep.subr.bf16.mxu0 0
      %793 = vmatpush1.bf16.msra.mxu0 %v771
      %794 = vmatprep.subr.bf16.mxu0 0
      %795 = vmatpush1.bf16.msra.mxu0 %v772
      %796 = vmatprep.subr.bf16.mxu0 0
      %797 = vmatpush1.bf16.msra.mxu0 %v773
      %798 = vmatprep.subr.bf16.mxu0 0
      %799 = vmatpush1.bf16.msra.mxu0 0
      %800 = vmatprep.subr.bf16.mxu0 0
      %801 = vmatpush1.bf16.msra.mxu0 0
      %802 = vmatprep.subr.bf16.mxu0 0
      %803 = vmatpush1.bf16.msra.mxu0 0
      %804 = vmatprep.subr.bf16.mxu0 0
      %805 = vmatpush1.bf16.msra.mxu0 0
      %806 = vmatprep.subr.bf16.mxu0 0
      %807 = vmatpush1.bf16.msra.mxu0 0
      %808 = vmatprep.subr.bf16.mxu0 0
      %809 = vmatpush1.bf16.msra.mxu0 0
      %810 = vmatprep.subr.bf16.mxu0 0
      %811 = vmatpush1.bf16.msra.mxu0 0
      %812 = vmatprep.subr.bf16.mxu0 0
      %813 = vmatpush1.bf16.msra.mxu0 0
      %814 = vmatprep.mubr.bf16.mxu0 0
      %815 = vmatmul.mubr.bf16.gmra.mrb[0].mxu0 %v729
      %v816 = vpop.f32.mrb[0].mxu0
      %v817 = vadd.f32 0.0, %v816
      %v818 = vpop.f32.mrb[0].mxu0
      %v819 = vpop.f32.mrb[0].mxu0
      %v820 = vadd.f32 0.0, %v819
      %v821 = vpop.f32.mrb[0].mxu0
      %822 = vmatprep.mubr.bf16.mxu0 0
      %823 = vmatmul.mubr.bf16.gmra.mrb[0].mxu0 %v731
      %v824 = vpop.f32.mrb[0].mxu0
      %v825 = vadd.f32 0.0, %v824
      %v826 = vpop.f32.mrb[0].mxu0
      %v827 = vpop.f32.mrb[0].mxu0
      %v828 = vadd.f32 0.0, %v827
      %v829 = vpop.f32.mrb[0].mxu0
      %830 = vdwg.mxu0
      %v831 = vadd.f32 %v684, %v817
      %v832 = vadd.f32 %v685, %v820
      %v833 = vadd.f32 %v686, %v825
      %v834 = vadd.f32 %v687, %v828
      %v835 = vld [vmem:[%s256 + $0x14] sm:$0xc]
      %v836 = vld [vmem:[%s256 + $0x18] sm:$0xf]
      %v837 = vld [vmem:[%s256 + $0x1c] sm:$0xf]
      %v838 = vld [vmem:[%s256 + $0x20] sm:$0xf]
      %v839 = vld [vmem:[%s256 + $0x24] sm:$0x3]
      %s840 = sadd.s32 %s289, 4
      %s841 = smul.u32 %s840, 16
      %s842 = smul.addr %s841, 4
      %s843 = scalar_lea.vmem %s1, %s842
      %v844 = vld [vmem:[%s843] sm:$0xf]
      %v845 = vld [vmem:[%s843 + $0x4] sm:$0xf]
      %v846 = vld [vmem:[%s843 + $0x8] sm:$0xf]
      %v847 = vld [vmem:[%s843 + $0xc] sm:$0xf]
      %v848 = vld [vmem:[%s843 + $0x10] sm:$0xf]
      %v849 = vld [vmem:[%s843 + $0x14] sm:$0xf]
      %v850 = vld [vmem:[%s843 + $0x18] sm:$0xf]
      %v851 = vld [vmem:[%s843 + $0x1c] sm:$0xf]
      %v852 = vld [vmem:[%s843 + $0x20] sm:$0xf]
      %v853 = vld [vmem:[%s843 + $0x24] sm:$0xf]
      %v854 = vld [vmem:[%s843 + $0x28] sm:$0xf]
      %v855 = vld [vmem:[%s843 + $0x2c] sm:$0xf]
      %v856 = vld [vmem:[%s843 + $0x30] sm:$0xf]
      %v857 = vld [vmem:[%s843 + $0x34] sm:$0xf]
      %v858 = vld [vmem:[%s843 + $0x38] sm:$0xf]
      %v859 = vld [vmem:[%s843 + $0x3c] sm:$0xf]
      %v865 = vunpack.c.l.b16 %v835
      %v866 = vunpack.c.l.b16 %v836
      %v867 = vunpack.c.l.b16 %v837
      %v868 = vunpack.c.l.b16 %v838
      %v869 = vunpack.c.l.b16 %v839
      %v870 = vpack.c.b16 %v866, %v865
      %v871 = vpack.c.b16 %v868, %v867
      %v872 = vpack.c.b16 %v869, %v869
      %v873 = vrot.slane %v870, 2
      %v874 = vrot.slane %v871, 2
      %v875 = vsel %vm726, %v873, %v874
      %v876 = vrot.slane %v872, 2
      %v877 = vsel %vm726, %v874, %v876
      %v896 = vunpack.c.l.b16 %v844
      %v897 = vunpack.c.l.b16 %v845
      %v898 = vunpack.c.l.b16 %v846
      %v899 = vunpack.c.l.b16 %v847
      %v900 = vunpack.c.l.b16 %v848
      %v901 = vunpack.c.l.b16 %v849
      %v902 = vunpack.c.l.b16 %v850
      %v903 = vunpack.c.l.b16 %v851
      %v904 = vunpack.c.l.b16 %v852
      %v905 = vunpack.c.l.b16 %v853
      %v906 = vunpack.c.l.b16 %v854
      %v907 = vunpack.c.l.b16 %v855
      %v908 = vunpack.c.l.b16 %v856
      %v909 = vunpack.c.l.b16 %v857
      %v910 = vunpack.c.l.b16 %v858
      %v911 = vunpack.c.l.b16 %v859
      %v912 = vpack.c.b16 %v897, %v896
      %v913 = vpack.c.b16 %v899, %v898
      %v914 = vpack.c.b16 %v901, %v900
      %v915 = vpack.c.b16 %v903, %v902
      %v916 = vpack.c.b16 %v905, %v904
      %v917 = vpack.c.b16 %v907, %v906
      %v918 = vpack.c.b16 %v909, %v908
      %v919 = vpack.c.b16 %v911, %v910
      %928 = vmatprep.subr.bf16.mxu0 0
      %929 = vmatpush1.bf16.msra.mxu0 %v912
      %930 = vmatprep.subr.bf16.mxu0 0
      %931 = vmatpush1.bf16.msra.mxu0 %v913
      %932 = vmatprep.subr.bf16.mxu0 0
      %933 = vmatpush1.bf16.msra.mxu0 %v914
      %934 = vmatprep.subr.bf16.mxu0 0
      %935 = vmatpush1.bf16.msra.mxu0 %v915
      %936 = vmatprep.subr.bf16.mxu0 0
      %937 = vmatpush1.bf16.msra.mxu0 %v916
      %938 = vmatprep.subr.bf16.mxu0 0
      %939 = vmatpush1.bf16.msra.mxu0 %v917
      %940 = vmatprep.subr.bf16.mxu0 0
      %941 = vmatpush1.bf16.msra.mxu0 %v918
      %942 = vmatprep.subr.bf16.mxu0 0
      %943 = vmatpush1.bf16.msra.mxu0 %v919
      %944 = vmatprep.subr.bf16.mxu0 0
      %945 = vmatpush1.bf16.msra.mxu0 0
      %946 = vmatprep.subr.bf16.mxu0 0
      %947 = vmatpush1.bf16.msra.mxu0 0
      %948 = vmatprep.subr.bf16.mxu0 0
      %949 = vmatpush1.bf16.msra.mxu0 0
      %950 = vmatprep.subr.bf16.mxu0 0
      %951 = vmatpush1.bf16.msra.mxu0 0
      %952 = vmatprep.subr.bf16.mxu0 0
      %953 = vmatpush1.bf16.msra.mxu0 0
      %954 = vmatprep.subr.bf16.mxu0 0
      %955 = vmatpush1.bf16.msra.mxu0 0
      %956 = vmatprep.subr.bf16.mxu0 0
      %957 = vmatpush1.bf16.msra.mxu0 0
      %958 = vmatprep.subr.bf16.mxu0 0
      %959 = vmatpush1.bf16.msra.mxu0 0
      %960 = vmatprep.mubr.bf16.mxu0 0
      %961 = vmatmul.mubr.bf16.gmra.mrb[0].mxu0 %v875
      %v962 = vpop.f32.mrb[0].mxu0
      %v963 = vadd.f32 0.0, %v962
      %v964 = vpop.f32.mrb[0].mxu0
      %v965 = vpop.f32.mrb[0].mxu0
      %v966 = vadd.f32 0.0, %v965
      %v967 = vpop.f32.mrb[0].mxu0
      %968 = vmatprep.mubr.bf16.mxu0 0
      %969 = vmatmul.mubr.bf16.gmra.mrb[0].mxu0 %v877
      %v970 = vpop.f32.mrb[0].mxu0
      %v971 = vadd.f32 0.0, %v970
      %v972 = vpop.f32.mrb[0].mxu0
      %v973 = vpop.f32.mrb[0].mxu0
      %v974 = vadd.f32 0.0, %v973
      %v975 = vpop.f32.mrb[0].mxu0
      %976 = vdwg.mxu0
      %v977 = vadd.f32 %v831, %v963
      %v978 = vadd.f32 %v832, %v966
      %v979 = vadd.f32 %v833, %v971
      %v980 = vadd.f32 %v834, %v974
      %v981 = vld [vmem:[%s256 + $0x28] sm:$0xc]
      %v982 = vld [vmem:[%s256 + $0x2c] sm:$0xf]
      %v983 = vld [vmem:[%s256 + $0x30] sm:$0xf]
      %v984 = vld [vmem:[%s256 + $0x34] sm:$0xf]
      %v985 = vld [vmem:[%s256 + $0x38] sm:$0x3]
      %s986 = sadd.s32 %s289, 5
      %s987 = smul.u32 %s986, 16
      %s988 = smul.addr %s987, 4
      %s989 = scalar_lea.vmem %s1, %s988
      %v990 = vld [vmem:[%s989] sm:$0xf]
      %v991 = vld [vmem:[%s989 + $0x4] sm:$0xf]
      %v992 = vld [vmem:[%s989 + $0x8] sm:$0xf]
      %v993 = vld [vmem:[%s989 + $0xc] sm:$0xf]
      %v994 = vld [vmem:[%s989 + $0x10] sm:$0xf]
      %v995 = vld [vmem:[%s989 + $0x14] sm:$0xf]
      %v996 = vld [vmem:[%s989 + $0x18] sm:$0xf]
      %v997 = vld [vmem:[%s989 + $0x1c] sm:$0xf]
      %v998 = vld [vmem:[%s989 + $0x20] sm:$0xf]
      %v999 = vld [vmem:[%s989 + $0x24] sm:$0xf]
      %v1000 = vld [vmem:[%s989 + $0x28] sm:$0xf]
      %v1001 = vld [vmem:[%s989 + $0x2c] sm:$0xf]
      %v1002 = vld [vmem:[%s989 + $0x30] sm:$0xf]
      %v1003 = vld [vmem:[%s989 + $0x34] sm:$0xf]
      %v1004 = vld [vmem:[%s989 + $0x38] sm:$0xf]
      %v1005 = vld [vmem:[%s989 + $0x3c] sm:$0xf]
      %v1011 = vunpack.c.l.b16 %v981
      %v1012 = vunpack.c.l.b16 %v982
      %v1013 = vunpack.c.l.b16 %v983
      %v1014 = vunpack.c.l.b16 %v984
      %v1015 = vunpack.c.l.b16 %v985
      %v1016 = vpack.c.b16 %v1012, %v1011
      %v1017 = vpack.c.b16 %v1014, %v1013
      %v1018 = vpack.c.b16 %v1015, %v1015
      %v1019 = vrot.slane %v1016, 2
      %v1020 = vrot.slane %v1017, 2
      %v1021 = vsel %vm726, %v1019, %v1020
      %v1022 = vrot.slane %v1018, 2
      %v1023 = vsel %vm726, %v1020, %v1022
      %v1042 = vunpack.c.l.b16 %v990
      %v1043 = vunpack.c.l.b16 %v991
      %v1044 = vunpack.c.l.b16 %v992
      %v1045 = vunpack.c.l.b16 %v993
      %v1046 = vunpack.c.l.b16 %v994
      %v1047 = vunpack.c.l.b16 %v995
      %v1048 = vunpack.c.l.b16 %v996
      %v1049 = vunpack.c.l.b16 %v997
      %v1050 = vunpack.c.l.b16 %v998
      %v1051 = vunpack.c.l.b16 %v999
      %v1052 = vunpack.c.l.b16 %v1000
      %v1053 = vunpack.c.l.b16 %v1001
      %v1054 = vunpack.c.l.b16 %v1002
      %v1055 = vunpack.c.l.b16 %v1003
      %v1056 = vunpack.c.l.b16 %v1004
      %v1057 = vunpack.c.l.b16 %v1005
      %v1058 = vpack.c.b16 %v1043, %v1042
      %v1059 = vpack.c.b16 %v1045, %v1044
      %v1060 = vpack.c.b16 %v1047, %v1046
      %v1061 = vpack.c.b16 %v1049, %v1048
      %v1062 = vpack.c.b16 %v1051, %v1050
      %v1063 = vpack.c.b16 %v1053, %v1052
      %v1064 = vpack.c.b16 %v1055, %v1054
      %v1065 = vpack.c.b16 %v1057, %v1056
      %1074 = vmatprep.subr.bf16.mxu0 0
      %1075 = vmatpush1.bf16.msra.mxu0 %v1058
      %1076 = vmatprep.subr.bf16.mxu0 0
      %1077 = vmatpush1.bf16.msra.mxu0 %v1059
      %1078 = vmatprep.subr.bf16.mxu0 0
      %1079 = vmatpush1.bf16.msra.mxu0 %v1060
      %1080 = vmatprep.subr.bf16.mxu0 0
      %1081 = vmatpush1.bf16.msra.mxu0 %v1061
      %1082 = vmatprep.subr.bf16.mxu0 0
      %1083 = vmatpush1.bf16.msra.mxu0 %v1062
      %1084 = vmatprep.subr.bf16.mxu0 0
      %1085 = vmatpush1.bf16.msra.mxu0 %v1063
      %1086 = vmatprep.subr.bf16.mxu0 0
      %1087 = vmatpush1.bf16.msra.mxu0 %v1064
      %1088 = vmatprep.subr.bf16.mxu0 0
      %1089 = vmatpush1.bf16.msra.mxu0 %v1065
      %1090 = vmatprep.subr.bf16.mxu0 0
      %1091 = vmatpush1.bf16.msra.mxu0 0
      %1092 = vmatprep.subr.bf16.mxu0 0
      %1093 = vmatpush1.bf16.msra.mxu0 0
      %1094 = vmatprep.subr.bf16.mxu0 0
      %1095 = vmatpush1.bf16.msra.mxu0 0
      %1096 = vmatprep.subr.bf16.mxu0 0
      %1097 = vmatpush1.bf16.msra.mxu0 0
      %1098 = vmatprep.subr.bf16.mxu0 0
      %1099 = vmatpush1.bf16.msra.mxu0 0
      %1100 = vmatprep.subr.bf16.mxu0 0
      %1101 = vmatpush1.bf16.msra.mxu0 0
      %1102 = vmatprep.subr.bf16.mxu0 0
      %1103 = vmatpush1.bf16.msra.mxu0 0
      %1104 = vmatprep.subr.bf16.mxu0 0
      %1105 = vmatpush1.bf16.msra.mxu0 0
      %1106 = vmatprep.mubr.bf16.mxu0 0
      %1107 = vmatmul.mubr.bf16.gmra.mrb[0].mxu0 %v1021
      %v1108 = vpop.f32.mrb[0].mxu0
      %v1109 = vadd.f32 0.0, %v1108
      %v1110 = vpop.f32.mrb[0].mxu0
      %v1111 = vpop.f32.mrb[0].mxu0
      %v1112 = vadd.f32 0.0, %v1111
      %v1113 = vpop.f32.mrb[0].mxu0
      %1114 = vmatprep.mubr.bf16.mxu0 0
      %1115 = vmatmul.mubr.bf16.gmra.mrb[0].mxu0 %v1023
      %v1116 = vpop.f32.mrb[0].mxu0
      %v1117 = vadd.f32 0.0, %v1116
      %v1118 = vpop.f32.mrb[0].mxu0
      %v1119 = vpop.f32.mrb[0].mxu0
      %v1120 = vadd.f32 0.0, %v1119
      %v1121 = vpop.f32.mrb[0].mxu0
      %1122 = vdwg.mxu0
      %v1123 = vadd.f32 %v977, %v1109
      %v1124 = vadd.f32 %v978, %v1112
      %v1125 = vadd.f32 %v979, %v1117
      %v1126 = vadd.f32 %v980, %v1120
      %v1127 = vld [vmem:[%s256 + $0x10] sm:$0xf]
      %s1128 = sadd.s32 %s289, 6
      %s1129 = smul.u32 %s1128, 16
      %s1130 = smul.addr %s1129, 4
      %s1131 = scalar_lea.vmem %s1, %s1130
      %v1132 = vld [vmem:[%s1131] sm:$0xf]
      %v1133 = vld [vmem:[%s1131 + $0x4] sm:$0xf]
      %v1134 = vld [vmem:[%s1131 + $0x8] sm:$0xf]
      %v1135 = vld [vmem:[%s1131 + $0xc] sm:$0xf]
      %v1136 = vld [vmem:[%s1131 + $0x10] sm:$0xf]
      %v1137 = vld [vmem:[%s1131 + $0x14] sm:$0xf]
      %v1138 = vld [vmem:[%s1131 + $0x18] sm:$0xf]
      %v1139 = vld [vmem:[%s1131 + $0x1c] sm:$0xf]
      %v1140 = vld [vmem:[%s1131 + $0x20] sm:$0xf]
      %v1141 = vld [vmem:[%s1131 + $0x24] sm:$0xf]
      %v1142 = vld [vmem:[%s1131 + $0x28] sm:$0xf]
      %v1143 = vld [vmem:[%s1131 + $0x2c] sm:$0xf]
      %v1144 = vld [vmem:[%s1131 + $0x30] sm:$0xf]
      %v1145 = vld [vmem:[%s1131 + $0x34] sm:$0xf]
      %v1146 = vld [vmem:[%s1131 + $0x38] sm:$0xf]
      %v1147 = vld [vmem:[%s1131 + $0x3c] sm:$0xf]
      %v1149 = vunpack.c.l.b16 %v1127
      %v1150 = vpack.c.b16 %v720, %v719
      %v1151 = vpack.c.b16 %v1149, %v721
      %v1170 = vunpack.c.l.b16 %v1132
      %v1171 = vunpack.c.l.b16 %v1133
      %v1172 = vunpack.c.l.b16 %v1134
      %v1173 = vunpack.c.l.b16 %v1135
      %v1174 = vunpack.c.l.b16 %v1136
      %v1175 = vunpack.c.l.b16 %v1137
      %v1176 = vunpack.c.l.b16 %v1138
      %v1177 = vunpack.c.l.b16 %v1139
      %v1178 = vunpack.c.l.b16 %v1140
      %v1179 = vunpack.c.l.b16 %v1141
      %v1180 = vunpack.c.l.b16 %v1142
      %v1181 = vunpack.c.l.b16 %v1143
      %v1182 = vunpack.c.l.b16 %v1144
      %v1183 = vunpack.c.l.b16 %v1145
      %v1184 = vunpack.c.l.b16 %v1146
      %v1185 = vunpack.c.l.b16 %v1147
      %v1186 = vpack.c.b16 %v1171, %v1170
      %v1187 = vpack.c.b16 %v1173, %v1172
      %v1188 = vpack.c.b16 %v1175, %v1174
      %v1189 = vpack.c.b16 %v1177, %v1176
      %v1190 = vpack.c.b16 %v1179, %v1178
      %v1191 = vpack.c.b16 %v1181, %v1180
      %v1192 = vpack.c.b16 %v1183, %v1182
      %v1193 = vpack.c.b16 %v1185, %v1184
      %1202 = vmatprep.subr.bf16.mxu0 0
      %1203 = vmatpush1.bf16.msra.mxu0 %v1186
      %1204 = vmatprep.subr.bf16.mxu0 0
      %1205 = vmatpush1.bf16.msra.mxu0 %v1187
      %1206 = vmatprep.subr.bf16.mxu0 0
      %1207 = vmatpush1.bf16.msra.mxu0 %v1188
      %1208 = vmatprep.subr.bf16.mxu0 0
      %1209 = vmatpush1.bf16.msra.mxu0 %v1189
      %1210 = vmatprep.subr.bf16.mxu0 0
      %1211 = vmatpush1.bf16.msra.mxu0 %v1190
      %1212 = vmatprep.subr.bf16.mxu0 0
      %1213 = vmatpush1.bf16.msra.mxu0 %v1191
      %1214 = vmatprep.subr.bf16.mxu0 0
      %1215 = vmatpush1.bf16.msra.mxu0 %v1192
      %1216 = vmatprep.subr.bf16.mxu0 0
      %1217 = vmatpush1.bf16.msra.mxu0 %v1193
      %1218 = vmatprep.subr.bf16.mxu0 0
      %1219 = vmatpush1.bf16.msra.mxu0 0
      %1220 = vmatprep.subr.bf16.mxu0 0
      %1221 = vmatpush1.bf16.msra.mxu0 0
      %1222 = vmatprep.subr.bf16.mxu0 0
      %1223 = vmatpush1.bf16.msra.mxu0 0
      %1224 = vmatprep.subr.bf16.mxu0 0
      %1225 = vmatpush1.bf16.msra.mxu0 0
      %1226 = vmatprep.subr.bf16.mxu0 0
      %1227 = vmatpush1.bf16.msra.mxu0 0
      %1228 = vmatprep.subr.bf16.mxu0 0
      %1229 = vmatpush1.bf16.msra.mxu0 0
      %1230 = vmatprep.subr.bf16.mxu0 0
      %1231 = vmatpush1.bf16.msra.mxu0 0
      %1232 = vmatprep.subr.bf16.mxu0 0
      %1233 = vmatpush1.bf16.msra.mxu0 0
      %1234 = vmatprep.mubr.bf16.mxu0 0
      %1235 = vmatmul.mubr.bf16.gmra.mrb[0].mxu0 %v1150
      %v1236 = vpop.f32.mrb[0].mxu0
      %v1237 = vadd.f32 0.0, %v1236
      %v1238 = vpop.f32.mrb[0].mxu0
      %v1239 = vpop.f32.mrb[0].mxu0
      %v1240 = vadd.f32 0.0, %v1239
      %v1241 = vpop.f32.mrb[0].mxu0
      %1242 = vmatprep.mubr.bf16.mxu0 0
      %1243 = vmatmul.mubr.bf16.gmra.mrb[0].mxu0 %v1151
      %v1244 = vpop.f32.mrb[0].mxu0
      %v1245 = vadd.f32 0.0, %v1244
      %v1246 = vpop.f32.mrb[0].mxu0
      %v1247 = vpop.f32.mrb[0].mxu0
      %v1248 = vadd.f32 0.0, %v1247
      %v1249 = vpop.f32.mrb[0].mxu0
      %1250 = vdwg.mxu0
      %v1251 = vadd.f32 %v1123, %v1237
      %v1252 = vadd.f32 %v1124, %v1240
      %v1253 = vadd.f32 %v1125, %v1245
      %v1254 = vadd.f32 %v1126, %v1248
      %v1255 = vld [vmem:[%s256 + $0x24] sm:$0xf]
      %s1256 = sadd.s32 %s289, 7
      %s1257 = smul.u32 %s1256, 16
      %s1258 = smul.addr %s1257, 4
      %s1259 = scalar_lea.vmem %s1, %s1258
      %v1260 = vld [vmem:[%s1259] sm:$0xf]
      %v1261 = vld [vmem:[%s1259 + $0x4] sm:$0xf]
      %v1262 = vld [vmem:[%s1259 + $0x8] sm:$0xf]
      %v1263 = vld [vmem:[%s1259 + $0xc] sm:$0xf]
      %v1264 = vld [vmem:[%s1259 + $0x10] sm:$0xf]
      %v1265 = vld [vmem:[%s1259 + $0x14] sm:$0xf]
      %v1266 = vld [vmem:[%s1259 + $0x18] sm:$0xf]
      %v1267 = vld [vmem:[%s1259 + $0x1c] sm:$0xf]
      %v1268 = vld [vmem:[%s1259 + $0x20] sm:$0xf]
      %v1269 = vld [vmem:[%s1259 + $0x24] sm:$0xf]
      %v1270 = vld [vmem:[%s1259 + $0x28] sm:$0xf]
      %v1271 = vld [vmem:[%s1259 + $0x2c] sm:$0xf]
      %v1272 = vld [vmem:[%s1259 + $0x30] sm:$0xf]
      %v1273 = vld [vmem:[%s1259 + $0x34] sm:$0xf]
      %v1274 = vld [vmem:[%s1259 + $0x38] sm:$0xf]
      %v1275 = vld [vmem:[%s1259 + $0x3c] sm:$0xf]
      %v1277 = vunpack.c.l.b16 %v1255
      %v1278 = vpack.c.b16 %v867, %v866
      %v1279 = vpack.c.b16 %v1277, %v868
      %v1298 = vunpack.c.l.b16 %v1260
      %v1299 = vunpack.c.l.b16 %v1261
      %v1300 = vunpack.c.l.b16 %v1262
      %v1301 = vunpack.c.l.b16 %v1263
      %v1302 = vunpack.c.l.b16 %v1264
      %v1303 = vunpack.c.l.b16 %v1265
      %v1304 = vunpack.c.l.b16 %v1266
      %v1305 = vunpack.c.l.b16 %v1267
      %v1306 = vunpack.c.l.b16 %v1268
      %v1307 = vunpack.c.l.b16 %v1269
      %v1308 = vunpack.c.l.b16 %v1270
      %v1309 = vunpack.c.l.b16 %v1271
      %v1310 = vunpack.c.l.b16 %v1272
      %v1311 = vunpack.c.l.b16 %v1273
      %v1312 = vunpack.c.l.b16 %v1274
      %v1313 = vunpack.c.l.b16 %v1275
      %v1314 = vpack.c.b16 %v1299, %v1298
      %v1315 = vpack.c.b16 %v1301, %v1300
      %v1316 = vpack.c.b16 %v1303, %v1302
      %v1317 = vpack.c.b16 %v1305, %v1304
      %v1318 = vpack.c.b16 %v1307, %v1306
      %v1319 = vpack.c.b16 %v1309, %v1308
      %v1320 = vpack.c.b16 %v1311, %v1310
      %v1321 = vpack.c.b16 %v1313, %v1312
      %1330 = vmatprep.subr.bf16.mxu0 0
      %1331 = vmatpush1.bf16.msra.mxu0 %v1314
      %1332 = vmatprep.subr.bf16.mxu0 0
      %1333 = vmatpush1.bf16.msra.mxu0 %v1315
      %1334 = vmatprep.subr.bf16.mxu0 0
      %1335 = vmatpush1.bf16.msra.mxu0 %v1316
      %1336 = vmatprep.subr.bf16.mxu0 0
      %1337 = vmatpush1.bf16.msra.mxu0 %v1317
      %1338 = vmatprep.subr.bf16.mxu0 0
      %1339 = vmatpush1.bf16.msra.mxu0 %v1318
      %1340 = vmatprep.subr.bf16.mxu0 0
      %1341 = vmatpush1.bf16.msra.mxu0 %v1319
      %1342 = vmatprep.subr.bf16.mxu0 0
      %1343 = vmatpush1.bf16.msra.mxu0 %v1320
      %1344 = vmatprep.subr.bf16.mxu0 0
      %1345 = vmatpush1.bf16.msra.mxu0 %v1321
      %1346 = vmatprep.subr.bf16.mxu0 0
      %1347 = vmatpush1.bf16.msra.mxu0 0
      %1348 = vmatprep.subr.bf16.mxu0 0
      %1349 = vmatpush1.bf16.msra.mxu0 0
      %1350 = vmatprep.subr.bf16.mxu0 0
      %1351 = vmatpush1.bf16.msra.mxu0 0
      %1352 = vmatprep.subr.bf16.mxu0 0
      %1353 = vmatpush1.bf16.msra.mxu0 0
      %1354 = vmatprep.subr.bf16.mxu0 0
      %1355 = vmatpush1.bf16.msra.mxu0 0
      %1356 = vmatprep.subr.bf16.mxu0 0
      %1357 = vmatpush1.bf16.msra.mxu0 0
      %1358 = vmatprep.subr.bf16.mxu0 0
      %1359 = vmatpush1.bf16.msra.mxu0 0
      %1360 = vmatprep.subr.bf16.mxu0 0
      %1361 = vmatpush1.bf16.msra.mxu0 0
      %1362 = vmatprep.mubr.bf16.mxu0 0
      %1363 = vmatmul.mubr.bf16.gmra.mrb[0].mxu0 %v1278
      %v1364 = vpop.f32.mrb[0].mxu0
      %v1365 = vadd.f32 0.0, %v1364
      %v1366 = vpop.f32.mrb[0].mxu0
      %v1367 = vpop.f32.mrb[0].mxu0
      %v1368 = vadd.f32 0.0, %v1367
      %v1369 = vpop.f32.mrb[0].mxu0
      %1370 = vmatprep.mubr.bf16.mxu0 0
      %1371 = vmatmul.mubr.bf16.gmra.mrb[0].mxu0 %v1279
      %v1372 = vpop.f32.mrb[0].mxu0
      %v1373 = vadd.f32 0.0, %v1372
      %v1374 = vpop.f32.mrb[0].mxu0
      %v1375 = vpop.f32.mrb[0].mxu0
      %v1376 = vadd.f32 0.0, %v1375
      %v1377 = vpop.f32.mrb[0].mxu0
      %1378 = vdwg.mxu0
      %v1379 = vadd.f32 %v1251, %v1365
      %v1380 = vadd.f32 %v1252, %v1368
      %v1381 = vadd.f32 %v1253, %v1373
      %v1382 = vadd.f32 %v1254, %v1376
      %v1383 = vld [vmem:[%s256 + $0x38] sm:$0xf]
      %s1384 = sadd.s32 %s289, 8
      %s1385 = smul.u32 %s1384, 16
      %s1386 = smul.addr %s1385, 4
      %s1387 = scalar_lea.vmem %s1, %s1386
      %v1388 = vld [vmem:[%s1387] sm:$0xf]
      %v1389 = vld [vmem:[%s1387 + $0x4] sm:$0xf]
      %v1390 = vld [vmem:[%s1387 + $0x8] sm:$0xf]
      %v1391 = vld [vmem:[%s1387 + $0xc] sm:$0xf]
      %v1392 = vld [vmem:[%s1387 + $0x10] sm:$0xf]
      %v1393 = vld [vmem:[%s1387 + $0x14] sm:$0xf]
      %v1394 = vld [vmem:[%s1387 + $0x18] sm:$0xf]
      %v1395 = vld [vmem:[%s1387 + $0x1c] sm:$0xf]
      %v1396 = vld [vmem:[%s1387 + $0x20] sm:$0xf]
      %v1397 = vld [vmem:[%s1387 + $0x24] sm:$0xf]
      %v1398 = vld [vmem:[%s1387 + $0x28] sm:$0xf]
      %v1399 = vld [vmem:[%s1387 + $0x2c] sm:$0xf]
      %v1400 = vld [vmem:[%s1387 + $0x30] sm:$0xf]
      %v1401 = vld [vmem:[%s1387 + $0x34] sm:$0xf]
      %v1402 = vld [vmem:[%s1387 + $0x38] sm:$0xf]
      %v1403 = vld [vmem:[%s1387 + $0x3c] sm:$0xf]
      %v1405 = vunpack.c.l.b16 %v1383
      %v1406 = vpack.c.b16 %v1013, %v1012
      %v1407 = vpack.c.b16 %v1405, %v1014
      %v1426 = vunpack.c.l.b16 %v1388
      %v1427 = vunpack.c.l.b16 %v1389
      %v1428 = vunpack.c.l.b16 %v1390
      %v1429 = vunpack.c.l.b16 %v1391
      %v1430 = vunpack.c.l.b16 %v1392
      %v1431 = vunpack.c.l.b16 %v1393
      %v1432 = vunpack.c.l.b16 %v1394
      %v1433 = vunpack.c.l.b16 %v1395
      %v1434 = vunpack.c.l.b16 %v1396
      %v1435 = vunpack.c.l.b16 %v1397
      %v1436 = vunpack.c.l.b16 %v1398
      %v1437 = vunpack.c.l.b16 %v1399
      %v1438 = vunpack.c.l.b16 %v1400
      %v1439 = vunpack.c.l.b16 %v1401
      %v1440 = vunpack.c.l.b16 %v1402
      %v1441 = vunpack.c.l.b16 %v1403
      %v1442 = vpack.c.b16 %v1427, %v1426
      %v1443 = vpack.c.b16 %v1429, %v1428
      %v1444 = vpack.c.b16 %v1431, %v1430
      %v1445 = vpack.c.b16 %v1433, %v1432
      %v1446 = vpack.c.b16 %v1435, %v1434
      %v1447 = vpack.c.b16 %v1437, %v1436
      %v1448 = vpack.c.b16 %v1439, %v1438
      %v1449 = vpack.c.b16 %v1441, %v1440
      %1458 = vmatprep.subr.bf16.mxu0 0
      %1459 = vmatpush1.bf16.msra.mxu0 %v1442
      %1460 = vmatprep.subr.bf16.mxu0 0
      %1461 = vmatpush1.bf16.msra.mxu0 %v1443
      %1462 = vmatprep.subr.bf16.mxu0 0
      %1463 = vmatpush1.bf16.msra.mxu0 %v1444
      %1464 = vmatprep.subr.bf16.mxu0 0
      %1465 = vmatpush1.bf16.msra.mxu0 %v1445
      %1466 = vmatprep.subr.bf16.mxu0 0
      %1467 = vmatpush1.bf16.msra.mxu0 %v1446
      %1468 = vmatprep.subr.bf16.mxu0 0
      %1469 = vmatpush1.bf16.msra.mxu0 %v1447
      %1470 = vmatprep.subr.bf16.mxu0 0
      %1471 = vmatpush1.bf16.msra.mxu0 %v1448
      %1472 = vmatprep.subr.bf16.mxu0 0
      %1473 = vmatpush1.bf16.msra.mxu0 %v1449
      %1474 = vmatprep.subr.bf16.mxu0 0
      %1475 = vmatpush1.bf16.msra.mxu0 0
      %1476 = vmatprep.subr.bf16.mxu0 0
      %1477 = vmatpush1.bf16.msra.mxu0 0
      %1478 = vmatprep.subr.bf16.mxu0 0
      %1479 = vmatpush1.bf16.msra.mxu0 0
      %1480 = vmatprep.subr.bf16.mxu0 0
      %1481 = vmatpush1.bf16.msra.mxu0 0
      %1482 = vmatprep.subr.bf16.mxu0 0
      %1483 = vmatpush1.bf16.msra.mxu0 0
      %1484 = vmatprep.subr.bf16.mxu0 0
      %1485 = vmatpush1.bf16.msra.mxu0 0
      %1486 = vmatprep.subr.bf16.mxu0 0
      %1487 = vmatpush1.bf16.msra.mxu0 0
      %1488 = vmatprep.subr.bf16.mxu0 0
      %1489 = vmatpush1.bf16.msra.mxu0 0
      %1490 = vmatprep.mubr.bf16.mxu0 0
      %1491 = vmatmul.mubr.bf16.gmra.mrb[0].mxu0 %v1406
      %v1492 = vpop.f32.mrb[0].mxu0
      %v1493 = vadd.f32 0.0, %v1492
      %v1494 = vpop.f32.mrb[0].mxu0
      %v1495 = vpop.f32.mrb[0].mxu0
      %v1496 = vadd.f32 0.0, %v1495
      %v1497 = vpop.f32.mrb[0].mxu0
      %1498 = vmatprep.mubr.bf16.mxu0 0
      %1499 = vmatmul.mubr.bf16.gmra.mrb[0].mxu0 %v1407
      %v1500 = vpop.f32.mrb[0].mxu0
      %v1501 = vadd.f32 0.0, %v1500
      %v1502 = vpop.f32.mrb[0].mxu0
      %v1503 = vpop.f32.mrb[0].mxu0
      %v1504 = vadd.f32 0.0, %v1503
      %v1505 = vpop.f32.mrb[0].mxu0
      %1506 = vdwg.mxu0
      %v1507 = vadd.f32 %v1379, %v1493
      %v1508 = vadd.f32 %v1380, %v1496
      %v1509 = vadd.f32 %v1381, %v1501
      %v1510 = vadd.f32 %v1382, %v1504
      %v1511 = vld [vmem:[#allocation2] sm:$0xff]
      %v1512 = vld [vmem:[#allocation2 + $0x8] sm:$0xff]
      %v1513 = vld [vmem:[#allocation2 + $0x10] sm:$0xff]
      %v1514 = vld [vmem:[#allocation2 + $0x18] sm:$0xff]
      %v1515 = vadd.f32 %v1511, %v1507
      %v1516 = vadd.f32 %v1512, %v1508
      %v1517 = vadd.f32 %v1513, %v1509
      %v1518 = vadd.f32 %v1514, %v1510
      %1519 = vst [vmem:[#allocation2] sm:$0xff] %v1515
      %1520 = vst [vmem:[#allocation2 + $0x8] sm:$0xff] %v1516
      %1521 = vst [vmem:[#allocation2 + $0x10] sm:$0xff] %v1517
      %1522 = vst [vmem:[#allocation2 + $0x18] sm:$0xff] %v1518
      %p1523 = scmp.eq.s32.totalorder %s23, 2
      // Predicated region
      $region37: #{resblock3d_forward.5} parent=31 // pred_check
        %p1524 = pneg %p1523
      $region38: #{resblock3d_forward.5} parent=31 // pred_check_branch
        %1526 = sbr.rel (%p1524) target = $region40
      $region39: #{resblock3d_forward.5} parent=31 // pred_region
        %v1527 = vld [vmem:[#allocation2] sm:$0xff]
        %v1528 = vld [vmem:[#allocation2 + $0x8] sm:$0xff]
        %v1529 = vld [vmem:[#allocation2 + $0x10] sm:$0xff]
        %v1530 = vld [vmem:[#allocation2 + $0x18] sm:$0xff]
        %1531 = vst [vmem:[%s267] sm:$0xff] %v1527
        %1532 = vst [vmem:[%s267 + $0x8] sm:$0xff] %v1528
        %1533 = vst [vmem:[%s267 + $0x10] sm:$0xff] %v1529
        %1534 = vst [vmem:[%s267 + $0x18] sm:$0xff] %v1530
        %v1535 = vld [vmem:[%s2] sm:$0xff]
        %v1536 = vld [vmem:[%s2 + $0x8] sm:$0xff]
        %v1537 = vld [vmem:[%s2 + $0x10] sm:$0xff]
        %v1538 = vld [vmem:[%s2 + $0x18] sm:$0xff]
        %1540 = vset.pattern.permute.xlu0 0
        %1541 = vperm.xlu0 %1540, %v1535
        %v1542 = vpop.permute.xlu0 %1541
        %1545 = vset.pattern.permute.xlu0 0
        %1546 = vperm.xlu0 %1545, %v1536
        %v1547 = vpop.permute.xlu0 %1546
        %1550 = vset.pattern.permute.xlu0 0
        %1551 = vperm.xlu0 %1550, %v1537
        %v1552 = vpop.permute.xlu0 %1551
        %1555 = vset.pattern.permute.xlu0 0
        %1556 = vperm.xlu0 %1555, %v1538
        %v1557 = vpop.permute.xlu0 %1556
        %v1559 = vmul.f32 %v1527, %v1542
        %v1560 = vmul.f32 %v1528, %v1547
        %v1561 = vmul.f32 %v1529, %v1552
        %v1562 = vmul.f32 %v1530, %v1557
        %v1563 = vadd.f32 %v1559, %v1560
        %v1564 = vadd.f32 %v1563, %v1561
        %v1565 = vadd.f32 %v1564, %v1562
        %v1566 = vrot.slane %v1565, 4
        %v1567 = vadd.f32 %v1565, %v1566
        %v1568 = vrot.slane %v1567, 2
        %v1569 = vadd.f32 %v1567, %v1568
        %v1570 = vrot.slane %v1569, 1
        %v1571 = vadd.f32 %v1569, %v1570
        %v1572 = vmul.f32 %v1527, %v1527
        %v1573 = vmul.f32 %v1528, %v1528
        %v1574 = vmul.f32 %v1529, %v1529
        %v1575 = vmul.f32 %v1530, %v1530
        %v1576 = vmul.f32 %v1572, %v1542
        %v1577 = vmul.f32 %v1573, %v1547
        %v1578 = vmul.f32 %v1574, %v1552
        %v1579 = vmul.f32 %v1575, %v1557
        %v1580 = vadd.f32 %v1576, %v1577
        %v1581 = vadd.f32 %v1580, %v1578
        %v1582 = vadd.f32 %v1581, %v1579
        %v1583 = vrot.slane %v1582, 4
        %v1584 = vadd.f32 %v1582, %v1583
        %v1585 = vrot.slane %v1584, 2
        %v1586 = vadd.f32 %v1584, %v1585
        %v1587 = vrot.slane %v1586, 1
        %v1588 = vadd.f32 %v1586, %v1587
        %vm1589 = vcmask 1040384
        %v1590 = vsel %vm1589, %v1571, %v1588
        %1591 = vst [vmem:[%s275] sm:$0x3] %v1590
      $region40: #{resblock3d_forward.5} parent=31 // pred_fallthru
        _
      %p1592 = scmp.lt.s32.totalorder %s21, 1
      %s1593 = scalar_select %p1592, %s21, 1
      %p1594 = scmp.lt.s32.totalorder %s22, 3
      %s1595 = scalar_select %p1594, %s22, 3
      %s1596 = smul.addr %s1595, 4
      %s1597 = smul.addr %s1593, 16
      %s1598 = sadd.s32 %s1596, %s1597
      %s1599 = smul.addr %s1598, 8
      %s1600 = scalar_lea.vmem %s3, %s1599
      %p1601 = scmp.lt.s32.totalorder %s21, 1
      %s1602 = scalar_select %p1601, %s21, 1
      %p1603 = scmp.lt.s32.totalorder %s22, 3
      %s1604 = scalar_select %p1603, %s22, 3
      %s1605 = smul.addr %s1602, 4
      %s1606 = sadd.s32 %s1604, %s1605
      %s1607 = smul.addr %s1606, 2
      %s1608 = scalar_lea.vmem %s4, %s1607
      // Predicated region
      $region41: #{resblock3d_forward.5} parent=31 // pred_check
        %p1609 = pneg %p129
      $region42: #{resblock3d_forward.5} parent=31 // pred_check_branch
        %1611 = sbr.rel (%p1609) target = $region44
      $region43: #{resblock3d_forward.5} parent=31 // pred_region
        _
      $region44: #{resblock3d_forward.5} parent=31 // pred_fallthru
        _
      // Predicated region
      $region45: #{resblock3d_forward.5} parent=31 // pred_check
        %p1612 = pneg %p157
      $region46: #{resblock3d_forward.5} parent=31 // pred_check_branch
        %1614 = sbr.rel (%p1612) target = $region48
      $region47: #{resblock3d_forward.5} parent=31 // pred_region
        _
      $region48: #{resblock3d_forward.5} parent=31 // pred_fallthru
        _
    $region32: #{resblock3d_forward.5} parent=5 // pred_fallthru
      _
    %p1615 = scmp.le.s32.totalorder 2, %s11
    // Predicated region
    $region49: #{resblock3d_forward.5} parent=5 // pred_check
      %p1616 = pneg %p1615
    $region50: #{resblock3d_forward.5} parent=5 // pred_check_branch
      %1618 = sbr.rel (%p1616) target = $region52
    $region51: #{resblock3d_forward.5} parent=5 // pred_region
      %s1619 = ssub.s32 %s11, 2
      // Predicated region
      $region53: #{resblock3d_forward.5} parent=51 // pred_check
        %p1620 = pneg %p135
      $region54: #{resblock3d_forward.5} parent=51 // pred_check_branch
        %1622 = sbr.rel (%p1620) target = $region56
      $region55: #{resblock3d_forward.5} parent=51 // pred_region
        %p1623 = scmp.lt.s32.totalorder %s24, 1
        %s1624 = scalar_select %p1623, %s24, 1
        %p1625 = scmp.lt.s32.totalorder %s25, 3
        %s1626 = scalar_select %p1625, %s25, 3
        %s1627 = smul.addr %s1626, 4
        %s1628 = smul.addr %s1624, 16
        %s1629 = sadd.s32 %s1627, %s1628
        %s1630 = smul.addr %s1629, 8
        %s1631 = scalar_lea.vmem %s3, %s1630
      $region56: #{resblock3d_forward.5} parent=51 // pred_fallthru
        _
      // Predicated region
      $region57: #{resblock3d_forward.5} parent=51 // pred_check
        %p1632 = pneg %p163
      $region58: #{resblock3d_forward.5} parent=51 // pred_check_branch
        %1634 = sbr.rel (%p1632) target = $region60
      $region59: #{resblock3d_forward.5} parent=51 // pred_region
        %p1635 = scmp.lt.s32.totalorder %s24, 1
        %s1636 = scalar_select %p1635, %s24, 1
        %p1637 = scmp.lt.s32.totalorder %s25, 3
        %s1638 = scalar_select %p1637, %s25, 3
        %s1639 = smul.addr %s1636, 4
        %s1640 = sadd.s32 %s1638, %s1639
        %s1641 = smul.addr %s1640, 2
        %s1642 = scalar_lea.vmem %s4, %s1641
      $region60: #{resblock3d_forward.5} parent=51 // pred_fallthru
        _
    $region52: #{resblock3d_forward.5} parent=5 // pred_fallthru
      _
  $region6: #{resblock3d_forward.5} parent=0 // loop_footer
    %s15 = sadd.s32 1, %s11
  $region7: #{resblock3d_forward.5} parent=0 // loop_footer_branch
    %10 = sbr.rel target = $region3
  $region8: #{resblock3d_forward.5} parent=0 // loop_exit
    _

// kernel: resblock3d_forward.8
$region0: #{resblock3d_forward.8}
  #allocation0 [shape = 'u32[]', space=smem, size = 0x4, offset = 0x4, fixed_abs, tag = 'smem constant byte address 0x4 - core index']
  #allocation1 [shape = 'u32[144,128]{1,0:T(1,128)}', space=vmem, size = 0x12000, scoped, tag = 'internal scratch']
  #allocation2 [shape = 'f32[16,128]{1,0:T(8,128)}', space=vmem, size = 0x2000, scoped, tag = 'scratch operand']
  %s0 = inlined_call_operand.vmem [shape: bf16[2,4,16,128], index: 0, kind: input, shape index: {}]
  %s1 = inlined_call_operand.vmem [shape: bf16[1,128,128], index: 1, kind: input, shape index: {}]
  %s2 = inlined_call_operand.vmem [shape: f32[16,1], index: 2, kind: input, shape index: {}]
  %s3 = inlined_call_operand.vmem [shape: f32[2,4,16,128], index: 3, kind: output, shape index: {0}]
  %s4 = inlined_call_operand.vmem [shape: f32[2,4,2,128], index: 4, kind: output, shape index: {1}]
  %5 = xla_tuple %s3, %s4
  %s6 = sld [smem:[#allocation0]]
  $region61: #{resblock3d_forward.8} parent=0
    _
  %s8 = ssub.s32 1, %s6
  %s9 = scalar_select 0, %s8, %s6
  loop: start=0, step=1, limit=10
  $region2: #{resblock3d_forward.8} parent=0 // loop_pre_header
    _
  $region3: #{resblock3d_forward.8} parent=0 // loop_header
    %s11 = sphi 0, %s15
    %p12 = scmp.ge.s32.totalorder %s11, 10
    %s18 = sphi 0, %s37
    %s19 = sphi 0, %s33
    %s20 = sphi 0, %s29
    %s21 = sphi 0, %s18
    %s22 = sphi 0, %s19
    %s23 = sphi 0, %s20
    %s24 = sphi 0, %s21
    %s25 = sphi 0, %s22
    %s26 = sphi 0, %s23
    %s44 = sphi 0, %s46
    %s47 = sphi 0, %s44
    %s48 = sphi 0, %s47
    %s64 = sphi 0, %s48
    %s68 = sphi 0, %s68
    %s70 = sphi 0, %s68
    %s71 = sphi 0, %s70
    %s85 = sphi 0, %s71
    %s89 = sphi 0, %s89
    %s91 = sphi 0, %s89
    %s92 = sphi 0, %s91
    %s106 = sphi 0, %s92
    %s114 = sphi 0, %s116
    %s117 = sphi 0, %s114
    %s118 = sphi 0, %s117
    %s134 = sphi 0, %s118
    %s142 = sphi 0, %s144
    %s145 = sphi 0, %s142
    %s146 = sphi 0, %s145
    %s162 = sphi 0, %s146
  $region4: #{resblock3d_forward.8} parent=0 // loop_header_branch
    %14 = sbr.rel (%p12) target = $region8
  $region5: #{resblock3d_forward.8} parent=0 // loop_body
    %s16 = ssub.s32 %s11, 1
    %s17 = ssub.s32 %s11, 2
    %s27 = sadd.s32 1, %s20
    %p28 = scmp.ge.s32.totalorder %s27, 1
    %s29 = scalar_select %p28, 0, %s27
    %s30 = sadd.s32 1, %s19
    %s31 = scalar_select %p28, %s30, %s19
    %p32 = scmp.ge.s32.totalorder %s31, 4
    %s33 = scalar_select %p32, 0, %s31
    %s34 = sadd.s32 1, %s18
    %s35 = scalar_select %p32, %s34, %s18
    %p36 = scmp.ge.s32.totalorder %s35, 2
    %s37 = scalar_select %p36, 0, %s35
    %s38 = sadd.s32 %s19, %s20
    %s39 = sadd.s32 %s33, %s29
    %s40 = ssub.s32 %s18, %s37
    %s41 = ssub.s32 %s38, %s39
    %s42 = sor.u32 %s40, %s41
    %p43 = scmp.eq.s32.totalorder %s42, 0
    %s45 = sadd.s32 %s44, 1
    %s46 = scalar_select %p43, %s44, %s45
    %p49 = pneg %p43
    %p50 = scmp.eq.s32.totalorder %s11, 7
    %p51 = por %p49, %p50
    %p52 = scmp.ne.s32.totalorder %s44, %s47
    %p53 = scmp.eq.s32.totalorder %s11, 0
    %p54 = por %p52, %p53
    %p55 = scmp.ne.s32.totalorder %s44, %s47
    %p56 = scmp.eq.s32.totalorder %s16, 7
    %p57 = por %p55, %p56
    %p58 = scmp.ne.s32.totalorder %s47, %s48
    %p59 = scmp.eq.s32.totalorder %s16, 0
    %p60 = por %p58, %p59
    %p61 = scmp.ne.s32.totalorder %s47, %s48
    %p62 = scmp.eq.s32.totalorder %s17, 7
    %p63 = por %p61, %p62
    %p65 = scmp.ne.s32.totalorder %s48, %s64
    %p66 = scmp.eq.s32.totalorder %s17, 0
    %p67 = por %p65, %p66
    %s69 = sadd.s32 %s68, 1
    %p72 = scmp.eq.s32.totalorder %s11, 7
    %p73 = scmp.ne.s32.totalorder %s68, %s70
    %p74 = scmp.eq.s32.totalorder %s11, 0
    %p75 = por %p73, %p74
    %p76 = scmp.ne.s32.totalorder %s68, %s70
    %p77 = scmp.eq.s32.totalorder %s16, 7
    %p78 = por %p76, %p77
    %p79 = scmp.ne.s32.totalorder %s70, %s71
    %p80 = scmp.eq.s32.totalorder %s16, 0
    %p81 = por %p79, %p80
    %p82 = scmp.ne.s32.totalorder %s70, %s71
    %p83 = scmp.eq.s32.totalorder %s17, 7
    %p84 = por %p82, %p83
    %p86 = scmp.ne.s32.totalorder %s71, %s85
    %p87 = scmp.eq.s32.totalorder %s17, 0
    %p88 = por %p86, %p87
    %s90 = sadd.s32 %s89, 1
    %p93 = scmp.eq.s32.totalorder %s11, 7
    %p94 = scmp.ne.s32.totalorder %s89, %s91
    %p95 = scmp.eq.s32.totalorder %s11, 0
    %p96 = por %p94, %p95
    %p97 = scmp.ne.s32.totalorder %s89, %s91
    %p98 = scmp.eq.s32.totalorder %s16, 7
    %p99 = por %p97, %p98
    %p100 = scmp.ne.s32.totalorder %s91, %s92
    %p101 = scmp.eq.s32.totalorder %s16, 0
    %p102 = por %p100, %p101
    %p103 = scmp.ne.s32.totalorder %s91, %s92
    %p104 = scmp.eq.s32.totalorder %s17, 7
    %p105 = por %p103, %p104
    %p107 = scmp.ne.s32.totalorder %s92, %s106
    %p108 = scmp.eq.s32.totalorder %s17, 0
    %p109 = por %p107, %p108
    %s110 = ssub.s32 %s18, %s37
    %s111 = ssub.s32 %s19, %s33
    %s112 = sor.u32 %s110, %s111
    %p113 = scmp.eq.s32.totalorder %s112, 0
    %s115 = sadd.s32 %s114, 1
    %s116 = scalar_select %p113, %s114, %s115
    %p119 = pneg %p113
    %p120 = scmp.eq.s32.totalorder %s11, 7
    %p121 = por %p119, %p120
    %p122 = scmp.ne.s32.totalorder %s114, %s117
    %p123 = scmp.eq.s32.totalorder %s11, 0
    %p124 = por %p122, %p123
    %p125 = scmp.ne.s32.totalorder %s114, %s117
    %p126 = scmp.eq.s32.totalorder %s16, 7
    %p127 = por %p125, %p126
    %p128 = scmp.ne.s32.totalorder %s117, %s118
    %p129 = scmp.eq.s32.totalorder %s16, 0
    %p130 = por %p128, %p129
    %p131 = scmp.ne.s32.totalorder %s117, %s118
    %p132 = scmp.eq.s32.totalorder %s17, 7
    %p133 = por %p131, %p132
    %p135 = scmp.ne.s32.totalorder %s118, %s134
    %p136 = scmp.eq.s32.totalorder %s17, 0
    %p137 = por %p135, %p136
    %s138 = ssub.s32 %s18, %s37
    %s139 = ssub.s32 %s19, %s33
    %s140 = sor.u32 %s138, %s139
    %p141 = scmp.eq.s32.totalorder %s140, 0
    %s143 = sadd.s32 %s142, 1
    %s144 = scalar_select %p141, %s142, %s143
    %p147 = pneg %p141
    %p148 = scmp.eq.s32.totalorder %s11, 7
    %p149 = por %p147, %p148
    %p150 = scmp.ne.s32.totalorder %s142, %s145
    %p151 = scmp.eq.s32.totalorder %s11, 0
    %p152 = por %p150, %p151
    %p153 = scmp.ne.s32.totalorder %s142, %s145
    %p154 = scmp.eq.s32.totalorder %s16, 7
    %p155 = por %p153, %p154
    %p156 = scmp.ne.s32.totalorder %s145, %s146
    %p157 = scmp.eq.s32.totalorder %s16, 0
    %p158 = por %p156, %p157
    %p159 = scmp.ne.s32.totalorder %s145, %s146
    %p160 = scmp.eq.s32.totalorder %s17, 7
    %p161 = por %p159, %p160
    %p163 = scmp.ne.s32.totalorder %s146, %s162
    %p164 = scmp.eq.s32.totalorder %s17, 0
    %p165 = por %p163, %p164
    %p166 = scmp.le.s32.totalorder 1, %s11
    %p167 = scmp.lt.s32.totalorder %s11, 9
    %p168 = pnand %p166, %p167
    %p169 = pneg %p168
    // Predicated region
    $region9: #{resblock3d_forward.8} parent=5 // pred_check
      _
    $region10: #{resblock3d_forward.8} parent=5 // pred_check_branch
      %171 = sbr.rel (%p168) target = $region12
    $region11: #{resblock3d_forward.8} parent=5 // pred_region
      %s172 = ssub.s32 %s11, 1
      // Predicated region
      $region13: #{resblock3d_forward.8} parent=11 // pred_check
        %p173 = pneg %p81
      $region14: #{resblock3d_forward.8} parent=11 // pred_check_branch
        %175 = sbr.rel (%p173) target = $region16
      $region15: #{resblock3d_forward.8} parent=11 // pred_region
        _
      $region16: #{resblock3d_forward.8} parent=11 // pred_fallthru
        _
      // Predicated region
      $region17: #{resblock3d_forward.8} parent=11 // pred_check
        %p176 = pneg %p102
      $region18: #{resblock3d_forward.8} parent=11 // pred_check_branch
        %178 = sbr.rel (%p176) target = $region20
      $region19: #{resblock3d_forward.8} parent=11 // pred_region
        _
      $region20: #{resblock3d_forward.8} parent=11 // pred_fallthru
        _
    $region12: #{resblock3d_forward.8} parent=5 // pred_fallthru
      _
    %p179 = scmp.lt.s32.totalorder %s11, 8
    // Predicated region
    $region21: #{resblock3d_forward.8} parent=5 // pred_check
      %p180 = pneg %p179
    $region22: #{resblock3d_forward.8} parent=5 // pred_check_branch
      %182 = sbr.rel (%p180) target = $region24
    $region23: #{resblock3d_forward.8} parent=5 // pred_region
      // Predicated region
      $region25: #{resblock3d_forward.8} parent=23 // pred_check
        %p183 = pneg %p54
      $region26: #{resblock3d_forward.8} parent=23 // pred_check_branch
        %185 = sbr.rel (%p183) target = $region28
      $region27: #{resblock3d_forward.8} parent=23 // pred_region
        %s186 = sadd.s32 %s19, %s20
        %p187 = scmp.lt.s32.totalorder %s18, 1
        %s188 = scalar_select %p187, %s18, 1
        %p189 = scmp.lt.s32.totalorder %s186, 3
        %s190 = scalar_select %p189, %s186, 3
        %s191 = smul.addr %s190, 2
        %s192 = smul.addr %s188, 8
        %s193 = sadd.s32 %s191, %s192
        %s194 = smul.addr %s193, 4
        %s195 = scalar_lea.vmem %s0, %s194
        %s196 = sadd.s32 %s19, %s20
      $region28: #{resblock3d_forward.8} parent=23 // pred_fallthru
        _
    $region24: #{resblock3d_forward.8} parent=5 // pred_fallthru
      _
    %p197 = scmp.le.s32.totalorder 1, %s11
    %p198 = scmp.lt.s32.totalorder %s11, 9
    %p199 = pnand %p197, %p198
    %p200 = pneg %p199
    // Predicated region
    $region29: #{resblock3d_forward.8} parent=5 // pred_check
      _
    $region30: #{resblock3d_forward.8} parent=5 // pred_check_branch
      %202 = sbr.rel (%p199) target = $region32
    $region31: #{resblock3d_forward.8} parent=5 // pred_region
      %s203 = ssub.s32 %s11, 1
      %s204 = sadd.s32 %s22, %s23
      %p205 = scmp.lt.s32.totalorder %s21, 1
      %s206 = scalar_select %p205, %s21, 1
      %p207 = scmp.lt.s32.totalorder %s204, 3
      %s208 = scalar_select %p207, %s204, 3
      %s209 = smul.addr %s208, 2
      %s210 = smul.addr %s206, 8
      %s211 = sadd.s32 %s209, %s210
      %s212 = smul.addr %s211, 4
      %s213 = scalar_lea.vmem %s0, %s212
      %p214 = pneg %p60
      %p215 = pneg %p57
      %p216 = pneg %p81
      %p217 = pneg %p78
      %p218 = pneg %p102
      %p219 = pneg %p99
      %p220 = pneg %p130
      %p221 = pneg %p127
      %p222 = scmp.lt.s32.totalorder %s21, 1
      %s223 = scalar_select %p222, %s21, 1
      %p224 = scmp.lt.s32.totalorder %s22, 3
      %s225 = scalar_select %p224, %s22, 3
      %s226 = smul.addr %s225, 2
      %s227 = smul.addr %s223, 8
      %s228 = sadd.s32 %s226, %s227
      %s229 = smul.addr %s228, 8
      %s230 = scalar_lea.vmem %s3, %s229
      %p231 = pneg %p158
      %p232 = pneg %p155
      %p233 = scmp.lt.s32.totalorder %s21, 1
      %s234 = scalar_select %p233, %s21, 1
      %p235 = scmp.lt.s32.totalorder %s22, 3
      %s236 = scalar_select %p235, %s22, 3
      %s237 = smul.addr %s234, 4
      %s238 = sadd.s32 %s236, %s237
      %s239 = smul.addr %s238, 2
      %s240 = scalar_lea.vmem %s4, %s239
      %s241 = sadd.s32 %s22, %s23
      %p242 = scmp.lt.s32.totalorder %s21, 1
      %s243 = scalar_select %p242, %s21, 1
      %p244 = scmp.lt.s32.totalorder %s241, 3
      %s245 = scalar_select %p244, %s241, 3
      %s246 = smul.addr %s245, 2
      %s247 = smul.addr %s243, 8
      %s248 = sadd.s32 %s246, %s247
      %s249 = smul.addr %s248, 4
      %s250 = scalar_lea.vmem %s0, %s249
      %s251 = sadd.s32 %s22, %s23
      %p252 = scmp.lt.s32.totalorder %s21, 1
      %s253 = scalar_select %p252, %s21, 1
      %p254 = scmp.lt.s32.totalorder %s22, 3
      %s255 = scalar_select %p254, %s22, 3
      %s256 = smul.addr %s255, 2
      %s257 = smul.addr %s253, 8
      %s258 = sadd.s32 %s256, %s257
      %s259 = smul.addr %s258, 8
      %s260 = scalar_lea.vmem %s3, %s259
      %p261 = scmp.lt.s32.totalorder %s21, 1
      %s262 = scalar_select %p261, %s21, 1
      %p263 = scmp.lt.s32.totalorder %s22, 3
      %s264 = scalar_select %p263, %s22, 3
      %s265 = smul.addr %s262, 4
      %s266 = sadd.s32 %s264, %s265
      %s267 = smul.addr %s266, 2
      %s268 = scalar_lea.vmem %s4, %s267
      %p270 = scmp.eq.s32.totalorder %s23, 0
      // Predicated region
      $region33: #{resblock3d_forward.8} parent=31 // pred_check
        %p271 = pneg %p270
      $region34: #{resblock3d_forward.8} parent=31 // pred_check_branch
        %273 = sbr.rel (%p271) target = $region36
      $region35: #{resblock3d_forward.8} parent=31 // pred_region
        %274 = vst [vmem:[#allocation2] sm:$0xff] 0.0
        %275 = vst [vmem:[#allocation2 + $0x8] sm:$0xff] 0.0
      $region36: #{resblock3d_forward.8} parent=31 // pred_fallthru
        _
      %v276 = vld [vmem:[%s250] sm:$0xf]
      %v277 = vld [vmem:[%s250 + $0x4] sm:$0xf]
      %s278 = smul.u32 %s23, 16
      %s279 = smul.addr %s278, 4
      %s280 = scalar_lea.vmem %s1, %s279
      %v281 = vld [vmem:[%s280] sm:$0xf]
      %v282 = vld [vmem:[%s280 + $0x4] sm:$0xf]
      %v283 = vld [vmem:[%s280 + $0x8] sm:$0xf]
      %v284 = vld [vmem:[%s280 + $0xc] sm:$0xf]
      %v285 = vld [vmem:[%s280 + $0x10] sm:$0xf]
      %v286 = vld [vmem:[%s280 + $0x14] sm:$0xf]
      %v287 = vld [vmem:[%s280 + $0x18] sm:$0xf]
      %v288 = vld [vmem:[%s280 + $0x1c] sm:$0xf]
      %v289 = vld [vmem:[%s280 + $0x20] sm:$0xf]
      %v290 = vld [vmem:[%s280 + $0x24] sm:$0xf]
      %v291 = vld [vmem:[%s280 + $0x28] sm:$0xf]
      %v292 = vld [vmem:[%s280 + $0x2c] sm:$0xf]
      %v293 = vld [vmem:[%s280 + $0x30] sm:$0xf]
      %v294 = vld [vmem:[%s280 + $0x34] sm:$0xf]
      %v295 = vld [vmem:[%s280 + $0x38] sm:$0xf]
      %v296 = vld [vmem:[%s280 + $0x3c] sm:$0xf]
      %v299 = vunpack.c.l.b16 %v276
      %v300 = vunpack.c.l.b16 %v277
      %v301 = vpack.c.b16 %v300, %v299
      %v319 = vunpack.c.l.b16 %v281
      %v320 = vunpack.c.l.b16 %v282
      %v321 = vunpack.c.l.b16 %v283
      %v322 = vunpack.c.l.b16 %v284
      %v323 = vunpack.c.l.b16 %v285
      %v324 = vunpack.c.l.b16 %v286
      %v325 = vunpack.c.l.b16 %v287
      %v326 = vunpack.c.l.b16 %v288
      %v327 = vunpack.c.l.b16 %v289
      %v328 = vunpack.c.l.b16 %v290
      %v329 = vunpack.c.l.b16 %v291
      %v330 = vunpack.c.l.b16 %v292
      %v331 = vunpack.c.l.b16 %v293
      %v332 = vunpack.c.l.b16 %v294
      %v333 = vunpack.c.l.b16 %v295
      %v334 = vunpack.c.l.b16 %v296
      %v335 = vpack.c.b16 %v320, %v319
      %v336 = vpack.c.b16 %v322, %v321
      %v337 = vpack.c.b16 %v324, %v323
      %v338 = vpack.c.b16 %v326, %v325
      %v339 = vpack.c.b16 %v328, %v327
      %v340 = vpack.c.b16 %v330, %v329
      %v341 = vpack.c.b16 %v332, %v331
      %v342 = vpack.c.b16 %v334, %v333
      %351 = vmatprep.subr.bf16.mxu0 0
      %352 = vmatpush1.bf16.msra.mxu0 %v335
      %353 = vmatprep.subr.bf16.mxu0 0
      %354 = vmatpush1.bf16.msra.mxu0 %v336
      %355 = vmatprep.subr.bf16.mxu0 0
      %356 = vmatpush1.bf16.msra.mxu0 %v337
      %357 = vmatprep.subr.bf16.mxu0 0
      %358 = vmatpush1.bf16.msra.mxu0 %v338
      %359 = vmatprep.subr.bf16.mxu0 0
      %360 = vmatpush1.bf16.msra.mxu0 %v339
      %361 = vmatprep.subr.bf16.mxu0 0
      %362 = vmatpush1.bf16.msra.mxu0 %v340
      %363 = vmatprep.subr.bf16.mxu0 0
      %364 = vmatpush1.bf16.msra.mxu0 %v341
      %365 = vmatprep.subr.bf16.mxu0 0
      %366 = vmatpush1.bf16.msra.mxu0 %v342
      %367 = vmatprep.subr.bf16.mxu0 0
      %368 = vmatpush1.bf16.msra.mxu0 0
      %369 = vmatprep.subr.bf16.mxu0 0
      %370 = vmatpush1.bf16.msra.mxu0 0
      %371 = vmatprep.subr.bf16.mxu0 0
      %372 = vmatpush1.bf16.msra.mxu0 0
      %373 = vmatprep.subr.bf16.mxu0 0
      %374 = vmatpush1.bf16.msra.mxu0 0
      %375 = vmatprep.subr.bf16.mxu0 0
      %376 = vmatpush1.bf16.msra.mxu0 0
      %377 = vmatprep.subr.bf16.mxu0 0
      %378 = vmatpush1.bf16.msra.mxu0 0
      %379 = vmatprep.subr.bf16.mxu0 0
      %380 = vmatpush1.bf16.msra.mxu0 0
      %381 = vmatprep.subr.bf16.mxu0 0
      %382 = vmatpush1.bf16.msra.mxu0 0
      %383 = vmatprep.mubr.bf16.mxu0 0
      %384 = vmatmul.mubr.bf16.gmra.mrb[0].mxu0 %v301
      %v385 = vpop.f32.mrb[0].mxu0
      %v386 = vadd.f32 0.0, %v385
      %v387 = vpop.f32.mrb[0].mxu0
      %v388 = vpop.f32.mrb[0].mxu0
      %v389 = vadd.f32 0.0, %v388
      %v390 = vpop.f32.mrb[0].mxu0
      %391 = vdwg.mxu0
      %v392 = vld [vmem:[#allocation2] sm:$0xff]
      %v393 = vld [vmem:[#allocation2 + $0x8] sm:$0xff]
      %v394 = vadd.f32 %v392, %v386
      %v395 = vadd.f32 %v393, %v389
      %396 = vst [vmem:[#allocation2] sm:$0xff] %v394
      %397 = vst [vmem:[#allocation2 + $0x8] sm:$0xff] %v395
      // Predicated region
      $region37: #{resblock3d_forward.8} parent=31 // pred_check
        %p398 = pneg %p270
      $region38: #{resblock3d_forward.8} parent=31 // pred_check_branch
        %400 = sbr.rel (%p398) target = $region40
      $region39: #{resblock3d_forward.8} parent=31 // pred_region
        %v401 = vld [vmem:[#allocation2] sm:$0xff]
        %v402 = vld [vmem:[#allocation2 + $0x8] sm:$0xff]
        %403 = vst [vmem:[%s260] sm:$0xff] %v401
        %404 = vst [vmem:[%s260 + $0x8] sm:$0xff] %v402
        %v405 = vld [vmem:[%s2] sm:$0xff]
        %v406 = vld [vmem:[%s2 + $0x8] sm:$0xff]
        %408 = vset.pattern.permute.xlu0 0
        %409 = vperm.xlu0 %408, %v405
        %v410 = vpop.permute.xlu0 %409
        %413 = vset.pattern.permute.xlu0 0
        %414 = vperm.xlu0 %413, %v406
        %v415 = vpop.permute.xlu0 %414
        %v417 = vmul.f32 %v401, %v410
        %v418 = vmul.f32 %v402, %v415
        %v419 = vadd.f32 %v417, %v418
        %v420 = vrot.slane %v419, 4
        %v421 = vadd.f32 %v419, %v420
        %v422 = vrot.slane %v421, 2
        %v423 = vadd.f32 %v421, %v422
        %v424 = vrot.slane %v423, 1
        %v425 = vadd.f32 %v423, %v424
        %v426 = vmul.f32 %v401, %v401
        %v427 = vmul.f32 %v402, %v402
        %v428 = vmul.f32 %v426, %v410
        %v429 = vmul.f32 %v427, %v415
        %v430 = vadd.f32 %v428, %v429
        %v431 = vrot.slane %v430, 4
        %v432 = vadd.f32 %v430, %v431
        %v433 = vrot.slane %v432, 2
        %v434 = vadd.f32 %v432, %v433
        %v435 = vrot.slane %v434, 1
        %v436 = vadd.f32 %v434, %v435
        %vm437 = vcmask 1040384
        %v438 = vsel %vm437, %v425, %v436
        %439 = vst [vmem:[%s268] sm:$0x3] %v438
      $region40: #{resblock3d_forward.8} parent=31 // pred_fallthru
        _
      %p440 = scmp.lt.s32.totalorder %s21, 1
      %s441 = scalar_select %p440, %s21, 1
      %p442 = scmp.lt.s32.totalorder %s22, 3
      %s443 = scalar_select %p442, %s22, 3
      %s444 = smul.addr %s443, 2
      %s445 = smul.addr %s441, 8
      %s446 = sadd.s32 %s444, %s445
      %s447 = smul.addr %s446, 8
      %s448 = scalar_lea.vmem %s3, %s447
      %p449 = scmp.lt.s32.totalorder %s21, 1
      %s450 = scalar_select %p449, %s21, 1
      %p451 = scmp.lt.s32.totalorder %s22, 3
      %s452 = scalar_select %p451, %s22, 3
      %s453 = smul.addr %s450, 4
      %s454 = sadd.s32 %s452, %s453
      %s455 = smul.addr %s454, 2
      %s456 = scalar_lea.vmem %s4, %s455
      // Predicated region
      $region41: #{resblock3d_forward.8} parent=31 // pred_check
        %p457 = pneg %p127
      $region42: #{resblock3d_forward.8} parent=31 // pred_check_branch
        %459 = sbr.rel (%p457) target = $region44
      $region43: #{resblock3d_forward.8} parent=31 // pred_region
        _
      $region44: #{resblock3d_forward.8} parent=31 // pred_fallthru
        _
      // Predicated region
      $region45: #{resblock3d_forward.8} parent=31 // pred_check
        %p460 = pneg %p155
      $region46: #{resblock3d_forward.8} parent=31 // pred_check_branch
        %462 = sbr.rel (%p460) target = $region48
      $region47: #{resblock3d_forward.8} parent=31 // pred_region
        _
      $region48: #{resblock3d_forward.8} parent=31 // pred_fallthru
        _
    $region32: #{resblock3d_forward.8} parent=5 // pred_fallthru
      _
    %p463 = scmp.le.s32.totalorder 2, %s11
    // Predicated region
    $region49: #{resblock3d_forward.8} parent=5 // pred_check
      %p464 = pneg %p463
    $region50: #{resblock3d_forward.8} parent=5 // pred_check_branch
      %466 = sbr.rel (%p464) target = $region52
    $region51: #{resblock3d_forward.8} parent=5 // pred_region
      %s467 = ssub.s32 %s11, 2
      // Predicated region
      $region53: #{resblock3d_forward.8} parent=51 // pred_check
        %p468 = pneg %p133
      $region54: #{resblock3d_forward.8} parent=51 // pred_check_branch
        %470 = sbr.rel (%p468) target = $region56
      $region55: #{resblock3d_forward.8} parent=51 // pred_region
        %p471 = scmp.lt.s32.totalorder %s24, 1
        %s472 = scalar_select %p471, %s24, 1
        %p473 = scmp.lt.s32.totalorder %s25, 3
        %s474 = scalar_select %p473, %s25, 3
        %s475 = smul.addr %s474, 2
        %s476 = smul.addr %s472, 8
        %s477 = sadd.s32 %s475, %s476
        %s478 = smul.addr %s477, 8
        %s479 = scalar_lea.vmem %s3, %s478
      $region56: #{resblock3d_forward.8} parent=51 // pred_fallthru
        _
      // Predicated region
      $region57: #{resblock3d_forward.8} parent=51 // pred_check
        %p480 = pneg %p161
      $region58: #{resblock3d_forward.8} parent=51 // pred_check_branch
        %482 = sbr.rel (%p480) target = $region60
      $region59: #{resblock3d_forward.8} parent=51 // pred_region
        %p483 = scmp.lt.s32.totalorder %s24, 1
        %s484 = scalar_select %p483, %s24, 1
        %p485 = scmp.lt.s32.totalorder %s25, 3
        %s486 = scalar_select %p485, %s25, 3
        %s487 = smul.addr %s484, 4
        %s488 = sadd.s32 %s486, %s487
        %s489 = smul.addr %s488, 2
        %s490 = scalar_lea.vmem %s4, %s489
      $region60: #{resblock3d_forward.8} parent=51 // pred_fallthru
        _
    $region52: #{resblock3d_forward.8} parent=5 // pred_fallthru
      _
  $region6: #{resblock3d_forward.8} parent=0 // loop_footer
    %s15 = sadd.s32 1, %s11
  $region7: #{resblock3d_forward.8} parent=0 // loop_footer_branch
    %10 = sbr.rel target = $region3
  $region8: #{resblock3d_forward.8} parent=0 // loop_exit
    _

// kernel: resblock3d_forward.7
$region0: #{resblock3d_forward.7}
  #allocation0 [shape = 'u32[]', space=smem, size = 0x4, offset = 0x4, fixed_abs, tag = 'smem constant byte address 0x4 - core index']
  #allocation1 [shape = 'u32[144,128]{1,0:T(1,128)}', space=vmem, size = 0x12000, scoped, tag = 'internal scratch']
  #allocation2 [shape = 'f32[24,128]{1,0:T(8,128)}', space=vmem, size = 0x3000, scoped, tag = 'scratch operand']
  %s0 = inlined_call_operand.vmem [shape: bf16[2,6,38,128], index: 0, kind: input, shape index: {}]
  %s1 = inlined_call_operand.vmem [shape: bf16[27,128,128], index: 1, kind: input, shape index: {}]
  %s2 = inlined_call_operand.vmem [shape: f32[24,1], index: 2, kind: input, shape index: {}]
  %s3 = inlined_call_operand.vmem [shape: f32[2,4,24,128], index: 3, kind: output, shape index: {0}]
  %s4 = inlined_call_operand.vmem [shape: f32[2,4,2,128], index: 4, kind: output, shape index: {1}]
  %5 = xla_tuple %s3, %s4
  %s6 = sld [smem:[#allocation0]]
  $region61: #{resblock3d_forward.7} parent=0
    _
  %s8 = ssub.s32 1, %s6
  %s9 = scalar_select 0, %s8, %s6
  loop: start=0, step=1, limit=26
  $region2: #{resblock3d_forward.7} parent=0 // loop_pre_header
    _
  $region3: #{resblock3d_forward.7} parent=0 // loop_header
    %s11 = sphi 0, %s15
    %p12 = scmp.ge.s32.totalorder %s11, 26
    %s18 = sphi 0, %s37
    %s19 = sphi 0, %s33
    %s20 = sphi 0, %s29
    %s21 = sphi 0, %s18
    %s22 = sphi 0, %s19
    %s23 = sphi 0, %s20
    %s24 = sphi 0, %s21
    %s25 = sphi 0, %s22
    %s26 = sphi 0, %s23
    %s44 = sphi 0, %s46
    %s47 = sphi 0, %s44
    %s48 = sphi 0, %s47
    %s64 = sphi 0, %s48
    %s68 = sphi 0, %s68
    %s70 = sphi 0, %s68
    %s71 = sphi 0, %s70
    %s85 = sphi 0, %s71
    %s89 = sphi 0, %s89
    %s91 = sphi 0, %s89
    %s92 = sphi 0, %s91
    %s106 = sphi 0, %s92
    %s114 = sphi 0, %s116
    %s117 = sphi 0, %s114
    %s118 = sphi 0, %s117
    %s134 = sphi 0, %s118
    %s142 = sphi 0, %s144
    %s145 = sphi 0, %s142
    %s146 = sphi 0, %s145
    %s162 = sphi 0, %s146
  $region4: #{resblock3d_forward.7} parent=0 // loop_header_branch
    %14 = sbr.rel (%p12) target = $region8
  $region5: #{resblock3d_forward.7} parent=0 // loop_body
    %s16 = ssub.s32 %s11, 1
    %s17 = ssub.s32 %s11, 2
    %s27 = sadd.s32 1, %s20
    %p28 = scmp.ge.s32.totalorder %s27, 3
    %s29 = scalar_select %p28, 0, %s27
    %s30 = sadd.s32 1, %s19
    %s31 = scalar_select %p28, %s30, %s19
    %p32 = scmp.ge.s32.totalorder %s31, 4
    %s33 = scalar_select %p32, 0, %s31
    %s34 = sadd.s32 1, %s18
    %s35 = scalar_select %p32, %s34, %s18
    %p36 = scmp.ge.s32.totalorder %s35, 2
    %s37 = scalar_select %p36, 0, %s35
    %s38 = sadd.s32 %s19, %s20
    %s39 = sadd.s32 %s33, %s29
    %s40 = ssub.s32 %s18, %s37
    %s41 = ssub.s32 %s38, %s39
    %s42 = sor.u32 %s40, %s41
    %p43 = scmp.eq.s32.totalorder %s42, 0
    %s45 = sadd.s32 %s44, 1
    %s46 = scalar_select %p43, %s44, %s45
    %p49 = pneg %p43
    %p50 = scmp.eq.s32.totalorder %s11, 23
    %p51 = por %p49, %p50
    %p52 = scmp.ne.s32.totalorder %s44, %s47
    %p53 = scmp.eq.s32.totalorder %s11, 0
    %p54 = por %p52, %p53
    %p55 = scmp.ne.s32.totalorder %s44, %s47
    %p56 = scmp.eq.s32.totalorder %s16, 23
    %p57 = por %p55, %p56
    %p58 = scmp.ne.s32.totalorder %s47, %s48
    %p59 = scmp.eq.s32.totalorder %s16, 0
    %p60 = por %p58, %p59
    %p61 = scmp.ne.s32.totalorder %s47, %s48
    %p62 = scmp.eq.s32.totalorder %s17, 23
    %p63 = por %p61, %p62
    %p65 = scmp.ne.s32.totalorder %s48, %s64
    %p66 = scmp.eq.s32.totalorder %s17, 0
    %p67 = por %p65, %p66
    %s69 = sadd.s32 %s68, 1
    %p72 = scmp.eq.s32.totalorder %s11, 23
    %p73 = scmp.ne.s32.totalorder %s68, %s70
    %p74 = scmp.eq.s32.totalorder %s11, 0
    %p75 = por %p73, %p74
    %p76 = scmp.ne.s32.totalorder %s68, %s70
    %p77 = scmp.eq.s32.totalorder %s16, 23
    %p78 = por %p76, %p77
    %p79 = scmp.ne.s32.totalorder %s70, %s71
    %p80 = scmp.eq.s32.totalorder %s16, 0
    %p81 = por %p79, %p80
    %p82 = scmp.ne.s32.totalorder %s70, %s71
    %p83 = scmp.eq.s32.totalorder %s17, 23
    %p84 = por %p82, %p83
    %p86 = scmp.ne.s32.totalorder %s71, %s85
    %p87 = scmp.eq.s32.totalorder %s17, 0
    %p88 = por %p86, %p87
    %s90 = sadd.s32 %s89, 1
    %p93 = scmp.eq.s32.totalorder %s11, 23
    %p94 = scmp.ne.s32.totalorder %s89, %s91
    %p95 = scmp.eq.s32.totalorder %s11, 0
    %p96 = por %p94, %p95
    %p97 = scmp.ne.s32.totalorder %s89, %s91
    %p98 = scmp.eq.s32.totalorder %s16, 23
    %p99 = por %p97, %p98
    %p100 = scmp.ne.s32.totalorder %s91, %s92
    %p101 = scmp.eq.s32.totalorder %s16, 0
    %p102 = por %p100, %p101
    %p103 = scmp.ne.s32.totalorder %s91, %s92
    %p104 = scmp.eq.s32.totalorder %s17, 23
    %p105 = por %p103, %p104
    %p107 = scmp.ne.s32.totalorder %s92, %s106
    %p108 = scmp.eq.s32.totalorder %s17, 0
    %p109 = por %p107, %p108
    %s110 = ssub.s32 %s18, %s37
    %s111 = ssub.s32 %s19, %s33
    %s112 = sor.u32 %s110, %s111
    %p113 = scmp.eq.s32.totalorder %s112, 0
    %s115 = sadd.s32 %s114, 1
    %s116 = scalar_select %p113, %s114, %s115
    %p119 = pneg %p113
    %p120 = scmp.eq.s32.totalorder %s11, 23
    %p121 = por %p119, %p120
    %p122 = scmp.ne.s32.totalorder %s114, %s117
    %p123 = scmp.eq.s32.totalorder %s11, 0
    %p124 = por %p122, %p123
    %p125 = scmp.ne.s32.totalorder %s114, %s117
    %p126 = scmp.eq.s32.totalorder %s16, 23
    %p127 = por %p125, %p126
    %p128 = scmp.ne.s32.totalorder %s117, %s118
    %p129 = scmp.eq.s32.totalorder %s16, 0
    %p130 = por %p128, %p129
    %p131 = scmp.ne.s32.totalorder %s117, %s118
    %p132 = scmp.eq.s32.totalorder %s17, 23
    %p133 = por %p131, %p132
    %p135 = scmp.ne.s32.totalorder %s118, %s134
    %p136 = scmp.eq.s32.totalorder %s17, 0
    %p137 = por %p135, %p136
    %s138 = ssub.s32 %s18, %s37
    %s139 = ssub.s32 %s19, %s33
    %s140 = sor.u32 %s138, %s139
    %p141 = scmp.eq.s32.totalorder %s140, 0
    %s143 = sadd.s32 %s142, 1
    %s144 = scalar_select %p141, %s142, %s143
    %p147 = pneg %p141
    %p148 = scmp.eq.s32.totalorder %s11, 23
    %p149 = por %p147, %p148
    %p150 = scmp.ne.s32.totalorder %s142, %s145
    %p151 = scmp.eq.s32.totalorder %s11, 0
    %p152 = por %p150, %p151
    %p153 = scmp.ne.s32.totalorder %s142, %s145
    %p154 = scmp.eq.s32.totalorder %s16, 23
    %p155 = por %p153, %p154
    %p156 = scmp.ne.s32.totalorder %s145, %s146
    %p157 = scmp.eq.s32.totalorder %s16, 0
    %p158 = por %p156, %p157
    %p159 = scmp.ne.s32.totalorder %s145, %s146
    %p160 = scmp.eq.s32.totalorder %s17, 23
    %p161 = por %p159, %p160
    %p163 = scmp.ne.s32.totalorder %s146, %s162
    %p164 = scmp.eq.s32.totalorder %s17, 0
    %p165 = por %p163, %p164
    %p166 = scmp.le.s32.totalorder 1, %s11
    %p167 = scmp.lt.s32.totalorder %s11, 25
    %p168 = pnand %p166, %p167
    %p169 = pneg %p168
    // Predicated region
    $region9: #{resblock3d_forward.7} parent=5 // pred_check
      _
    $region10: #{resblock3d_forward.7} parent=5 // pred_check_branch
      %171 = sbr.rel (%p168) target = $region12
    $region11: #{resblock3d_forward.7} parent=5 // pred_region
      %s172 = ssub.s32 %s11, 1
      // Predicated region
      $region13: #{resblock3d_forward.7} parent=11 // pred_check
        %p173 = pneg %p81
      $region14: #{resblock3d_forward.7} parent=11 // pred_check_branch
        %175 = sbr.rel (%p173) target = $region16
      $region15: #{resblock3d_forward.7} parent=11 // pred_region
        _
      $region16: #{resblock3d_forward.7} parent=11 // pred_fallthru
        _
      // Predicated region
      $region17: #{resblock3d_forward.7} parent=11 // pred_check
        %p176 = pneg %p102
      $region18: #{resblock3d_forward.7} parent=11 // pred_check_branch
        %178 = sbr.rel (%p176) target = $region20
      $region19: #{resblock3d_forward.7} parent=11 // pred_region
        _
      $region20: #{resblock3d_forward.7} parent=11 // pred_fallthru
        _
    $region12: #{resblock3d_forward.7} parent=5 // pred_fallthru
      _
    %p179 = scmp.lt.s32.totalorder %s11, 24
    // Predicated region
    $region21: #{resblock3d_forward.7} parent=5 // pred_check
      %p180 = pneg %p179
    $region22: #{resblock3d_forward.7} parent=5 // pred_check_branch
      %182 = sbr.rel (%p180) target = $region24
    $region23: #{resblock3d_forward.7} parent=5 // pred_region
      // Predicated region
      $region25: #{resblock3d_forward.7} parent=23 // pred_check
        %p183 = pneg %p54
      $region26: #{resblock3d_forward.7} parent=23 // pred_check_branch
        %185 = sbr.rel (%p183) target = $region28
      $region27: #{resblock3d_forward.7} parent=23 // pred_region
        %s186 = sadd.s32 %s19, %s20
        %p187 = scmp.lt.s32.totalorder %s18, 1
        %s188 = scalar_select %p187, %s18, 1
        %p189 = scmp.lt.s32.totalorder %s186, 5
        %s190 = scalar_select %p189, %s186, 5
        %s191 = smul.addr %s190, 5
        %s192 = smul.addr %s188, 30
        %s193 = sadd.s32 %s191, %s192
        %s194 = smul.addr %s193, 4
        %s195 = scalar_lea.vmem %s0, %s194
        %s196 = sadd.s32 %s19, %s20
      $region28: #{resblock3d_forward.7} parent=23 // pred_fallthru
        _
    $region24: #{resblock3d_forward.7} parent=5 // pred_fallthru
      _
    %p197 = scmp.le.s32.totalorder 1, %s11
    %p198 = scmp.lt.s32.totalorder %s11, 25
    %p199 = pnand %p197, %p198
    %p200 = pneg %p199
    // Predicated region
    $region29: #{resblock3d_forward.7} parent=5 // pred_check
      _
    $region30: #{resblock3d_forward.7} parent=5 // pred_check_branch
      %202 = sbr.rel (%p199) target = $region32
    $region31: #{resblock3d_forward.7} parent=5 // pred_region
      %s203 = ssub.s32 %s11, 1
      %s204 = sadd.s32 %s22, %s23
      %p205 = scmp.lt.s32.totalorder %s21, 1
      %s206 = scalar_select %p205, %s21, 1
      %p207 = scmp.lt.s32.totalorder %s204, 5
      %s208 = scalar_select %p207, %s204, 5
      %s209 = smul.addr %s208, 5
      %s210 = smul.addr %s206, 30
      %s211 = sadd.s32 %s209, %s210
      %s212 = smul.addr %s211, 4
      %s213 = scalar_lea.vmem %s0, %s212
      %p214 = pneg %p60
      %p215 = pneg %p57
      %p216 = pneg %p81
      %p217 = pneg %p78
      %p218 = pneg %p102
      %p219 = pneg %p99
      %p220 = pneg %p130
      %p221 = pneg %p127
      %p222 = scmp.lt.s32.totalorder %s21, 1
      %s223 = scalar_select %p222, %s21, 1
      %p224 = scmp.lt.s32.totalorder %s22, 3
      %s225 = scalar_select %p224, %s22, 3
      %s226 = smul.addr %s225, 3
      %s227 = smul.addr %s223, 12
      %s228 = sadd.s32 %s226, %s227
      %s229 = smul.addr %s228, 8
      %s230 = scalar_lea.vmem %s3, %s229
      %p231 = pneg %p158
      %p232 = pneg %p155
      %p233 = scmp.lt.s32.totalorder %s21, 1
      %s234 = scalar_select %p233, %s21, 1
      %p235 = scmp.lt.s32.totalorder %s22, 3
      %s236 = scalar_select %p235, %s22, 3
      %s237 = smul.addr %s234, 4
      %s238 = sadd.s32 %s236, %s237
      %s239 = smul.addr %s238, 2
      %s240 = scalar_lea.vmem %s4, %s239
      %s241 = sadd.s32 %s22, %s23
      %p242 = scmp.lt.s32.totalorder %s21, 1
      %s243 = scalar_select %p242, %s21, 1
      %p244 = scmp.lt.s32.totalorder %s241, 5
      %s245 = scalar_select %p244, %s241, 5
      %s246 = smul.addr %s245, 5
      %s247 = smul.addr %s243, 30
      %s248 = sadd.s32 %s246, %s247
      %s249 = smul.addr %s248, 4
      %s250 = scalar_lea.vmem %s0, %s249
      %s251 = sadd.s32 %s22, %s23
      %p252 = scmp.lt.s32.totalorder %s21, 1
      %s253 = scalar_select %p252, %s21, 1
      %p254 = scmp.lt.s32.totalorder %s22, 3
      %s255 = scalar_select %p254, %s22, 3
      %s256 = smul.addr %s255, 3
      %s257 = smul.addr %s253, 12
      %s258 = sadd.s32 %s256, %s257
      %s259 = smul.addr %s258, 8
      %s260 = scalar_lea.vmem %s3, %s259
      %p261 = scmp.lt.s32.totalorder %s21, 1
      %s262 = scalar_select %p261, %s21, 1
      %p263 = scmp.lt.s32.totalorder %s22, 3
      %s264 = scalar_select %p263, %s22, 3
      %s265 = smul.addr %s262, 4
      %s266 = sadd.s32 %s264, %s265
      %s267 = smul.addr %s266, 2
      %s268 = scalar_lea.vmem %s4, %s267
      %p270 = scmp.eq.s32.totalorder %s23, 0
      // Predicated region
      $region33: #{resblock3d_forward.7} parent=31 // pred_check
        %p271 = pneg %p270
      $region34: #{resblock3d_forward.7} parent=31 // pred_check_branch
        %273 = sbr.rel (%p271) target = $region36
      $region35: #{resblock3d_forward.7} parent=31 // pred_region
        %274 = vst [vmem:[#allocation2] sm:$0xff] 0.0
        %275 = vst [vmem:[#allocation2 + $0x8] sm:$0xff] 0.0
        %276 = vst [vmem:[#allocation2 + $0x10] sm:$0xff] 0.0
      $region36: #{resblock3d_forward.7} parent=31 // pred_fallthru
        _
      %v277 = vld [vmem:[%s250] sm:$0xf]
      %v278 = vld [vmem:[%s250 + $0x4] sm:$0xf]
      %v279 = vld [vmem:[%s250 + $0x8] sm:$0xf]
      %s280 = smul.u32 %s23, 9
      %s281 = smul.u32 %s280, 16
      %s282 = smul.addr %s281, 4
      %s283 = scalar_lea.vmem %s1, %s282
      %v284 = vld [vmem:[%s283] sm:$0xf]
      %v285 = vld [vmem:[%s283 + $0x4] sm:$0xf]
      %v286 = vld [vmem:[%s283 + $0x8] sm:$0xf]
      %v287 = vld [vmem:[%s283 + $0xc] sm:$0xf]
      %v288 = vld [vmem:[%s283 + $0x10] sm:$0xf]
      %v289 = vld [vmem:[%s283 + $0x14] sm:$0xf]
      %v290 = vld [vmem:[%s283 + $0x18] sm:$0xf]
      %v291 = vld [vmem:[%s283 + $0x1c] sm:$0xf]
      %v292 = vld [vmem:[%s283 + $0x20] sm:$0xf]
      %v293 = vld [vmem:[%s283 + $0x24] sm:$0xf]
      %v294 = vld [vmem:[%s283 + $0x28] sm:$0xf]
      %v295 = vld [vmem:[%s283 + $0x2c] sm:$0xf]
      %v296 = vld [vmem:[%s283 + $0x30] sm:$0xf]
      %v297 = vld [vmem:[%s283 + $0x34] sm:$0xf]
      %v298 = vld [vmem:[%s283 + $0x38] sm:$0xf]
      %v299 = vld [vmem:[%s283 + $0x3c] sm:$0xf]
      %v300 = vld [vmem:[%s250 + $0xc] sm:$0x1]
      %s301 = sadd.s32 %s280, 1
      %s302 = smul.u32 %s301, 16
      %s303 = smul.addr %s302, 4
      %s304 = scalar_lea.vmem %s1, %s303
      %v305 = vld [vmem:[%s304] sm:$0xf]
      %v306 = vld [vmem:[%s304 + $0x4] sm:$0xf]
      %v307 = vld [vmem:[%s304 + $0x8] sm:$0xf]
      %v308 = vld [vmem:[%s304 + $0xc] sm:$0xf]
      %v309 = vld [vmem:[%s304 + $0x10] sm:$0xf]
      %v310 = vld [vmem:[%s304 + $0x14] sm:$0xf]
      %v311 = vld [vmem:[%s304 + $0x18] sm:$0xf]
      %v312 = vld [vmem:[%s304 + $0x1c] sm:$0xf]
      %v313 = vld [vmem:[%s304 + $0x20] sm:$0xf]
      %v314 = vld [vmem:[%s304 + $0x24] sm:$0xf]
      %v315 = vld [vmem:[%s304 + $0x28] sm:$0xf]
      %v316 = vld [vmem:[%s304 + $0x2c] sm:$0xf]
      %v317 = vld [vmem:[%s304 + $0x30] sm:$0xf]
      %v318 = vld [vmem:[%s304 + $0x34] sm:$0xf]
      %v319 = vld [vmem:[%s304 + $0x38] sm:$0xf]
      %v320 = vld [vmem:[%s304 + $0x3c] sm:$0xf]
      %v325 = vunpack.c.l.b16 %v277
      %v326 = vunpack.c.l.b16 %v278
      %v327 = vunpack.c.l.b16 %v279
      %v328 = vunpack.c.l.b16 %v300
      %v329 = vpack.c.b16 %v326, %v325
      %v330 = vpack.c.b16 %v328, %v327
      %vm331 = vsmask.f32 7424
      %v333 = vshrl.u32 %v329, 16
      %v335 = vshll.u32 %v329, 16
      %v337 = vrot.slane %v335, 1
      %v338 = vor.u32 %v333, %v337
      %v340 = vshll.u32 %v330, 16
      %v342 = vrot.slane %v340, 1
      %v343 = vsel %vm331, %v338, %v342
      %v344 = vshrl.u32 %v330, 16
      %v346 = vor.u32 %v344, %v342
      %v365 = vunpack.c.l.b16 %v305
      %v366 = vunpack.c.l.b16 %v306
      %v367 = vunpack.c.l.b16 %v307
      %v368 = vunpack.c.l.b16 %v308
      %v369 = vunpack.c.l.b16 %v309
      %v370 = vunpack.c.l.b16 %v310
      %v371 = vunpack.c.l.b16 %v311
      %v372 = vunpack.c.l.b16 %v312
      %v373 = vunpack.c.l.b16 %v313
      %v374 = vunpack.c.l.b16 %v314
      %v375 = vunpack.c.l.b16 %v315
      %v376 = vunpack.c.l.b16 %v316
      %v377 = vunpack.c.l.b16 %v317
      %v378 = vunpack.c.l.b16 %v318
      %v379 = vunpack.c.l.b16 %v319
      %v380 = vunpack.c.l.b16 %v320
      %v381 = vpack.c.b16 %v366, %v365
      %v382 = vpack.c.b16 %v368, %v367
      %v383 = vpack.c.b16 %v370, %v369
      %v384 = vpack.c.b16 %v372, %v371
      %v385 = vpack.c.b16 %v374, %v373
      %v386 = vpack.c.b16 %v376, %v375
      %v387 = vpack.c.b16 %v378, %v377
      %v388 = vpack.c.b16 %v380, %v379
      %397 = vmatprep.subr.bf16.mxu0 0
      %398 = vmatpush1.bf16.msra.mxu0 %v381
      %399 = vmatprep.subr.bf16.mxu0 0
      %400 = vmatpush1.bf16.msra.mxu0 %v382
      %401 = vmatprep.subr.bf16.mxu0 0
      %402 = vmatpush1.bf16.msra.mxu0 %v383
      %403 = vmatprep.subr.bf16.mxu0 0
      %404 = vmatpush1.bf16.msra.mxu0 %v384
      %405 = vmatprep.subr.bf16.mxu0 0
      %406 = vmatpush1.bf16.msra.mxu0 %v385
      %407 = vmatprep.subr.bf16.mxu0 0
      %408 = vmatpush1.bf16.msra.mxu0 %v386
      %409 = vmatprep.subr.bf16.mxu0 0
      %410 = vmatpush1.bf16.msra.mxu0 %v387
      %411 = vmatprep.subr.bf16.mxu0 0
      %412 = vmatpush1.bf16.msra.mxu0 %v388
      %413 = vmatprep.subr.bf16.mxu0 0
      %414 = vmatpush1.bf16.msra.mxu0 0
      %415 = vmatprep.subr.bf16.mxu0 0
      %416 = vmatpush1.bf16.msra.mxu0 0
      %417 = vmatprep.subr.bf16.mxu0 0
      %418 = vmatpush1.bf16.msra.mxu0 0
      %419 = vmatprep.subr.bf16.mxu0 0
      %420 = vmatpush1.bf16.msra.mxu0 0
      %421 = vmatprep.subr.bf16.mxu0 0
      %422 = vmatpush1.bf16.msra.mxu0 0
      %423 = vmatprep.subr.bf16.mxu0 0
      %424 = vmatpush1.bf16.msra.mxu0 0
      %425 = vmatprep.subr.bf16.mxu0 0
      %426 = vmatpush1.bf16.msra.mxu0 0
      %427 = vmatprep.subr.bf16.mxu0 0
      %428 = vmatpush1.bf16.msra.mxu0 0
      %429 = vmatprep.mubr.bf16.mxu0 0
      %430 = vmatmul.mubr.bf16.gmra.mrb[0].mxu0 %v343
      %v431 = vpop.f32.mrb[0].mxu0
      %v432 = vadd.f32 0.0, %v431
      %v433 = vpop.f32.mrb[0].mxu0
      %v434 = vpop.f32.mrb[0].mxu0
      %v435 = vadd.f32 0.0, %v434
      %v436 = vpop.f32.mrb[0].mxu0
      %437 = vmatprep.mubr.bf16.mxu0 0
      %438 = vmatmul.mubr.bf16.gmra.mrb[0].mxu0 %v346
      %v439 = vpop.f32.mrb[0].mxu0
      %v440 = vadd.f32 0.0, %v439
      %v441 = vpop.f32.mrb[0].mxu0
      %v442 = vpop.f32.mrb[0].mxu0
      %v443 = vpop.f32.mrb[0].mxu0
      %444 = vdwg.mxu0
      %v445 = vpack.c.b16 %v327, %v327
      %v464 = vunpack.c.l.b16 %v284
      %v465 = vunpack.c.l.b16 %v285
      %v466 = vunpack.c.l.b16 %v286
      %v467 = vunpack.c.l.b16 %v287
      %v468 = vunpack.c.l.b16 %v288
      %v469 = vunpack.c.l.b16 %v289
      %v470 = vunpack.c.l.b16 %v290
      %v471 = vunpack.c.l.b16 %v291
      %v472 = vunpack.c.l.b16 %v292
      %v473 = vunpack.c.l.b16 %v293
      %v474 = vunpack.c.l.b16 %v294
      %v475 = vunpack.c.l.b16 %v295
      %v476 = vunpack.c.l.b16 %v296
      %v477 = vunpack.c.l.b16 %v297
      %v478 = vunpack.c.l.b16 %v298
      %v479 = vunpack.c.l.b16 %v299
      %v480 = vpack.c.b16 %v465, %v464
      %v481 = vpack.c.b16 %v467, %v466
      %v482 = vpack.c.b16 %v469, %v468
      %v483 = vpack.c.b16 %v471, %v470
      %v484 = vpack.c.b16 %v473, %v472
      %v485 = vpack.c.b16 %v475, %v474
      %v486 = vpack.c.b16 %v477, %v476
      %v487 = vpack.c.b16 %v479, %v478
      %496 = vmatprep.subr.bf16.mxu0 0
      %497 = vmatpush1.bf16.msra.mxu0 %v480
      %498 = vmatprep.subr.bf16.mxu0 0
      %499 = vmatpush1.bf16.msra.mxu0 %v481
      %500 = vmatprep.subr.bf16.mxu0 0
      %501 = vmatpush1.bf16.msra.mxu0 %v482
      %502 = vmatprep.subr.bf16.mxu0 0
      %503 = vmatpush1.bf16.msra.mxu0 %v483
      %504 = vmatprep.subr.bf16.mxu0 0
      %505 = vmatpush1.bf16.msra.mxu0 %v484
      %506 = vmatprep.subr.bf16.mxu0 0
      %507 = vmatpush1.bf16.msra.mxu0 %v485
      %508 = vmatprep.subr.bf16.mxu0 0
      %509 = vmatpush1.bf16.msra.mxu0 %v486
      %510 = vmatprep.subr.bf16.mxu0 0
      %511 = vmatpush1.bf16.msra.mxu0 %v487
      %512 = vmatprep.subr.bf16.mxu0 0
      %513 = vmatpush1.bf16.msra.mxu0 0
      %514 = vmatprep.subr.bf16.mxu0 0
      %515 = vmatpush1.bf16.msra.mxu0 0
      %516 = vmatprep.subr.bf16.mxu0 0
      %517 = vmatpush1.bf16.msra.mxu0 0
      %518 = vmatprep.subr.bf16.mxu0 0
      %519 = vmatpush1.bf16.msra.mxu0 0
      %520 = vmatprep.subr.bf16.mxu0 0
      %521 = vmatpush1.bf16.msra.mxu0 0
      %522 = vmatprep.subr.bf16.mxu0 0
      %523 = vmatpush1.bf16.msra.mxu0 0
      %524 = vmatprep.subr.bf16.mxu0 0
      %525 = vmatpush1.bf16.msra.mxu0 0
      %526 = vmatprep.subr.bf16.mxu0 0
      %527 = vmatpush1.bf16.msra.mxu0 0
      %528 = vmatprep.mubr.bf16.mxu0 0
      %529 = vmatmul.mubr.bf16.gmra.mrb[0].mxu0 %v329
      %v530 = vpop.f32.mrb[0].mxu0
      %v531 = vadd.f32 %v432, %v530
      %v532 = vpop.f32.mrb[0].mxu0
      %v533 = vpop.f32.mrb[0].mxu0
      %v534 = vadd.f32 %v435, %v533
      %v535 = vpop.f32.mrb[0].mxu0
      %536 = vmatprep.mubr.bf16.mxu0 0
      %537 = vmatmul.mubr.bf16.gmra.mrb[0].mxu0 %v445
      %v538 = vpop.f32.mrb[0].mxu0
      %v539 = vadd.f32 %v440, %v538
      %v540 = vpop.f32.mrb[0].mxu0
      %v541 = vpop.f32.mrb[0].mxu0
      %v542 = vpop.f32.mrb[0].mxu0
      %543 = vdwg.mxu0
      %v544 = vld [vmem:[%s250] sm:$0xe]
      %s545 = sadd.s32 %s280, 2
      %s546 = smul.u32 %s545, 16
      %s547 = smul.addr %s546, 4
      %s548 = scalar_lea.vmem %s1, %s547
      %v549 = vld [vmem:[%s548] sm:$0xf]
      %v550 = vld [vmem:[%s548 + $0x4] sm:$0xf]
      %v551 = vld [vmem:[%s548 + $0x8] sm:$0xf]
      %v552 = vld [vmem:[%s548 + $0xc] sm:$0xf]
      %v553 = vld [vmem:[%s548 + $0x10] sm:$0xf]
      %v554 = vld [vmem:[%s548 + $0x14] sm:$0xf]
      %v555 = vld [vmem:[%s548 + $0x18] sm:$0xf]
      %v556 = vld [vmem:[%s548 + $0x1c] sm:$0xf]
      %v557 = vld [vmem:[%s548 + $0x20] sm:$0xf]
      %v558 = vld [vmem:[%s548 + $0x24] sm:$0xf]
      %v559 = vld [vmem:[%s548 + $0x28] sm:$0xf]
      %v560 = vld [vmem:[%s548 + $0x2c] sm:$0xf]
      %v561 = vld [vmem:[%s548 + $0x30] sm:$0xf]
      %v562 = vld [vmem:[%s548 + $0x34] sm:$0xf]
      %v563 = vld [vmem:[%s548 + $0x38] sm:$0xf]
      %v564 = vld [vmem:[%s548 + $0x3c] sm:$0xf]
      %v566 = vunpack.c.l.b16 %v544
      %v567 = vpack.c.b16 %v326, %v566
      %vm568 = vcmask 1046528
      %v569 = vrot.slane %v567, 1
      %v570 = vrot.slane %v330, 1
      %v571 = vsel %vm568, %v569, %v570
      %v590 = vunpack.c.l.b16 %v549
      %v591 = vunpack.c.l.b16 %v550
      %v592 = vunpack.c.l.b16 %v551
      %v593 = vunpack.c.l.b16 %v552
      %v594 = vunpack.c.l.b16 %v553
      %v595 = vunpack.c.l.b16 %v554
      %v596 = vunpack.c.l.b16 %v555
      %v597 = vunpack.c.l.b16 %v556
      %v598 = vunpack.c.l.b16 %v557
      %v599 = vunpack.c.l.b16 %v558
      %v600 = vunpack.c.l.b16 %v559
      %v601 = vunpack.c.l.b16 %v560
      %v602 = vunpack.c.l.b16 %v561
      %v603 = vunpack.c.l.b16 %v562
      %v604 = vunpack.c.l.b16 %v563
      %v605 = vunpack.c.l.b16 %v564
      %v606 = vpack.c.b16 %v591, %v590
      %v607 = vpack.c.b16 %v593, %v592
      %v608 = vpack.c.b16 %v595, %v594
      %v609 = vpack.c.b16 %v597, %v596
      %v610 = vpack.c.b16 %v599, %v598
      %v611 = vpack.c.b16 %v601, %v600
      %v612 = vpack.c.b16 %v603, %v602
      %v613 = vpack.c.b16 %v605, %v604
      %622 = vmatprep.subr.bf16.mxu0 0
      %623 = vmatpush1.bf16.msra.mxu0 %v606
      %624 = vmatprep.subr.bf16.mxu0 0
      %625 = vmatpush1.bf16.msra.mxu0 %v607
      %626 = vmatprep.subr.bf16.mxu0 0
      %627 = vmatpush1.bf16.msra.mxu0 %v608
      %628 = vmatprep.subr.bf16.mxu0 0
      %629 = vmatpush1.bf16.msra.mxu0 %v609
      %630 = vmatprep.subr.bf16.mxu0 0
      %631 = vmatpush1.bf16.msra.mxu0 %v610
      %632 = vmatprep.subr.bf16.mxu0 0
      %633 = vmatpush1.bf16.msra.mxu0 %v611
      %634 = vmatprep.subr.bf16.mxu0 0
      %635 = vmatpush1.bf16.msra.mxu0 %v612
      %636 = vmatprep.subr.bf16.mxu0 0
      %637 = vmatpush1.bf16.msra.mxu0 %v613
      %638 = vmatprep.subr.bf16.mxu0 0
      %639 = vmatpush1.bf16.msra.mxu0 0
      %640 = vmatprep.subr.bf16.mxu0 0
      %641 = vmatpush1.bf16.msra.mxu0 0
      %642 = vmatprep.subr.bf16.mxu0 0
      %643 = vmatpush1.bf16.msra.mxu0 0
      %644 = vmatprep.subr.bf16.mxu0 0
      %645 = vmatpush1.bf16.msra.mxu0 0
      %646 = vmatprep.subr.bf16.mxu0 0
      %647 = vmatpush1.bf16.msra.mxu0 0
      %648 = vmatprep.subr.bf16.mxu0 0
      %649 = vmatpush1.bf16.msra.mxu0 0
      %650 = vmatprep.subr.bf16.mxu0 0
      %651 = vmatpush1.bf16.msra.mxu0 0
      %652 = vmatprep.subr.bf16.mxu0 0
      %653 = vmatpush1.bf16.msra.mxu0 0
      %654 = vmatprep.mubr.bf16.mxu0 0
      %655 = vmatmul.mubr.bf16.gmra.mrb[0].mxu0 %v571
      %v656 = vpop.f32.mrb[0].mxu0
      %v657 = vadd.f32 0.0, %v656
      %v658 = vpop.f32.mrb[0].mxu0
      %v659 = vpop.f32.mrb[0].mxu0
      %v660 = vadd.f32 0.0, %v659
      %v661 = vpop.f32.mrb[0].mxu0
      %662 = vmatprep.mubr.bf16.mxu0 0
      %663 = vmatmul.mubr.bf16.gmra.mrb[0].mxu0 %v570
      %v664 = vpop.f32.mrb[0].mxu0
      %v665 = vadd.f32 0.0, %v664
      %v666 = vpop.f32.mrb[0].mxu0
      %v667 = vpop.f32.mrb[0].mxu0
      %v668 = vpop.f32.mrb[0].mxu0
      %669 = vdwg.mxu0
      %v670 = vadd.f32 %v531, %v657
      %v671 = vadd.f32 %v534, %v660
      %v672 = vadd.f32 %v539, %v665
      %v673 = vld [vmem:[%s250] sm:$0x8]
      %v674 = vld [vmem:[%s250 + $0xc] sm:$0x7]
      %s675 = sadd.s32 %s280, 3
      %s676 = smul.u32 %s675, 16
      %s677 = smul.addr %s676, 4
      %s678 = scalar_lea.vmem %s1, %s677
      %v679 = vld [vmem:[%s678] sm:$0xf]
      %v680 = vld [vmem:[%s678 + $0x4] sm:$0xf]
      %v681 = vld [vmem:[%s678 + $0x8] sm:$0xf]
      %v682 = vld [vmem:[%s678 + $0xc] sm:$0xf]
      %v683 = vld [vmem:[%s678 + $0x10] sm:$0xf]
      %v684 = vld [vmem:[%s678 + $0x14] sm:$0xf]
      %v685 = vld [vmem:[%s678 + $0x18] sm:$0xf]
      %v686 = vld [vmem:[%s678 + $0x1c] sm:$0xf]
      %v687 = vld [vmem:[%s678 + $0x20] sm:$0xf]
      %v688 = vld [vmem:[%s678 + $0x24] sm:$0xf]
      %v689 = vld [vmem:[%s678 + $0x28] sm:$0xf]
      %v690 = vld [vmem:[%s678 + $0x2c] sm:$0xf]
      %v691 = vld [vmem:[%s678 + $0x30] sm:$0xf]
      %v692 = vld [vmem:[%s678 + $0x34] sm:$0xf]
      %v693 = vld [vmem:[%s678 + $0x38] sm:$0xf]
      %v694 = vld [vmem:[%s678 + $0x3c] sm:$0xf]
      %v697 = vunpack.c.l.b16 %v673
      %v698 = vunpack.c.l.b16 %v674
      %v699 = vpack.c.b16 %v326, %v697
      %v700 = vpack.c.b16 %v698, %v327
      %vm701 = vcmask 1044480
      %v702 = vrot.slane %v699, 3
      %v703 = vrot.slane %v700, 3
      %v704 = vsel %vm701, %v702, %v703
      %v723 = vunpack.c.l.b16 %v679
      %v724 = vunpack.c.l.b16 %v680
      %v725 = vunpack.c.l.b16 %v681
      %v726 = vunpack.c.l.b16 %v682
      %v727 = vunpack.c.l.b16 %v683
      %v728 = vunpack.c.l.b16 %v684
      %v729 = vunpack.c.l.b16 %v685
      %v730 = vunpack.c.l.b16 %v686
      %v731 = vunpack.c.l.b16 %v687
      %v732 = vunpack.c.l.b16 %v688
      %v733 = vunpack.c.l.b16 %v689
      %v734 = vunpack.c.l.b16 %v690
      %v735 = vunpack.c.l.b16 %v691
      %v736 = vunpack.c.l.b16 %v692
      %v737 = vunpack.c.l.b16 %v693
      %v738 = vunpack.c.l.b16 %v694
      %v739 = vpack.c.b16 %v724, %v723
      %v740 = vpack.c.b16 %v726, %v725
      %v741 = vpack.c.b16 %v728, %v727
      %v742 = vpack.c.b16 %v730, %v729
      %v743 = vpack.c.b16 %v732, %v731
      %v744 = vpack.c.b16 %v734, %v733
      %v745 = vpack.c.b16 %v736, %v735
      %v746 = vpack.c.b16 %v738, %v737
      %755 = vmatprep.subr.bf16.mxu0 0
      %756 = vmatpush1.bf16.msra.mxu0 %v739
      %757 = vmatprep.subr.bf16.mxu0 0
      %758 = vmatpush1.bf16.msra.mxu0 %v740
      %759 = vmatprep.subr.bf16.mxu0 0
      %760 = vmatpush1.bf16.msra.mxu0 %v741
      %761 = vmatprep.subr.bf16.mxu0 0
      %762 = vmatpush1.bf16.msra.mxu0 %v742
      %763 = vmatprep.subr.bf16.mxu0 0
      %764 = vmatpush1.bf16.msra.mxu0 %v743
      %765 = vmatprep.subr.bf16.mxu0 0
      %766 = vmatpush1.bf16.msra.mxu0 %v744
      %767 = vmatprep.subr.bf16.mxu0 0
      %768 = vmatpush1.bf16.msra.mxu0 %v745
      %769 = vmatprep.subr.bf16.mxu0 0
      %770 = vmatpush1.bf16.msra.mxu0 %v746
      %771 = vmatprep.subr.bf16.mxu0 0
      %772 = vmatpush1.bf16.msra.mxu0 0
      %773 = vmatprep.subr.bf16.mxu0 0
      %774 = vmatpush1.bf16.msra.mxu0 0
      %775 = vmatprep.subr.bf16.mxu0 0
      %776 = vmatpush1.bf16.msra.mxu0 0
      %777 = vmatprep.subr.bf16.mxu0 0
      %778 = vmatpush1.bf16.msra.mxu0 0
      %779 = vmatprep.subr.bf16.mxu0 0
      %780 = vmatpush1.bf16.msra.mxu0 0
      %781 = vmatprep.subr.bf16.mxu0 0
      %782 = vmatpush1.bf16.msra.mxu0 0
      %783 = vmatprep.subr.bf16.mxu0 0
      %784 = vmatpush1.bf16.msra.mxu0 0
      %785 = vmatprep.subr.bf16.mxu0 0
      %786 = vmatpush1.bf16.msra.mxu0 0
      %787 = vmatprep.mubr.bf16.mxu0 0
      %788 = vmatmul.mubr.bf16.gmra.mrb[0].mxu0 %v704
      %v789 = vpop.f32.mrb[0].mxu0
      %v790 = vadd.f32 0.0, %v789
      %v791 = vpop.f32.mrb[0].mxu0
      %v792 = vpop.f32.mrb[0].mxu0
      %v793 = vadd.f32 0.0, %v792
      %v794 = vpop.f32.mrb[0].mxu0
      %795 = vmatprep.mubr.bf16.mxu0 0
      %796 = vmatmul.mubr.bf16.gmra.mrb[0].mxu0 %v703
      %v797 = vpop.f32.mrb[0].mxu0
      %v798 = vadd.f32 0.0, %v797
      %v799 = vpop.f32.mrb[0].mxu0
      %v800 = vpop.f32.mrb[0].mxu0
      %v801 = vpop.f32.mrb[0].mxu0
      %802 = vdwg.mxu0
      %v803 = vadd.f32 %v670, %v790
      %v804 = vadd.f32 %v671, %v793
      %v805 = vadd.f32 %v672, %v798
      %v806 = vld [vmem:[%s250 + $0xc] sm:$0xf]
      %s807 = sadd.s32 %s280, 4
      %s808 = smul.u32 %s807, 16
      %s809 = smul.addr %s808, 4
      %s810 = scalar_lea.vmem %s1, %s809
      %v811 = vld [vmem:[%s810] sm:$0xf]
      %v812 = vld [vmem:[%s810 + $0x4] sm:$0xf]
      %v813 = vld [vmem:[%s810 + $0x8] sm:$0xf]
      %v814 = vld [vmem:[%s810 + $0xc] sm:$0xf]
      %v815 = vld [vmem:[%s810 + $0x10] sm:$0xf]
      %v816 = vld [vmem:[%s810 + $0x14] sm:$0xf]
      %v817 = vld [vmem:[%s810 + $0x18] sm:$0xf]
      %v818 = vld [vmem:[%s810 + $0x1c] sm:$0xf]
      %v819 = vld [vmem:[%s810 + $0x20] sm:$0xf]
      %v820 = vld [vmem:[%s810 + $0x24] sm:$0xf]
      %v821 = vld [vmem:[%s810 + $0x28] sm:$0xf]
      %v822 = vld [vmem:[%s810 + $0x2c] sm:$0xf]
      %v823 = vld [vmem:[%s810 + $0x30] sm:$0xf]
      %v824 = vld [vmem:[%s810 + $0x34] sm:$0xf]
      %v825 = vld [vmem:[%s810 + $0x38] sm:$0xf]
      %v826 = vld [vmem:[%s810 + $0x3c] sm:$0xf]
      %v828 = vunpack.c.l.b16 %v806
      %v829 = vpack.c.b16 %v828, %v327
      %vm830 = vsmask.f32 4352
      %v832 = vshrl.u32 %v699, 16
      %v834 = vrot.slane %v832, 3
      %v835 = vshll.u32 %v699, 16
      %v837 = vrot.slane %v835, 4
      %v838 = vor.u32 %v834, %v837
      %v840 = vshrl.u32 %v829, 16
      %v842 = vrot.slane %v840, 3
      %v843 = vshll.u32 %v829, 16
      %v845 = vrot.slane %v843, 4
      %v846 = vor.u32 %v842, %v845
      %v847 = vsel %vm830, %v838, %v846
      %v866 = vunpack.c.l.b16 %v811
      %v867 = vunpack.c.l.b16 %v812
      %v868 = vunpack.c.l.b16 %v813
      %v869 = vunpack.c.l.b16 %v814
      %v870 = vunpack.c.l.b16 %v815
      %v871 = vunpack.c.l.b16 %v816
      %v872 = vunpack.c.l.b16 %v817
      %v873 = vunpack.c.l.b16 %v818
      %v874 = vunpack.c.l.b16 %v819
      %v875 = vunpack.c.l.b16 %v820
      %v876 = vunpack.c.l.b16 %v821
      %v877 = vunpack.c.l.b16 %v822
      %v878 = vunpack.c.l.b16 %v823
      %v879 = vunpack.c.l.b16 %v824
      %v880 = vunpack.c.l.b16 %v825
      %v881 = vunpack.c.l.b16 %v826
      %v882 = vpack.c.b16 %v867, %v866
      %v883 = vpack.c.b16 %v869, %v868
      %v884 = vpack.c.b16 %v871, %v870
      %v885 = vpack.c.b16 %v873, %v872
      %v886 = vpack.c.b16 %v875, %v874
      %v887 = vpack.c.b16 %v877, %v876
      %v888 = vpack.c.b16 %v879, %v878
      %v889 = vpack.c.b16 %v881, %v880
      %898 = vmatprep.subr.bf16.mxu0 0
      %899 = vmatpush1.bf16.msra.mxu0 %v882
      %900 = vmatprep.subr.bf16.mxu0 0
      %901 = vmatpush1.bf16.msra.mxu0 %v883
      %902 = vmatprep.subr.bf16.mxu0 0
      %903 = vmatpush1.bf16.msra.mxu0 %v884
      %904 = vmatprep.subr.bf16.mxu0 0
      %905 = vmatpush1.bf16.msra.mxu0 %v885
      %906 = vmatprep.subr.bf16.mxu0 0
      %907 = vmatpush1.bf16.msra.mxu0 %v886
      %908 = vmatprep.subr.bf16.mxu0 0
      %909 = vmatpush1.bf16.msra.mxu0 %v887
      %910 = vmatprep.subr.bf16.mxu0 0
      %911 = vmatpush1.bf16.msra.mxu0 %v888
      %912 = vmatprep.subr.bf16.mxu0 0
      %913 = vmatpush1.bf16.msra.mxu0 %v889
      %914 = vmatprep.subr.bf16.mxu0 0
      %915 = vmatpush1.bf16.msra.mxu0 0
      %916 = vmatprep.subr.bf16.mxu0 0
      %917 = vmatpush1.bf16.msra.mxu0 0
      %918 = vmatprep.subr.bf16.mxu0 0
      %919 = vmatpush1.bf16.msra.mxu0 0
      %920 = vmatprep.subr.bf16.mxu0 0
      %921 = vmatpush1.bf16.msra.mxu0 0
      %922 = vmatprep.subr.bf16.mxu0 0
      %923 = vmatpush1.bf16.msra.mxu0 0
      %924 = vmatprep.subr.bf16.mxu0 0
      %925 = vmatpush1.bf16.msra.mxu0 0
      %926 = vmatprep.subr.bf16.mxu0 0
      %927 = vmatpush1.bf16.msra.mxu0 0
      %928 = vmatprep.subr.bf16.mxu0 0
      %929 = vmatpush1.bf16.msra.mxu0 0
      %930 = vmatprep.mubr.bf16.mxu0 0
      %931 = vmatmul.mubr.bf16.gmra.mrb[0].mxu0 %v847
      %v932 = vpop.f32.mrb[0].mxu0
      %v933 = vadd.f32 0.0, %v932
      %v934 = vpop.f32.mrb[0].mxu0
      %v935 = vpop.f32.mrb[0].mxu0
      %v936 = vadd.f32 0.0, %v935
      %v937 = vpop.f32.mrb[0].mxu0
      %938 = vmatprep.mubr.bf16.mxu0 0
      %939 = vmatmul.mubr.bf16.gmra.mrb[0].mxu0 %v846
      %v940 = vpop.f32.mrb[0].mxu0
      %v941 = vadd.f32 0.0, %v940
      %v942 = vpop.f32.mrb[0].mxu0
      %v943 = vpop.f32.mrb[0].mxu0
      %v944 = vpop.f32.mrb[0].mxu0
      %945 = vdwg.mxu0
      %v946 = vadd.f32 %v803, %v933
      %v947 = vadd.f32 %v804, %v936
      %v948 = vadd.f32 %v805, %v941
      %s949 = sadd.s32 %s280, 5
      %s950 = smul.u32 %s949, 16
      %s951 = smul.addr %s950, 4
      %s952 = scalar_lea.vmem %s1, %s951
      %v953 = vld [vmem:[%s952] sm:$0xf]
      %v954 = vld [vmem:[%s952 + $0x4] sm:$0xf]
      %v955 = vld [vmem:[%s952 + $0x8] sm:$0xf]
      %v956 = vld [vmem:[%s952 + $0xc] sm:$0xf]
      %v957 = vld [vmem:[%s952 + $0x10] sm:$0xf]
      %v958 = vld [vmem:[%s952 + $0x14] sm:$0xf]
      %v959 = vld [vmem:[%s952 + $0x18] sm:$0xf]
      %v960 = vld [vmem:[%s952 + $0x1c] sm:$0xf]
      %v961 = vld [vmem:[%s952 + $0x20] sm:$0xf]
      %v962 = vld [vmem:[%s952 + $0x24] sm:$0xf]
      %v963 = vld [vmem:[%s952 + $0x28] sm:$0xf]
      %v964 = vld [vmem:[%s952 + $0x2c] sm:$0xf]
      %v965 = vld [vmem:[%s952 + $0x30] sm:$0xf]
      %v966 = vld [vmem:[%s952 + $0x34] sm:$0xf]
      %v967 = vld [vmem:[%s952 + $0x38] sm:$0xf]
      %v968 = vld [vmem:[%s952 + $0x3c] sm:$0xf]
      %v969 = vpack.c.b16 %v327, %v326
      %v970 = vpack.c.b16 %v828, %v828
      %v989 = vunpack.c.l.b16 %v953
      %v990 = vunpack.c.l.b16 %v954
      %v991 = vunpack.c.l.b16 %v955
      %v992 = vunpack.c.l.b16 %v956
      %v993 = vunpack.c.l.b16 %v957
      %v994 = vunpack.c.l.b16 %v958
      %v995 = vunpack.c.l.b16 %v959
      %v996 = vunpack.c.l.b16 %v960
      %v997 = vunpack.c.l.b16 %v961
      %v998 = vunpack.c.l.b16 %v962
      %v999 = vunpack.c.l.b16 %v963
      %v1000 = vunpack.c.l.b16 %v964
      %v1001 = vunpack.c.l.b16 %v965
      %v1002 = vunpack.c.l.b16 %v966
      %v1003 = vunpack.c.l.b16 %v967
      %v1004 = vunpack.c.l.b16 %v968
      %v1005 = vpack.c.b16 %v990, %v989
      %v1006 = vpack.c.b16 %v992, %v991
      %v1007 = vpack.c.b16 %v994, %v993
      %v1008 = vpack.c.b16 %v996, %v995
      %v1009 = vpack.c.b16 %v998, %v997
      %v1010 = vpack.c.b16 %v1000, %v999
      %v1011 = vpack.c.b16 %v1002, %v1001
      %v1012 = vpack.c.b16 %v1004, %v1003
      %1021 = vmatprep.subr.bf16.mxu0 0
      %1022 = vmatpush1.bf16.msra.mxu0 %v1005
      %1023 = vmatprep.subr.bf16.mxu0 0
      %1024 = vmatpush1.bf16.msra.mxu0 %v1006
      %1025 = vmatprep.subr.bf16.mxu0 0
      %1026 = vmatpush1.bf16.msra.mxu0 %v1007
      %1027 = vmatprep.subr.bf16.mxu0 0
      %1028 = vmatpush1.bf16.msra.mxu0 %v1008
      %1029 = vmatprep.subr.bf16.mxu0 0
      %1030 = vmatpush1.bf16.msra.mxu0 %v1009
      %1031 = vmatprep.subr.bf16.mxu0 0
      %1032 = vmatpush1.bf16.msra.mxu0 %v1010
      %1033 = vmatprep.subr.bf16.mxu0 0
      %1034 = vmatpush1.bf16.msra.mxu0 %v1011
      %1035 = vmatprep.subr.bf16.mxu0 0
      %1036 = vmatpush1.bf16.msra.mxu0 %v1012
      %1037 = vmatprep.subr.bf16.mxu0 0
      %1038 = vmatpush1.bf16.msra.mxu0 0
      %1039 = vmatprep.subr.bf16.mxu0 0
      %1040 = vmatpush1.bf16.msra.mxu0 0
      %1041 = vmatprep.subr.bf16.mxu0 0
      %1042 = vmatpush1.bf16.msra.mxu0 0
      %1043 = vmatprep.subr.bf16.mxu0 0
      %1044 = vmatpush1.bf16.msra.mxu0 0
      %1045 = vmatprep.subr.bf16.mxu0 0
      %1046 = vmatpush1.bf16.msra.mxu0 0
      %1047 = vmatprep.subr.bf16.mxu0 0
      %1048 = vmatpush1.bf16.msra.mxu0 0
      %1049 = vmatprep.subr.bf16.mxu0 0
      %1050 = vmatpush1.bf16.msra.mxu0 0
      %1051 = vmatprep.subr.bf16.mxu0 0
      %1052 = vmatpush1.bf16.msra.mxu0 0
      %1053 = vmatprep.mubr.bf16.mxu0 0
      %1054 = vmatmul.mubr.bf16.gmra.mrb[0].mxu0 %v969
      %v1055 = vpop.f32.mrb[0].mxu0
      %v1056 = vadd.f32 0.0, %v1055
      %v1057 = vpop.f32.mrb[0].mxu0
      %v1058 = vpop.f32.mrb[0].mxu0
      %v1059 = vadd.f32 0.0, %v1058
      %v1060 = vpop.f32.mrb[0].mxu0
      %1061 = vmatprep.mubr.bf16.mxu0 0
      %1062 = vmatmul.mubr.bf16.gmra.mrb[0].mxu0 %v970
      %v1063 = vpop.f32.mrb[0].mxu0
      %v1064 = vadd.f32 0.0, %v1063
      %v1065 = vpop.f32.mrb[0].mxu0
      %v1066 = vpop.f32.mrb[0].mxu0
      %v1067 = vpop.f32.mrb[0].mxu0
      %1068 = vdwg.mxu0
      %v1069 = vadd.f32 %v946, %v1056
      %v1070 = vadd.f32 %v947, %v1059
      %v1071 = vadd.f32 %v948, %v1064
      %v1072 = vld [vmem:[%s250 + $0x4] sm:$0xc]
      %v1073 = vld [vmem:[%s250 + $0x8] sm:$0xf]
      %v1074 = vld [vmem:[%s250 + $0xc] sm:$0xf]
      %v1075 = vld [vmem:[%s250 + $0x10] sm:$0x3]
      %s1076 = sadd.s32 %s280, 6
      %s1077 = smul.u32 %s1076, 16
      %s1078 = smul.addr %s1077, 4
      %s1079 = scalar_lea.vmem %s1, %s1078
      %v1080 = vld [vmem:[%s1079] sm:$0xf]
      %v1081 = vld [vmem:[%s1079 + $0x4] sm:$0xf]
      %v1082 = vld [vmem:[%s1079 + $0x8] sm:$0xf]
      %v1083 = vld [vmem:[%s1079 + $0xc] sm:$0xf]
      %v1084 = vld [vmem:[%s1079 + $0x10] sm:$0xf]
      %v1085 = vld [vmem:[%s1079 + $0x14] sm:$0xf]
      %v1086 = vld [vmem:[%s1079 + $0x18] sm:$0xf]
      %v1087 = vld [vmem:[%s1079 + $0x1c] sm:$0xf]
      %v1088 = vld [vmem:[%s1079 + $0x20] sm:$0xf]
      %v1089 = vld [vmem:[%s1079 + $0x24] sm:$0xf]
      %v1090 = vld [vmem:[%s1079 + $0x28] sm:$0xf]
      %v1091 = vld [vmem:[%s1079 + $0x2c] sm:$0xf]
      %v1092 = vld [vmem:[%s1079 + $0x30] sm:$0xf]
      %v1093 = vld [vmem:[%s1079 + $0x34] sm:$0xf]
      %v1094 = vld [vmem:[%s1079 + $0x38] sm:$0xf]
      %v1095 = vld [vmem:[%s1079 + $0x3c] sm:$0xf]
      %v1100 = vunpack.c.l.b16 %v1072
      %v1101 = vunpack.c.l.b16 %v1073
      %v1102 = vunpack.c.l.b16 %v1074
      %v1103 = vunpack.c.l.b16 %v1075
      %v1104 = vpack.c.b16 %v1101, %v1100
      %v1105 = vpack.c.b16 %v1103, %v1102
      %vm1106 = vcmask 1045504
      %v1107 = vrot.slane %v1104, 2
      %v1108 = vrot.slane %v1105, 2
      %v1109 = vsel %vm1106, %v1107, %v1108
      %v1128 = vunpack.c.l.b16 %v1080
      %v1129 = vunpack.c.l.b16 %v1081
      %v1130 = vunpack.c.l.b16 %v1082
      %v1131 = vunpack.c.l.b16 %v1083
      %v1132 = vunpack.c.l.b16 %v1084
      %v1133 = vunpack.c.l.b16 %v1085
      %v1134 = vunpack.c.l.b16 %v1086
      %v1135 = vunpack.c.l.b16 %v1087
      %v1136 = vunpack.c.l.b16 %v1088
      %v1137 = vunpack.c.l.b16 %v1089
      %v1138 = vunpack.c.l.b16 %v1090
      %v1139 = vunpack.c.l.b16 %v1091
      %v1140 = vunpack.c.l.b16 %v1092
      %v1141 = vunpack.c.l.b16 %v1093
      %v1142 = vunpack.c.l.b16 %v1094
      %v1143 = vunpack.c.l.b16 %v1095
      %v1144 = vpack.c.b16 %v1129, %v1128
      %v1145 = vpack.c.b16 %v1131, %v1130
      %v1146 = vpack.c.b16 %v1133, %v1132
      %v1147 = vpack.c.b16 %v1135, %v1134
      %v1148 = vpack.c.b16 %v1137, %v1136
      %v1149 = vpack.c.b16 %v1139, %v1138
      %v1150 = vpack.c.b16 %v1141, %v1140
      %v1151 = vpack.c.b16 %v1143, %v1142
      %1160 = vmatprep.subr.bf16.mxu0 0
      %1161 = vmatpush1.bf16.msra.mxu0 %v1144
      %1162 = vmatprep.subr.bf16.mxu0 0
      %1163 = vmatpush1.bf16.msra.mxu0 %v1145
      %1164 = vmatprep.subr.bf16.mxu0 0
      %1165 = vmatpush1.bf16.msra.mxu0 %v1146
      %1166 = vmatprep.subr.bf16.mxu0 0
      %1167 = vmatpush1.bf16.msra.mxu0 %v1147
      %1168 = vmatprep.subr.bf16.mxu0 0
      %1169 = vmatpush1.bf16.msra.mxu0 %v1148
      %1170 = vmatprep.subr.bf16.mxu0 0
      %1171 = vmatpush1.bf16.msra.mxu0 %v1149
      %1172 = vmatprep.subr.bf16.mxu0 0
      %1173 = vmatpush1.bf16.msra.mxu0 %v1150
      %1174 = vmatprep.subr.bf16.mxu0 0
      %1175 = vmatpush1.bf16.msra.mxu0 %v1151
      %1176 = vmatprep.subr.bf16.mxu0 0
      %1177 = vmatpush1.bf16.msra.mxu0 0
      %1178 = vmatprep.subr.bf16.mxu0 0
      %1179 = vmatpush1.bf16.msra.mxu0 0
      %1180 = vmatprep.subr.bf16.mxu0 0
      %1181 = vmatpush1.bf16.msra.mxu0 0
      %1182 = vmatprep.subr.bf16.mxu0 0
      %1183 = vmatpush1.bf16.msra.mxu0 0
      %1184 = vmatprep.subr.bf16.mxu0 0
      %1185 = vmatpush1.bf16.msra.mxu0 0
      %1186 = vmatprep.subr.bf16.mxu0 0
      %1187 = vmatpush1.bf16.msra.mxu0 0
      %1188 = vmatprep.subr.bf16.mxu0 0
      %1189 = vmatpush1.bf16.msra.mxu0 0
      %1190 = vmatprep.subr.bf16.mxu0 0
      %1191 = vmatpush1.bf16.msra.mxu0 0
      %1192 = vmatprep.mubr.bf16.mxu0 0
      %1193 = vmatmul.mubr.bf16.gmra.mrb[0].mxu0 %v1109
      %v1194 = vpop.f32.mrb[0].mxu0
      %v1195 = vadd.f32 0.0, %v1194
      %v1196 = vpop.f32.mrb[0].mxu0
      %v1197 = vpop.f32.mrb[0].mxu0
      %v1198 = vadd.f32 0.0, %v1197
      %v1199 = vpop.f32.mrb[0].mxu0
      %1200 = vmatprep.mubr.bf16.mxu0 0
      %1201 = vmatmul.mubr.bf16.gmra.mrb[0].mxu0 %v1108
      %v1202 = vpop.f32.mrb[0].mxu0
      %v1203 = vadd.f32 0.0, %v1202
      %v1204 = vpop.f32.mrb[0].mxu0
      %v1205 = vpop.f32.mrb[0].mxu0
      %v1206 = vpop.f32.mrb[0].mxu0
      %1207 = vdwg.mxu0
      %v1208 = vadd.f32 %v1069, %v1195
      %v1209 = vadd.f32 %v1070, %v1198
      %v1210 = vadd.f32 %v1071, %v1203
      %v1211 = vld [vmem:[%s250 + $0x10] sm:$0x7]
      %s1212 = sadd.s32 %s280, 7
      %s1213 = smul.u32 %s1212, 16
      %s1214 = smul.addr %s1213, 4
      %s1215 = scalar_lea.vmem %s1, %s1214
      %v1216 = vld [vmem:[%s1215] sm:$0xf]
      %v1217 = vld [vmem:[%s1215 + $0x4] sm:$0xf]
      %v1218 = vld [vmem:[%s1215 + $0x8] sm:$0xf]
      %v1219 = vld [vmem:[%s1215 + $0xc] sm:$0xf]
      %v1220 = vld [vmem:[%s1215 + $0x10] sm:$0xf]
      %v1221 = vld [vmem:[%s1215 + $0x14] sm:$0xf]
      %v1222 = vld [vmem:[%s1215 + $0x18] sm:$0xf]
      %v1223 = vld [vmem:[%s1215 + $0x1c] sm:$0xf]
      %v1224 = vld [vmem:[%s1215 + $0x20] sm:$0xf]
      %v1225 = vld [vmem:[%s1215 + $0x24] sm:$0xf]
      %v1226 = vld [vmem:[%s1215 + $0x28] sm:$0xf]
      %v1227 = vld [vmem:[%s1215 + $0x2c] sm:$0xf]
      %v1228 = vld [vmem:[%s1215 + $0x30] sm:$0xf]
      %v1229 = vld [vmem:[%s1215 + $0x34] sm:$0xf]
      %v1230 = vld [vmem:[%s1215 + $0x38] sm:$0xf]
      %v1231 = vld [vmem:[%s1215 + $0x3c] sm:$0xf]
      %v1233 = vunpack.c.l.b16 %v1211
      %v1234 = vpack.c.b16 %v1233, %v1102
      %vm1235 = vsmask.f32 5376
      %v1237 = vshrl.u32 %v1104, 16
      %v1239 = vrot.slane %v1237, 2
      %v1240 = vshll.u32 %v1104, 16
      %v1242 = vrot.slane %v1240, 3
      %v1243 = vor.u32 %v1239, %v1242
      %v1245 = vshrl.u32 %v1234, 16
      %v1247 = vrot.slane %v1245, 2
      %v1248 = vshll.u32 %v1234, 16
      %v1250 = vrot.slane %v1248, 3
      %v1251 = vor.u32 %v1247, %v1250
      %v1252 = vsel %vm1235, %v1243, %v1251
      %v1271 = vunpack.c.l.b16 %v1216
      %v1272 = vunpack.c.l.b16 %v1217
      %v1273 = vunpack.c.l.b16 %v1218
      %v1274 = vunpack.c.l.b16 %v1219
      %v1275 = vunpack.c.l.b16 %v1220
      %v1276 = vunpack.c.l.b16 %v1221
      %v1277 = vunpack.c.l.b16 %v1222
      %v1278 = vunpack.c.l.b16 %v1223
      %v1279 = vunpack.c.l.b16 %v1224
      %v1280 = vunpack.c.l.b16 %v1225
      %v1281 = vunpack.c.l.b16 %v1226
      %v1282 = vunpack.c.l.b16 %v1227
      %v1283 = vunpack.c.l.b16 %v1228
      %v1284 = vunpack.c.l.b16 %v1229
      %v1285 = vunpack.c.l.b16 %v1230
      %v1286 = vunpack.c.l.b16 %v1231
      %v1287 = vpack.c.b16 %v1272, %v1271
      %v1288 = vpack.c.b16 %v1274, %v1273
      %v1289 = vpack.c.b16 %v1276, %v1275
      %v1290 = vpack.c.b16 %v1278, %v1277
      %v1291 = vpack.c.b16 %v1280, %v1279
      %v1292 = vpack.c.b16 %v1282, %v1281
      %v1293 = vpack.c.b16 %v1284, %v1283
      %v1294 = vpack.c.b16 %v1286, %v1285
      %1303 = vmatprep.subr.bf16.mxu0 0
      %1304 = vmatpush1.bf16.msra.mxu0 %v1287
      %1305 = vmatprep.subr.bf16.mxu0 0
      %1306 = vmatpush1.bf16.msra.mxu0 %v1288
      %1307 = vmatprep.subr.bf16.mxu0 0
      %1308 = vmatpush1.bf16.msra.mxu0 %v1289
      %1309 = vmatprep.subr.bf16.mxu0 0
      %1310 = vmatpush1.bf16.msra.mxu0 %v1290
      %1311 = vmatprep.subr.bf16.mxu0 0
      %1312 = vmatpush1.bf16.msra.mxu0 %v1291
      %1313 = vmatprep.subr.bf16.mxu0 0
      %1314 = vmatpush1.bf16.msra.mxu0 %v1292
      %1315 = vmatprep.subr.bf16.mxu0 0
      %1316 = vmatpush1.bf16.msra.mxu0 %v1293
      %1317 = vmatprep.subr.bf16.mxu0 0
      %1318 = vmatpush1.bf16.msra.mxu0 %v1294
      %1319 = vmatprep.subr.bf16.mxu0 0
      %1320 = vmatpush1.bf16.msra.mxu0 0
      %1321 = vmatprep.subr.bf16.mxu0 0
      %1322 = vmatpush1.bf16.msra.mxu0 0
      %1323 = vmatprep.subr.bf16.mxu0 0
      %1324 = vmatpush1.bf16.msra.mxu0 0
      %1325 = vmatprep.subr.bf16.mxu0 0
      %1326 = vmatpush1.bf16.msra.mxu0 0
      %1327 = vmatprep.subr.bf16.mxu0 0
      %1328 = vmatpush1.bf16.msra.mxu0 0
      %1329 = vmatprep.subr.bf16.mxu0 0
      %1330 = vmatpush1.bf16.msra.mxu0 0
      %1331 = vmatprep.subr.bf16.mxu0 0
      %1332 = vmatpush1.bf16.msra.mxu0 0
      %1333 = vmatprep.subr.bf16.mxu0 0
      %1334 = vmatpush1.bf16.msra.mxu0 0
      %1335 = vmatprep.mubr.bf16.mxu0 0
      %1336 = vmatmul.mubr.bf16.gmra.mrb[0].mxu0 %v1252
      %v1337 = vpop.f32.mrb[0].mxu0
      %v1338 = vadd.f32 0.0, %v1337
      %v1339 = vpop.f32.mrb[0].mxu0
      %v1340 = vpop.f32.mrb[0].mxu0
      %v1341 = vadd.f32 0.0, %v1340
      %v1342 = vpop.f32.mrb[0].mxu0
      %1343 = vmatprep.mubr.bf16.mxu0 0
      %1344 = vmatmul.mubr.bf16.gmra.mrb[0].mxu0 %v1251
      %v1345 = vpop.f32.mrb[0].mxu0
      %v1346 = vadd.f32 0.0, %v1345
      %v1347 = vpop.f32.mrb[0].mxu0
      %v1348 = vpop.f32.mrb[0].mxu0
      %v1349 = vpop.f32.mrb[0].mxu0
      %1350 = vdwg.mxu0
      %v1351 = vadd.f32 %v1208, %v1338
      %v1352 = vadd.f32 %v1209, %v1341
      %v1353 = vadd.f32 %v1210, %v1346
      %v1354 = vld [vmem:[%s250 + $0x4] sm:$0x8]
      %s1355 = sadd.s32 %s280, 8
      %s1356 = smul.u32 %s1355, 16
      %s1357 = smul.addr %s1356, 4
      %s1358 = scalar_lea.vmem %s1, %s1357
      %v1359 = vld [vmem:[%s1358] sm:$0xf]
      %v1360 = vld [vmem:[%s1358 + $0x4] sm:$0xf]
      %v1361 = vld [vmem:[%s1358 + $0x8] sm:$0xf]
      %v1362 = vld [vmem:[%s1358 + $0xc] sm:$0xf]
      %v1363 = vld [vmem:[%s1358 + $0x10] sm:$0xf]
      %v1364 = vld [vmem:[%s1358 + $0x14] sm:$0xf]
      %v1365 = vld [vmem:[%s1358 + $0x18] sm:$0xf]
      %v1366 = vld [vmem:[%s1358 + $0x1c] sm:$0xf]
      %v1367 = vld [vmem:[%s1358 + $0x20] sm:$0xf]
      %v1368 = vld [vmem:[%s1358 + $0x24] sm:$0xf]
      %v1369 = vld [vmem:[%s1358 + $0x28] sm:$0xf]
      %v1370 = vld [vmem:[%s1358 + $0x2c] sm:$0xf]
      %v1371 = vld [vmem:[%s1358 + $0x30] sm:$0xf]
      %v1372 = vld [vmem:[%s1358 + $0x34] sm:$0xf]
      %v1373 = vld [vmem:[%s1358 + $0x38] sm:$0xf]
      %v1374 = vld [vmem:[%s1358 + $0x3c] sm:$0xf]
      %v1376 = vunpack.c.l.b16 %v1354
      %v1377 = vpack.c.b16 %v1101, %v1376
      %v1378 = vrot.slane %v1377, 3
      %v1379 = vrot.slane %v1234, 3
      %v1380 = vsel %vm701, %v1378, %v1379
      %v1399 = vunpack.c.l.b16 %v1359
      %v1400 = vunpack.c.l.b16 %v1360
      %v1401 = vunpack.c.l.b16 %v1361
      %v1402 = vunpack.c.l.b16 %v1362
      %v1403 = vunpack.c.l.b16 %v1363
      %v1404 = vunpack.c.l.b16 %v1364
      %v1405 = vunpack.c.l.b16 %v1365
      %v1406 = vunpack.c.l.b16 %v1366
      %v1407 = vunpack.c.l.b16 %v1367
      %v1408 = vunpack.c.l.b16 %v1368
      %v1409 = vunpack.c.l.b16 %v1369
      %v1410 = vunpack.c.l.b16 %v1370
      %v1411 = vunpack.c.l.b16 %v1371
      %v1412 = vunpack.c.l.b16 %v1372
      %v1413 = vunpack.c.l.b16 %v1373
      %v1414 = vunpack.c.l.b16 %v1374
      %v1415 = vpack.c.b16 %v1400, %v1399
      %v1416 = vpack.c.b16 %v1402, %v1401
      %v1417 = vpack.c.b16 %v1404, %v1403
      %v1418 = vpack.c.b16 %v1406, %v1405
      %v1419 = vpack.c.b16 %v1408, %v1407
      %v1420 = vpack.c.b16 %v1410, %v1409
      %v1421 = vpack.c.b16 %v1412, %v1411
      %v1422 = vpack.c.b16 %v1414, %v1413
      %1431 = vmatprep.subr.bf16.mxu0 0
      %1432 = vmatpush1.bf16.msra.mxu0 %v1415
      %1433 = vmatprep.subr.bf16.mxu0 0
      %1434 = vmatpush1.bf16.msra.mxu0 %v1416
      %1435 = vmatprep.subr.bf16.mxu0 0
      %1436 = vmatpush1.bf16.msra.mxu0 %v1417
      %1437 = vmatprep.subr.bf16.mxu0 0
      %1438 = vmatpush1.bf16.msra.mxu0 %v1418
      %1439 = vmatprep.subr.bf16.mxu0 0
      %1440 = vmatpush1.bf16.msra.mxu0 %v1419
      %1441 = vmatprep.subr.bf16.mxu0 0
      %1442 = vmatpush1.bf16.msra.mxu0 %v1420
      %1443 = vmatprep.subr.bf16.mxu0 0
      %1444 = vmatpush1.bf16.msra.mxu0 %v1421
      %1445 = vmatprep.subr.bf16.mxu0 0
      %1446 = vmatpush1.bf16.msra.mxu0 %v1422
      %1447 = vmatprep.subr.bf16.mxu0 0
      %1448 = vmatpush1.bf16.msra.mxu0 0
      %1449 = vmatprep.subr.bf16.mxu0 0
      %1450 = vmatpush1.bf16.msra.mxu0 0
      %1451 = vmatprep.subr.bf16.mxu0 0
      %1452 = vmatpush1.bf16.msra.mxu0 0
      %1453 = vmatprep.subr.bf16.mxu0 0
      %1454 = vmatpush1.bf16.msra.mxu0 0
      %1455 = vmatprep.subr.bf16.mxu0 0
      %1456 = vmatpush1.bf16.msra.mxu0 0
      %1457 = vmatprep.subr.bf16.mxu0 0
      %1458 = vmatpush1.bf16.msra.mxu0 0
      %1459 = vmatprep.subr.bf16.mxu0 0
      %1460 = vmatpush1.bf16.msra.mxu0 0
      %1461 = vmatprep.subr.bf16.mxu0 0
      %1462 = vmatpush1.bf16.msra.mxu0 0
      %1463 = vmatprep.mubr.bf16.mxu0 0
      %1464 = vmatmul.mubr.bf16.gmra.mrb[0].mxu0 %v1380
      %v1465 = vpop.f32.mrb[0].mxu0
      %v1466 = vadd.f32 0.0, %v1465
      %v1467 = vpop.f32.mrb[0].mxu0
      %v1468 = vpop.f32.mrb[0].mxu0
      %v1469 = vadd.f32 0.0, %v1468
      %v1470 = vpop.f32.mrb[0].mxu0
      %1471 = vmatprep.mubr.bf16.mxu0 0
      %1472 = vmatmul.mubr.bf16.gmra.mrb[0].mxu0 %v1379
      %v1473 = vpop.f32.mrb[0].mxu0
      %v1474 = vadd.f32 0.0, %v1473
      %v1475 = vpop.f32.mrb[0].mxu0
      %v1476 = vpop.f32.mrb[0].mxu0
      %v1477 = vpop.f32.mrb[0].mxu0
      %1478 = vdwg.mxu0
      %v1479 = vadd.f32 %v1351, %v1466
      %v1480 = vadd.f32 %v1352, %v1469
      %v1481 = vadd.f32 %v1353, %v1474
      %v1482 = vld [vmem:[#allocation2] sm:$0xff]
      %v1483 = vld [vmem:[#allocation2 + $0x8] sm:$0xff]
      %v1484 = vld [vmem:[#allocation2 + $0x10] sm:$0xff]
      %v1485 = vadd.f32 %v1482, %v1479
      %v1486 = vadd.f32 %v1483, %v1480
      %v1487 = vadd.f32 %v1484, %v1481
      %1488 = vst [vmem:[#allocation2] sm:$0xff] %v1485
      %1489 = vst [vmem:[#allocation2 + $0x8] sm:$0xff] %v1486
      %1490 = vst [vmem:[#allocation2 + $0x10] sm:$0xff] %v1487
      %p1491 = scmp.eq.s32.totalorder %s23, 2
      // Predicated region
      $region37: #{resblock3d_forward.7} parent=31 // pred_check
        %p1492 = pneg %p1491
      $region38: #{resblock3d_forward.7} parent=31 // pred_check_branch
        %1494 = sbr.rel (%p1492) target = $region40
      $region39: #{resblock3d_forward.7} parent=31 // pred_region
        %v1495 = vld [vmem:[#allocation2] sm:$0xff]
        %v1496 = vld [vmem:[#allocation2 + $0x8] sm:$0xff]
        %v1497 = vld [vmem:[#allocation2 + $0x10] sm:$0xff]
        %1498 = vst [vmem:[%s260] sm:$0xff] %v1495
        %1499 = vst [vmem:[%s260 + $0x8] sm:$0xff] %v1496
        %1500 = vst [vmem:[%s260 + $0x10] sm:$0xff] %v1497
        %v1501 = vld [vmem:[%s2] sm:$0xff]
        %v1502 = vld [vmem:[%s2 + $0x8] sm:$0xff]
        %v1503 = vld [vmem:[%s2 + $0x10] sm:$0xff]
        %1505 = vset.pattern.permute.xlu0 0
        %1506 = vperm.xlu0 %1505, %v1501
        %v1507 = vpop.permute.xlu0 %1506
        %1510 = vset.pattern.permute.xlu0 0
        %1511 = vperm.xlu0 %1510, %v1502
        %v1512 = vpop.permute.xlu0 %1511
        %1515 = vset.pattern.permute.xlu0 0
        %1516 = vperm.xlu0 %1515, %v1503
        %v1517 = vpop.permute.xlu0 %1516
        %v1519 = vmul.f32 %v1495, %v1507
        %v1520 = vmul.f32 %v1496, %v1512
        %v1521 = vmul.f32 %v1497, %v1517
        %v1522 = vadd.f32 %v1519, %v1520
        %v1523 = vadd.f32 %v1522, %v1521
        %v1524 = vrot.slane %v1523, 4
        %v1525 = vadd.f32 %v1523, %v1524
        %v1526 = vrot.slane %v1525, 2
        %v1527 = vadd.f32 %v1525, %v1526
        %v1528 = vrot.slane %v1527, 1
        %v1529 = vadd.f32 %v1527, %v1528
        %v1530 = vmul.f32 %v1495, %v1495
        %v1531 = vmul.f32 %v1496, %v1496
        %v1532 = vmul.f32 %v1497, %v1497
        %v1533 = vmul.f32 %v1530, %v1507
        %v1534 = vmul.f32 %v1531, %v1512
        %v1535 = vmul.f32 %v1532, %v1517
        %v1536 = vadd.f32 %v1533, %v1534
        %v1537 = vadd.f32 %v1536, %v1535
        %v1538 = vrot.slane %v1537, 4
        %v1539 = vadd.f32 %v1537, %v1538
        %v1540 = vrot.slane %v1539, 2
        %v1541 = vadd.f32 %v1539, %v1540
        %v1542 = vrot.slane %v1541, 1
        %v1543 = vadd.f32 %v1541, %v1542
        %vm1544 = vcmask 1040384
        %v1545 = vsel %vm1544, %v1529, %v1543
        %1546 = vst [vmem:[%s268] sm:$0x3] %v1545
      $region40: #{resblock3d_forward.7} parent=31 // pred_fallthru
        _
      %p1547 = scmp.lt.s32.totalorder %s21, 1
      %s1548 = scalar_select %p1547, %s21, 1
      %p1549 = scmp.lt.s32.totalorder %s22, 3
      %s1550 = scalar_select %p1549, %s22, 3
      %s1551 = smul.addr %s1550, 3
      %s1552 = smul.addr %s1548, 12
      %s1553 = sadd.s32 %s1551, %s1552
      %s1554 = smul.addr %s1553, 8
      %s1555 = scalar_lea.vmem %s3, %s1554
      %p1556 = scmp.lt.s32.totalorder %s21, 1
      %s1557 = scalar_select %p1556, %s21, 1
      %p1558 = scmp.lt.s32.totalorder %s22, 3
      %s1559 = scalar_select %p1558, %s22, 3
      %s1560 = smul.addr %s1557, 4
      %s1561 = sadd.s32 %s1559, %s1560
      %s1562 = smul.addr %s1561, 2
      %s1563 = scalar_lea.vmem %s4, %s1562
      // Predicated region
      $region41: #{resblock3d_forward.7} parent=31 // pred_check
        %p1564 = pneg %p127
      $region42: #{resblock3d_forward.7} parent=31 // pred_check_branch
        %1566 = sbr.rel (%p1564) target = $region44
      $region43: #{resblock3d_forward.7} parent=31 // pred_region
        _
      $region44: #{resblock3d_forward.7} parent=31 // pred_fallthru
        _
      // Predicated region
      $region45: #{resblock3d_forward.7} parent=31 // pred_check
        %p1567 = pneg %p155
      $region46: #{resblock3d_forward.7} parent=31 // pred_check_branch
        %1569 = sbr.rel (%p1567) target = $region48
      $region47: #{resblock3d_forward.7} parent=31 // pred_region
        _
      $region48: #{resblock3d_forward.7} parent=31 // pred_fallthru
        _
    $region32: #{resblock3d_forward.7} parent=5 // pred_fallthru
      _
    %p1570 = scmp.le.s32.totalorder 2, %s11
    // Predicated region
    $region49: #{resblock3d_forward.7} parent=5 // pred_check
      %p1571 = pneg %p1570
    $region50: #{resblock3d_forward.7} parent=5 // pred_check_branch
      %1573 = sbr.rel (%p1571) target = $region52
    $region51: #{resblock3d_forward.7} parent=5 // pred_region
      %s1574 = ssub.s32 %s11, 2
      // Predicated region
      $region53: #{resblock3d_forward.7} parent=51 // pred_check
        %p1575 = pneg %p133
      $region54: #{resblock3d_forward.7} parent=51 // pred_check_branch
        %1577 = sbr.rel (%p1575) target = $region56
      $region55: #{resblock3d_forward.7} parent=51 // pred_region
        %p1578 = scmp.lt.s32.totalorder %s24, 1
        %s1579 = scalar_select %p1578, %s24, 1
        %p1580 = scmp.lt.s32.totalorder %s25, 3
        %s1581 = scalar_select %p1580, %s25, 3
        %s1582 = smul.addr %s1581, 3
        %s1583 = smul.addr %s1579, 12
        %s1584 = sadd.s32 %s1582, %s1583
        %s1585 = smul.addr %s1584, 8
        %s1586 = scalar_lea.vmem %s3, %s1585
      $region56: #{resblock3d_forward.7} parent=51 // pred_fallthru
        _
      // Predicated region
      $region57: #{resblock3d_forward.7} parent=51 // pred_check
        %p1587 = pneg %p161
      $region58: #{resblock3d_forward.7} parent=51 // pred_check_branch
        %1589 = sbr.rel (%p1587) target = $region60
      $region59: #{resblock3d_forward.7} parent=51 // pred_region
        %p1590 = scmp.lt.s32.totalorder %s24, 1
        %s1591 = scalar_select %p1590, %s24, 1
        %p1592 = scmp.lt.s32.totalorder %s25, 3
        %s1593 = scalar_select %p1592, %s25, 3
        %s1594 = smul.addr %s1591, 4
        %s1595 = sadd.s32 %s1593, %s1594
        %s1596 = smul.addr %s1595, 2
        %s1597 = scalar_lea.vmem %s4, %s1596
      $region60: #{resblock3d_forward.7} parent=51 // pred_fallthru
        _
    $region52: #{resblock3d_forward.7} parent=5 // pred_fallthru
      _
  $region6: #{resblock3d_forward.7} parent=0 // loop_footer
    %s15 = sadd.s32 1, %s11
  $region7: #{resblock3d_forward.7} parent=0 // loop_footer_branch
    %10 = sbr.rel target = $region3
  $region8: #{resblock3d_forward.7} parent=0 // loop_exit
    _

// kernel: resblock3d_forward.9
$region0: #{resblock3d_forward.9}
  #allocation0 [shape = 'u32[]', space=smem, size = 0x4, offset = 0x4, fixed_abs, tag = 'smem constant byte address 0x4 - core index']
  #allocation1 [shape = 'u32[144,128]{1,0:T(1,128)}', space=vmem, size = 0x12000, scoped, tag = 'internal scratch']
  %s0 = inlined_call_operand.vmem [shape: f32[128,128], index: 0, kind: input, shape index: {}]
  %s1 = inlined_call_operand.vmem [shape: f32[1,128], index: 1, kind: input, shape index: {}]
  %s2 = inlined_call_operand.vmem [shape: f32[1,128], index: 2, kind: input, shape index: {}]
  %s3 = inlined_call_operand.vmem [shape: f32[128,128], index: 3, kind: input, shape index: {}]
  %s4 = inlined_call_operand.vmem [shape: f32[1,128], index: 4, kind: input, shape index: {}]
  %s5 = inlined_call_operand.vmem [shape: f32[1,128], index: 5, kind: input, shape index: {}]
  %s6 = inlined_call_operand.vmem [shape: f32[128,128], index: 6, kind: output, shape index: {}]
  %s7 = sld [smem:[#allocation0]]
  $region57: #{resblock3d_forward.9} parent=0
    _
  %s9 = ssub.s32 1, %s7
  %s10 = scalar_select 0, %s9, %s7
  loop: start=0, step=1, limit=4
  $region2: #{resblock3d_forward.9} parent=0 // loop_pre_header
    _
  $region3: #{resblock3d_forward.9} parent=0 // loop_header
    %s12 = sphi 0, %s16
    %p13 = scmp.ge.s32.totalorder %s12, 4
    %s22 = sphi 0, %s24
    %s25 = sphi 0, %s22
    %s26 = sphi 0, %s25
    %s42 = sphi 0, %s26
    %s46 = sphi 0, %s46
    %s48 = sphi 0, %s46
    %s49 = sphi 0, %s48
    %s63 = sphi 0, %s49
    %s67 = sphi 0, %s67
    %s69 = sphi 0, %s67
    %s70 = sphi 0, %s69
    %s84 = sphi 0, %s70
    %s90 = sphi 0, %s92
    %s93 = sphi 0, %s90
    %s94 = sphi 0, %s93
    %s110 = sphi 0, %s94
    %s114 = sphi 0, %s114
    %s116 = sphi 0, %s114
    %s117 = sphi 0, %s116
    %s131 = sphi 0, %s117
    %s135 = sphi 0, %s135
    %s137 = sphi 0, %s135
    %s138 = sphi 0, %s137
    %s152 = sphi 0, %s138
    %s158 = sphi 0, %s160
    %s161 = sphi 0, %s158
    %s162 = sphi 0, %s161
    %s178 = sphi 0, %s162
  $region4: #{resblock3d_forward.9} parent=0 // loop_header_branch
    %15 = sbr.rel (%p13) target = $region8
  $region5: #{resblock3d_forward.9} parent=0 // loop_body
    %s17 = ssub.s32 %s12, 1
    %s18 = ssub.s32 %s12, 2
    %s19 = sadd.s32 %s12, 1
    %s20 = ssub.s32 %s12, %s19
    %p21 = scmp.eq.s32.totalorder %s20, 0
    %s23 = sadd.s32 %s22, 1
    %s24 = scalar_select %p21, %s22, %s23
    %p27 = pneg %p21
    %p28 = scmp.eq.s32.totalorder %s12, 1
    %p29 = por %p27, %p28
    %p30 = scmp.ne.s32.totalorder %s22, %s25
    %p31 = scmp.eq.s32.totalorder %s12, 0
    %p32 = por %p30, %p31
    %p33 = scmp.ne.s32.totalorder %s22, %s25
    %p34 = scmp.eq.s32.totalorder %s17, 1
    %p35 = por %p33, %p34
    %p36 = scmp.ne.s32.totalorder %s25, %s26
    %p37 = scmp.eq.s32.totalorder %s17, 0
    %p38 = por %p36, %p37
    %p39 = scmp.ne.s32.totalorder %s25, %s26
    %p40 = scmp.eq.s32.totalorder %s18, 1
    %p41 = por %p39, %p40
    %p43 = scmp.ne.s32.totalorder %s26, %s42
    %p44 = scmp.eq.s32.totalorder %s18, 0
    %p45 = por %p43, %p44
    %s47 = sadd.s32 %s46, 1
    %p50 = scmp.eq.s32.totalorder %s12, 1
    %p51 = scmp.ne.s32.totalorder %s46, %s48
    %p52 = scmp.eq.s32.totalorder %s12, 0
    %p53 = por %p51, %p52
    %p54 = scmp.ne.s32.totalorder %s46, %s48
    %p55 = scmp.eq.s32.totalorder %s17, 1
    %p56 = por %p54, %p55
    %p57 = scmp.ne.s32.totalorder %s48, %s49
    %p58 = scmp.eq.s32.totalorder %s17, 0
    %p59 = por %p57, %p58
    %p60 = scmp.ne.s32.totalorder %s48, %s49
    %p61 = scmp.eq.s32.totalorder %s18, 1
    %p62 = por %p60, %p61
    %p64 = scmp.ne.s32.totalorder %s49, %s63
    %p65 = scmp.eq.s32.totalorder %s18, 0
    %p66 = por %p64, %p65
    %s68 = sadd.s32 %s67, 1
    %p71 = scmp.eq.s32.totalorder %s12, 1
    %p72 = scmp.ne.s32.totalorder %s67, %s69
    %p73 = scmp.eq.s32.totalorder %s12, 0
    %p74 = por %p72, %p73
    %p75 = scmp.ne.s32.totalorder %s67, %s69
    %p76 = scmp.eq.s32.totalorder %s17, 1
    %p77 = por %p75, %p76
    %p78 = scmp.ne.s32.totalorder %s69, %s70
    %p79 = scmp.eq.s32.totalorder %s17, 0
    %p80 = por %p78, %p79
    %p81 = scmp.ne.s32.totalorder %s69, %s70
    %p82 = scmp.eq.s32.totalorder %s18, 1
    %p83 = por %p81, %p82
    %p85 = scmp.ne.s32.totalorder %s70, %s84
    %p86 = scmp.eq.s32.totalorder %s18, 0
    %p87 = por %p85, %p86
    %s88 = ssub.s32 %s12, %s19
    %p89 = scmp.eq.s32.totalorder %s88, 0
    %s91 = sadd.s32 %s90, 1
    %s92 = scalar_select %p89, %s90, %s91
    %p95 = pneg %p89
    %p96 = scmp.eq.s32.totalorder %s12, 1
    %p97 = por %p95, %p96
    %p98 = scmp.ne.s32.totalorder %s90, %s93
    %p99 = scmp.eq.s32.totalorder %s12, 0
    %p100 = por %p98, %p99
    %p101 = scmp.ne.s32.totalorder %s90, %s93
    %p102 = scmp.eq.s32.totalorder %s17, 1
    %p103 = por %p101, %p102
    %p104 = scmp.ne.s32.totalorder %s93, %s94
    %p105 = scmp.eq.s32.totalorder %s17, 0
    %p106 = por %p104, %p105
    %p107 = scmp.ne.s32.totalorder %s93, %s94
    %p108 = scmp.eq.s32.totalorder %s18, 1
    %p109 = por %p107, %p108
    %p111 = scmp.ne.s32.totalorder %s94, %s110
    %p112 = scmp.eq.s32.totalorder %s18, 0
    %p113 = por %p111, %p112
    %s115 = sadd.s32 %s114, 1
    %p118 = scmp.eq.s32.totalorder %s12, 1
    %p119 = scmp.ne.s32.totalorder %s114, %s116
    %p120 = scmp.eq.s32.totalorder %s12, 0
    %p121 = por %p119, %p120
    %p122 = scmp.ne.s32.totalorder %s114, %s116
    %p123 = scmp.eq.s32.totalorder %s17, 1
    %p124 = por %p122, %p123
    %p125 = scmp.ne.s32.totalorder %s116, %s117
    %p126 = scmp.eq.s32.totalorder %s17, 0
    %p127 = por %p125, %p126
    %p128 = scmp.ne.s32.totalorder %s116, %s117
    %p129 = scmp.eq.s32.totalorder %s18, 1
    %p130 = por %p128, %p129
    %p132 = scmp.ne.s32.totalorder %s117, %s131
    %p133 = scmp.eq.s32.totalorder %s18, 0
    %p134 = por %p132, %p133
    %s136 = sadd.s32 %s135, 1
    %p139 = scmp.eq.s32.totalorder %s12, 1
    %p140 = scmp.ne.s32.totalorder %s135, %s137
    %p141 = scmp.eq.s32.totalorder %s12, 0
    %p142 = por %p140, %p141
    %p143 = scmp.ne.s32.totalorder %s135, %s137
    %p144 = scmp.eq.s32.totalorder %s17, 1
    %p145 = por %p143, %p144
    %p146 = scmp.ne.s32.totalorder %s137, %s138
    %p147 = scmp.eq.s32.totalorder %s17, 0
    %p148 = por %p146, %p147
    %p149 = scmp.ne.s32.totalorder %s137, %s138
    %p150 = scmp.eq.s32.totalorder %s18, 1
    %p151 = por %p149, %p150
    %p153 = scmp.ne.s32.totalorder %s138, %s152
    %p154 = scmp.eq.s32.totalorder %s18, 0
    %p155 = por %p153, %p154
    %s156 = ssub.s32 %s12, %s19
    %p157 = scmp.eq.s32.totalorder %s156, 0
    %s159 = sadd.s32 %s158, 1
    %s160 = scalar_select %p157, %s158, %s159
    %p163 = pneg %p157
    %p164 = scmp.eq.s32.totalorder %s12, 1
    %p165 = por %p163, %p164
    %p166 = scmp.ne.s32.totalorder %s158, %s161
    %p167 = scmp.eq.s32.totalorder %s12, 0
    %p168 = por %p166, %p167
    %p169 = scmp.ne.s32.totalorder %s158, %s161
    %p170 = scmp.eq.s32.totalorder %s17, 1
    %p171 = por %p169, %p170
    %p172 = scmp.ne.s32.totalorder %s161, %s162
    %p173 = scmp.eq.s32.totalorder %s17, 0
    %p174 = por %p172, %p173
    %p175 = scmp.ne.s32.totalorder %s161, %s162
    %p176 = scmp.eq.s32.totalorder %s18, 1
    %p177 = por %p175, %p176
    %p179 = scmp.ne.s32.totalorder %s162, %s178
    %p180 = scmp.eq.s32.totalorder %s18, 0
    %p181 = por %p179, %p180
    %p182 = scmp.le.s32.totalorder 1, %s12
    %p183 = scmp.lt.s32.totalorder %s12, 3
    %p184 = pnand %p182, %p183
    %p185 = pneg %p184
    // Predicated region
    $region9: #{resblock3d_forward.9} parent=5 // pred_check
      _
    $region10: #{resblock3d_forward.9} parent=5 // pred_check_branch
      %187 = sbr.rel (%p184) target = $region12
    $region11: #{resblock3d_forward.9} parent=5 // pred_region
      %s188 = ssub.s32 %s12, 1
      // Predicated region
      $region13: #{resblock3d_forward.9} parent=11 // pred_check
        %p189 = pneg %p59
      $region14: #{resblock3d_forward.9} parent=11 // pred_check_branch
        %191 = sbr.rel (%p189) target = $region16
      $region15: #{resblock3d_forward.9} parent=11 // pred_region
        _
      $region16: #{resblock3d_forward.9} parent=11 // pred_fallthru
        _
      // Predicated region
      $region17: #{resblock3d_forward.9} parent=11 // pred_check
        %p192 = pneg %p80
      $region18: #{resblock3d_forward.9} parent=11 // pred_check_branch
        %194 = sbr.rel (%p192) target = $region20
      $region19: #{resblock3d_forward.9} parent=11 // pred_region
        _
      $region20: #{resblock3d_forward.9} parent=11 // pred_fallthru
        _
      // Predicated region
      $region21: #{resblock3d_forward.9} parent=11 // pred_check
        %p195 = pneg %p127
      $region22: #{resblock3d_forward.9} parent=11 // pred_check_branch
        %197 = sbr.rel (%p195) target = $region24
      $region23: #{resblock3d_forward.9} parent=11 // pred_region
        _
      $region24: #{resblock3d_forward.9} parent=11 // pred_fallthru
        _
      // Predicated region
      $region25: #{resblock3d_forward.9} parent=11 // pred_check
        %p198 = pneg %p148
      $region26: #{resblock3d_forward.9} parent=11 // pred_check_branch
        %200 = sbr.rel (%p198) target = $region28
      $region27: #{resblock3d_forward.9} parent=11 // pred_region
        _
      $region28: #{resblock3d_forward.9} parent=11 // pred_fallthru
        _
    $region12: #{resblock3d_forward.9} parent=5 // pred_fallthru
      _
    %p201 = scmp.lt.s32.totalorder %s12, 2
    // Predicated region
    $region29: #{resblock3d_forward.9} parent=5 // pred_check
      %p202 = pneg %p201
    $region30: #{resblock3d_forward.9} parent=5 // pred_check_branch
      %204 = sbr.rel (%p202) target = $region32
    $region31: #{resblock3d_forward.9} parent=5 // pred_region
      // Predicated region
      $region33: #{resblock3d_forward.9} parent=31 // pred_check
        %p205 = pneg %p32
      $region34: #{resblock3d_forward.9} parent=31 // pred_check_branch
        %207 = sbr.rel (%p205) target = $region36
      $region35: #{resblock3d_forward.9} parent=31 // pred_region
        %s208 = smul.u32 8, %s12
        %p209 = scmp.lt.s32.totalorder %s208, 15
        %s210 = scalar_select %p209, %s208, 15
        %s211 = smul.addr %s210, 8
        %s212 = scalar_lea.vmem %s0, %s211
        %s213 = smul.u32 8, %s12
      $region36: #{resblock3d_forward.9} parent=31 // pred_fallthru
        _
      // Predicated region
      $region37: #{resblock3d_forward.9} parent=31 // pred_check
        %p214 = pneg %p100
      $region38: #{resblock3d_forward.9} parent=31 // pred_check_branch
        %216 = sbr.rel (%p214) target = $region40
      $region39: #{resblock3d_forward.9} parent=31 // pred_region
        %s217 = smul.u32 8, %s12
        %p218 = scmp.lt.s32.totalorder %s217, 15
        %s219 = scalar_select %p218, %s217, 15
        %s220 = smul.addr %s219, 8
        %s221 = scalar_lea.vmem %s3, %s220
        %s222 = smul.u32 8, %s12
      $region40: #{resblock3d_forward.9} parent=31 // pred_fallthru
        _
    $region32: #{resblock3d_forward.9} parent=5 // pred_fallthru
      _
    %p223 = scmp.le.s32.totalorder 1, %s12
    %p224 = scmp.lt.s32.totalorder %s12, 3
    %p225 = pnand %p223, %p224
    %p226 = pneg %p225
    // Predicated region
    $region41: #{resblock3d_forward.9} parent=5 // pred_check
      _
    $region42: #{resblock3d_forward.9} parent=5 // pred_check_branch
      %228 = sbr.rel (%p225) target = $region44
    $region43: #{resblock3d_forward.9} parent=5 // pred_region
      %s229 = ssub.s32 %s12, 1
      %s230 = smul.u32 8, %s17
      %p231 = scmp.lt.s32.totalorder %s230, 15
      %s232 = scalar_select %p231, %s230, 15
      %s233 = smul.addr %s232, 8
      %s234 = scalar_lea.vmem %s0, %s233
      %p235 = pneg %p38
      %p236 = pneg %p35
      %p237 = pneg %p59
      %p238 = pneg %p56
      %p239 = pneg %p80
      %p240 = pneg %p77
      %s241 = smul.u32 8, %s17
      %p242 = scmp.lt.s32.totalorder %s241, 15
      %s243 = scalar_select %p242, %s241, 15
      %s244 = smul.addr %s243, 8
      %s245 = scalar_lea.vmem %s3, %s244
      %p246 = pneg %p106
      %p247 = pneg %p103
      %p248 = pneg %p127
      %p249 = pneg %p124
      %p250 = pneg %p148
      %p251 = pneg %p145
      %p252 = pneg %p174
      %p253 = pneg %p171
      %s254 = smul.u32 8, %s17
      %p255 = scmp.lt.s32.totalorder %s254, 15
      %s256 = scalar_select %p255, %s254, 15
      %s257 = smul.addr %s256, 8
      %s258 = scalar_lea.vmem %s6, %s257
      %s259 = smul.u32 8, %s17
      %p260 = scmp.lt.s32.totalorder %s259, 15
      %s261 = scalar_select %p260, %s259, 15
      %s262 = smul.addr %s261, 8
      %s263 = scalar_lea.vmem %s0, %s262
      %s264 = smul.u32 8, %s17
      %s265 = smul.u32 8, %s17
      %p266 = scmp.lt.s32.totalorder %s265, 15
      %s267 = scalar_select %p266, %s265, 15
      %s268 = smul.addr %s267, 8
      %s269 = scalar_lea.vmem %s3, %s268
      %s270 = smul.u32 8, %s17
      %s271 = smul.u32 8, %s17
      %p272 = scmp.lt.s32.totalorder %s271, 15
      %s273 = scalar_select %p272, %s271, 15
      %s274 = smul.addr %s273, 8
      %s275 = scalar_lea.vmem %s6, %s274
      %s276 = smul.u32 8, %s17
      %v277 = vld [vmem:[%s263] sm:$0xff]
      %v278 = vld [vmem:[%s263 + $0x8] sm:$0xff]
      %v279 = vld [vmem:[%s263 + $0x10] sm:$0xff]
      %v280 = vld [vmem:[%s263 + $0x18] sm:$0xff]
      %v281 = vld [vmem:[%s263 + $0x20] sm:$0xff]
      %v282 = vld [vmem:[%s263 + $0x28] sm:$0xff]
      %v283 = vld [vmem:[%s263 + $0x30] sm:$0xff]
      %v284 = vld [vmem:[%s263 + $0x38] sm:$0xff]
      %v285 = vld [vmem:[%s1] sm:$0x1]
      %v287 = vlaneseq
      %v288 = vshrl.u32 %v287, 7
      %v289 = vsub.s32 0, %v288
      %v290 = vrot.slane %v285, %v289
      %v292 = vmul.f32 %v277, %v290
      %v293 = vmul.f32 %v278, %v290
      %v294 = vmul.f32 %v279, %v290
      %v295 = vmul.f32 %v280, %v290
      %v296 = vmul.f32 %v281, %v290
      %v297 = vmul.f32 %v282, %v290
      %v298 = vmul.f32 %v283, %v290
      %v299 = vmul.f32 %v284, %v290
      %v300 = vld [vmem:[%s2] sm:$0x1]
      %v302 = vlaneseq
      %v303 = vshrl.u32 %v302, 7
      %v304 = vsub.s32 0, %v303
      %v305 = vrot.slane %v300, %v304
      %v307 = vadd.f32 %v292, %v305
      %v308 = vadd.f32 %v293, %v305
      %v309 = vadd.f32 %v294, %v305
      %v310 = vadd.f32 %v295, %v305
      %v311 = vadd.f32 %v296, %v305
      %v312 = vadd.f32 %v297, %v305
      %v313 = vadd.f32 %v298, %v305
      %v314 = vadd.f32 %v299, %v305
      %v315 = vmax.f32 %v307, 0.0
      %v316 = vmax.f32 %v308, 0.0
      %v317 = vmax.f32 %v309, 0.0
      %v318 = vmax.f32 %v310, 0.0
      %v319 = vmax.f32 %v311, 0.0
      %v320 = vmax.f32 %v312, 0.0
      %v321 = vmax.f32 %v313, 0.0
      %v322 = vmax.f32 %v314, 0.0
      %v323 = vld [vmem:[%s269] sm:$0xff]
      %v324 = vld [vmem:[%s269 + $0x8] sm:$0xff]
      %v325 = vld [vmem:[%s269 + $0x10] sm:$0xff]
      %v326 = vld [vmem:[%s269 + $0x18] sm:$0xff]
      %v327 = vld [vmem:[%s269 + $0x20] sm:$0xff]
      %v328 = vld [vmem:[%s269 + $0x28] sm:$0xff]
      %v329 = vld [vmem:[%s269 + $0x30] sm:$0xff]
      %v330 = vld [vmem:[%s269 + $0x38] sm:$0xff]
      %v331 = vld [vmem:[%s4] sm:$0x1]
      %v333 = vlaneseq
      %v334 = vshrl.u32 %v333, 7
      %v335 = vsub.s32 0, %v334
      %v336 = vrot.slane %v331, %v335
      %v338 = vmul.f32 %v323, %v336
      %v339 = vmul.f32 %v324, %v336
      %v340 = vmul.f32 %v325, %v336
      %v341 = vmul.f32 %v326, %v336
      %v342 = vmul.f32 %v327, %v336
      %v343 = vmul.f32 %v328, %v336
      %v344 = vmul.f32 %v329, %v336
      %v345 = vmul.f32 %v330, %v336
      %v346 = vld [vmem:[%s5] sm:$0x1]
      %v348 = vlaneseq
      %v349 = vshrl.u32 %v348, 7
      %v350 = vsub.s32 0, %v349
      %v351 = vrot.slane %v346, %v350
      %v353 = vadd.f32 %v338, %v351
      %v354 = vadd.f32 %v339, %v351
      %v355 = vadd.f32 %v340, %v351
      %v356 = vadd.f32 %v341, %v351
      %v357 = vadd.f32 %v342, %v351
      %v358 = vadd.f32 %v343, %v351
      %v359 = vadd.f32 %v344, %v351
      %v360 = vadd.f32 %v345, %v351
      %v361 = vadd.f32 %v315, %v353
      %v362 = vadd.f32 %v316, %v354
      %v363 = vadd.f32 %v317, %v355
      %v364 = vadd.f32 %v318, %v356
      %v365 = vadd.f32 %v319, %v357
      %v366 = vadd.f32 %v320, %v358
      %v367 = vadd.f32 %v321, %v359
      %v368 = vadd.f32 %v322, %v360
      %v369 = vmax.f32 %v361, 0.0
      %v370 = vmax.f32 %v362, 0.0
      %v371 = vmax.f32 %v363, 0.0
      %v372 = vmax.f32 %v364, 0.0
      %v373 = vmax.f32 %v365, 0.0
      %v374 = vmax.f32 %v366, 0.0
      %v375 = vmax.f32 %v367, 0.0
      %v376 = vmax.f32 %v368, 0.0
      %377 = vst [vmem:[%s275] sm:$0xff] %v369
      %378 = vst [vmem:[%s275 + $0x8] sm:$0xff] %v370
      %379 = vst [vmem:[%s275 + $0x10] sm:$0xff] %v371
      %380 = vst [vmem:[%s275 + $0x18] sm:$0xff] %v372
      %381 = vst [vmem:[%s275 + $0x20] sm:$0xff] %v373
      %382 = vst [vmem:[%s275 + $0x28] sm:$0xff] %v374
      %383 = vst [vmem:[%s275 + $0x30] sm:$0xff] %v375
      %384 = vst [vmem:[%s275 + $0x38] sm:$0xff] %v376
      %s385 = smul.u32 8, %s17
      %p386 = scmp.lt.s32.totalorder %s385, 15
      %s387 = scalar_select %p386, %s385, 15
      %s388 = smul.addr %s387, 8
      %s389 = scalar_lea.vmem %s6, %s388
      // Predicated region
      $region45: #{resblock3d_forward.9} parent=43 // pred_check
        %p390 = pneg %p171
      $region46: #{resblock3d_forward.9} parent=43 // pred_check_branch
        %392 = sbr.rel (%p390) target = $region48
      $region47: #{resblock3d_forward.9} parent=43 // pred_region
        %s393 = smul.u32 8, %s17
      $region48: #{resblock3d_forward.9} parent=43 // pred_fallthru
        _
    $region44: #{resblock3d_forward.9} parent=5 // pred_fallthru
      _
    %p394 = scmp.le.s32.totalorder 2, %s12
    // Predicated region
    $region49: #{resblock3d_forward.9} parent=5 // pred_check
      %p395 = pneg %p394
    $region50: #{resblock3d_forward.9} parent=5 // pred_check_branch
      %397 = sbr.rel (%p395) target = $region52
    $region51: #{resblock3d_forward.9} parent=5 // pred_region
      %s398 = ssub.s32 %s12, 2
      // Predicated region
      $region53: #{resblock3d_forward.9} parent=51 // pred_check
        %p399 = pneg %p177
      $region54: #{resblock3d_forward.9} parent=51 // pred_check_branch
        %401 = sbr.rel (%p399) target = $region56
      $region55: #{resblock3d_forward.9} parent=51 // pred_region
        %s402 = smul.u32 8, %s18
        %p403 = scmp.lt.s32.totalorder %s402, 15
        %s404 = scalar_select %p403, %s402, 15
        %s405 = smul.addr %s404, 8
        %s406 = scalar_lea.vmem %s6, %s405
      $region56: #{resblock3d_forward.9} parent=51 // pred_fallthru
        _
    $region52: #{resblock3d_forward.9} parent=5 // pred_fallthru
      _
  $region6: #{resblock3d_forward.9} parent=0 // loop_footer
    %s16 = sadd.s32 1, %s12
  $region7: #{resblock3d_forward.9} parent=0 // loop_footer_branch
    %11 = sbr.rel target = $region3
  $region8: #{resblock3d_forward.9} parent=0 // loop_exit
    _

</llo_original>
